<compile_context>
chip_gen: v5e
topology: v5e:2x2
jax: 0.10.0
libtpu: 0.0.40
codegen_flags: <defaults>
</compile_context>

<pallas_src>
import functools

import jax
import jax.numpy as jnp
from jax import lax
from jax.experimental import pallas as pl
from jax.experimental.pallas import tpu as pltpu

# ----------------------- small, module-consistent sizes ---------------------
BZ = 2
NPOINTS = 64
ENC_DIM = 32            # params['outblock']['dim_in']  (encoded_feat_dim)
NUM_SLOTS = 4           # params['outblock']['k']
RECON_PART_M = 96       # self.recon_part_M
N_RECONSTRUCTED = 128   # self.n_reconstructed
SLOT_ITERS = 3
BN_EPS = 1e-5
LN_EPS = 1e-5

# ----------------------------- packed weight slabs ---------------------------
_W_ENTRIES = (
    ('enc_w2', ENC_DIM), ('w_kv', 2 * ENC_DIM), ('w_q', ENC_DIM),
    ('gru_w_ih', 3 * ENC_DIM), ('gru_w_hh', 3 * ENC_DIM),
    ('w_mlp1', ENC_DIM), ('w_mlp2', ENC_DIM),
    ('pr_w1', ENC_DIM), ('pr_w2', ENC_DIM), ('pr_w3', RECON_PART_M * 3),
)
_V_ENTRIES = (
    ('enc_b1', ENC_DIM), ('enc_b2', ENC_DIM), ('b_kv', 2 * ENC_DIM),
    ('b_q', ENC_DIM), ('gru_b_ih', 3 * ENC_DIM), ('gru_b_hh', 3 * ENC_DIM),
    ('b_mlp1', ENC_DIM), ('b_mlp2', ENC_DIM),
    ('pr_b1', ENC_DIM), ('pr_b2', ENC_DIM), ('pr_b3', RECON_PART_M * 3),
    ('ln_in_g', ENC_DIM), ('ln_in_b', ENC_DIM),
    ('ln_s_g', ENC_DIM), ('ln_s_b', ENC_DIM),
    ('ln_ff_g', ENC_DIM), ('ln_ff_b', ENC_DIM),
)


def _offsets(entries):
    off, out = 0, {}
    for name, width in entries:
        out[name] = (off, width)
        off += width
    return out, off


W_OFF, W_COLS = _offsets(_W_ENTRIES)   # (32, 736)
V_OFF, V_COLS = _offsets(_V_ENTRIES)   # (1, 960)


# ------------------------------ Kernel A -------------------------------------
def _model_kernel(pts_ref, slots0_ref, encw1_ref, w_ref, v_ref,
                  attn_ref, sfeat_ref, *, iters, eps):
    """Encoder MLP + full slot-attention loop + part-reconstruction MLP,
    fully resident in VMEM for one batch element."""
    D = ENC_DIM

    def wsl(name):
        a, n = W_OFF[name]
        return w_ref[:, a:a + n]

    def vsl(name):
        a, n = V_OFF[name]
        return v_ref[:, a:a + n]

    def ln(x, g, b):
        mu = jnp.mean(x, axis=-1, keepdims=True)
        var = jnp.mean((x - mu) ** 2, axis=-1, keepdims=True)
        return (x - mu) * lax.rsqrt(var + LN_EPS) * g + b

    # --- encoder MLP (BN folded into w1/b1) ---
    pts = pts_ref[0]                                                 # (N, 3)
    h = jnp.dot(pts, encw1_ref[...], preferred_element_type=jnp.float32) + vsl('enc_b1')
    h = jnp.maximum(h, 0.0)
    feats = jnp.dot(h, wsl('enc_w2'), preferred_element_type=jnp.float32) + vsl('enc_b2')

    # --- slot attention ---
    x = ln(feats, vsl('ln_in_g'), vsl('ln_in_b'))
    kv = jnp.dot(x, wsl('w_kv'), preferred_element_type=jnp.float32) + vsl('b_kv')
    k = kv[:, :D]                                                    # (N, D)
    v = kv[:, D:]                                                    # (N, D)

    slots = slots0_ref[0]                                            # (S, D)
    attn = None
    for _ in range(iters):                                           # static unroll
        slots_prev = slots
        s = ln(slots, vsl('ln_s_g'), vsl('ln_s_b'))
        # softmax scale is folded into w_q/b_q at init.
        q = jnp.dot(s, wsl('w_q'), preferred_element_type=jnp.float32) + vsl('b_q')
        dots = lax.dot_general(q, k, (((1,), (1,)), ((), ())),
                               preferred_element_type=jnp.float32)   # (S, N)
        m = jnp.max(dots, axis=0, keepdims=True)
        e = jnp.exp(dots - m)
        attn = e * pl.reciprocal(jnp.sum(e, axis=0, keepdims=True), approx=True) + eps
        wgt = attn * pl.reciprocal(jnp.sum(attn, axis=1, keepdims=True), approx=True)
        upd = jnp.dot(wgt, v, preferred_element_type=jnp.float32)    # (S, D)

        # GRU cell
        gi = jnp.dot(upd, wsl('gru_w_ih'),
                     preferred_element_type=jnp.float32) + vsl('gru_b_ih')     # (S, 3D)
        gh = jnp.dot(slots_prev, wsl('gru_w_hh'),
                     preferred_element_type=jnp.float32) + vsl('gru_b_hh')
        r = jax.nn.sigmoid(gi[:, :D] + gh[:, :D])
        z = jax.nn.sigmoid(gi[:, D:2 * D] + gh[:, D:2 * D])
        n = jnp.tanh(gi[:, 2 * D:] + r * gh[:, 2 * D:])
        slots = (1.0 - z) * n + z * slots_prev

        # residual MLP
        pre = ln(slots, vsl('ln_ff_g'), vsl('ln_ff_b'))
        hm = jnp.maximum(jnp.dot(pre, wsl('w_mlp1'),
                                 preferred_element_type=jnp.float32) + vsl('b_mlp1'), 0.0)
        hm = jnp.dot(hm, wsl('w_mlp2'), preferred_element_type=jnp.float32) + vsl('b_mlp2')
        slots = slots + hm

    attn_ref[...] = attn[None]                                       # (1, S, N)

    # --- part reconstruction MLP (BN folded into w1/b1, w2/b2) ---
    h1 = jnp.maximum(jnp.dot(slots, wsl('pr_w1'),
                             preferred_element_type=jnp.float32) + vsl('pr_b1'), 0.0)
    h2 = jnp.maximum(jnp.dot(h1, wsl('pr_w2'),
                             preferred_element_type=jnp.float32) + vsl('pr_b2'), 0.0)
    sfeat = jnp.dot(h2, wsl('pr_w3'), preferred_element_type=jnp.float32) + vsl('pr_b3')
    sfeat_ref[...] = sfeat[None]                                     # (1, S, 3*M)


def encoder_slot_recon_forward(params, pts, slots0, iters=SLOT_ITERS, eps=1e-8):
    B, N, _ = pts.shape
    S, D = NUM_SLOTS, ENC_DIM
    w_const = lambda b: (0, 0)
    kernel = functools.partial(_model_kernel, iters=iters, eps=eps)
    attn, sfeat = pl.pallas_call(
        kernel,
        out_shape=(jax.ShapeDtypeStruct((B, S, N), jnp.float32),
                   jax.ShapeDtypeStruct((B, S, RECON_PART_M * 3), jnp.float32)),
        grid=(B,),
        in_specs=[
            pl.BlockSpec((1, N, 3), lambda b: (b, 0, 0)),            # points
            pl.BlockSpec((1, S, D), lambda b: (b, 0, 0)),            # slot init
            pl.BlockSpec((3, D), w_const),                           # encoder w1
            pl.BlockSpec((D, W_COLS), w_const),                      # weight slab
            pl.BlockSpec((1, V_COLS), w_const),                      # bias/LN slab
        ],
        out_specs=(pl.BlockSpec((1, S, N), lambda b: (b, 0, 0)),
                   pl.BlockSpec((1, S, RECON_PART_M * 3), lambda b: (b, 0, 0))),
        compiler_params=pltpu.CompilerParams(dimension_semantics=("parallel",)),
    )(pts, slots0, params['enc_w1'], params['W'], params['V'])
    return attn, sfeat


# ------------------------------ Kernel B -------------------------------------
def _fps_chamfer_kernel(pt_ref, pts_ref, down_ref, glb_ref, oh_scr):
    """FPS of the M reconstructed points down to n_sample, fused with the
    global chamfer loss.  Candidate cloud kept as (3, M): points on lanes."""
    M = pt_ref.shape[2]
    nsamp = down_ref.shape[2]
    p_t = pt_ref[0]                                                  # (3, M)
    iota = lax.broadcasted_iota(jnp.int32, (1, M), 1).astype(jnp.float32)

    def body(i, carry):
        dist, oh = carry                                             # (1,M), (1,M)
        oh_scr[pl.ds(i, 1), :] = oh                                  # lane-dense store
        last = jnp.sum(p_t * oh, axis=1, keepdims=True)              # (3, 1) selected pt
        diff = p_t - last                                            # (3, M)
        d = jnp.sum(diff * diff, axis=0, keepdims=True)              # (1, M)
        dist = jnp.minimum(dist, d)
        mx = jnp.max(dist, axis=1, keepdims=True)
        cand = jnp.where(dist == mx, iota, jnp.float32(M))
        sel = jnp.min(cand, axis=1, keepdims=True)                   # first argmax
        oh_new = (iota == sel).astype(jnp.float32)
        return dist, oh_new

    dist0 = jnp.full((1, M), 1e10, jnp.float32)
    oh0 = (iota == 0.0).astype(jnp.float32)                          # seed at index 0
    lax.fori_loop(0, nsamp, body, (dist0, oh0))

    # materialize sampled points once: (3, M) x (nsamp, M)^T -> (3, nsamp)
    oh_mat = oh_scr[...]                                             # (nsamp, M)
    down_t = lax.dot_general(p_t, oh_mat, (((1,), (1,)), ((), ())),
                             preferred_element_type=jnp.float32)     # (3, nsamp)
    down_ref[...] = down_t[None]                                     # lane-dense output

    # global chamfer distance between sampled points and input cloud
    y = pts_ref[0]                                                   # (N, 3)
    yy = jnp.sum(y * y, axis=1, keepdims=True)                       # (N, 1)
    xx = jnp.sum(down_t * down_t, axis=0, keepdims=True)             # (1, nsamp)
    cross = jnp.dot(y, down_t, preferred_element_type=jnp.float32)   # (N, nsamp)
    dmat = jnp.maximum(yy - 2.0 * cross + xx, 0.0)
    d1 = jnp.min(dmat, axis=0, keepdims=True)                        # per sampled pt
    d2 = jnp.min(dmat, axis=1, keepdims=True)                        # per input pt
    glb = (jnp.mean(d1, axis=1, keepdims=True)
           + jnp.mean(d2, axis=0, keepdims=True))                    # (1, 1)
    glb_ref[...] = glb[None]


def fps_global_chamfer(flat_t, pts, n_sample):
    """flat_t: (B, 3, M), pts: (B, N, 3) -> down_t (B, 3, n_sample), loss (B,)."""
    B, _, M = flat_t.shape
    N = pts.shape[1]
    down_t, glb = pl.pallas_call(
        _fps_chamfer_kernel,
        out_shape=(jax.ShapeDtypeStruct((B, 3, n_sample), jnp.float32),
                   jax.ShapeDtypeStruct((B, 1, 1), jnp.float32)),
        grid=(B,),
        in_specs=[pl.BlockSpec((1, 3, M), lambda b: (b, 0, 0)),
                  pl.BlockSpec((1, N, 3), lambda b: (b, 0, 0))],
        out_specs=(pl.BlockSpec((1, 3, n_sample), lambda b: (b, 0, 0)),
                   pl.BlockSpec((1, 1, 1), lambda b: (b, 0, 0))),
        scratch_shapes=[pltpu.VMEM((n_sample, M), jnp.float32)],
        compiler_params=pltpu.CompilerParams(dimension_semantics=("parallel",)),
    )(flat_t, pts)
    return down_t, glb[:, 0, 0]


# ------------------------------ parameters -----------------------------------
def _init_linear(key, cin, cout):
    kw, kb = jax.random.split(key)
    bound = 1.0 / (cin ** 0.5)
    w = jax.random.uniform(kw, (cin, cout), jnp.float32, -bound, bound)
    b = jax.random.uniform(kb, (cout,), jnp.float32, -bound, bound)
    return w, b


def init_params(key):
    keys = jax.random.split(key, 16)
    # eval-mode BatchNorm2d (running_mean=0, running_var=1, gamma=1, beta=0)
    # folded into the preceding 1x1-conv weights/bias.
    s = (1.0 + BN_EPS) ** -0.5
    scale = ENC_DIM ** -0.5                         # slot-attention softmax scale
    w, v = {}, {}

    # TODO(synk): zptk.InterZPConv SO(3)-equivariant backbone has no Pallas
    # equivalent; replaced by a per-point MLP encoder 3 -> ENC_DIM -> ENC_DIM.
    ew1, eb1 = _init_linear(keys[0], 3, ENC_DIM)
    enc_w1, v['enc_b1'] = ew1 * s, eb1 * s
    w['enc_w2'], v['enc_b2'] = _init_linear(keys[1], ENC_DIM, ENC_DIM)

    slots_mu = 0.1 * jax.random.normal(keys[2], (1, 1, ENC_DIM), jnp.float32)
    slots_sigma = 0.1 * jnp.abs(jax.random.normal(keys[3], (1, 1, ENC_DIM), jnp.float32))

    wq, bq = _init_linear(keys[4], ENC_DIM, ENC_DIM)
    w['w_q'], v['b_q'] = wq * scale, bq * scale     # fold D**-0.5 into q projection
    wk, bk = _init_linear(keys[5], ENC_DIM, ENC_DIM)
    wv, bv = _init_linear(keys[6], ENC_DIM, ENC_DIM)
    w['w_kv'] = jnp.concatenate([wk, wv], axis=1)
    v['b_kv'] = jnp.concatenate([bk, bv], axis=0)
    w['w_mlp1'], v['b_mlp1'] = _init_linear(keys[7], ENC_DIM, ENC_DIM)
    w['w_mlp2'], v['b_mlp2'] = _init_linear(keys[8], ENC_DIM, ENC_DIM)
    for nm in ('in', 's', 'ff'):
        v[f'ln_{nm}_g'] = jnp.ones((ENC_DIM,), jnp.float32)
        v[f'ln_{nm}_b'] = jnp.zeros((ENC_DIM,), jnp.float32)
    w['gru_w_ih'], v['gru_b_ih'] = _init_linear(keys[9], ENC_DIM, 3 * ENC_DIM)
    w['gru_w_hh'], v['gru_b_hh'] = _init_linear(keys[10], ENC_DIM, 3 * ENC_DIM)

    # part_reconstruction_net: C -> C -> C -> recon_part_M * 3 (1x1 convs + BN)
    pw1, pb1 = _init_linear(keys[11], ENC_DIM, ENC_DIM)
    w['pr_w1'], v['pr_b1'] = pw1 * s, pb1 * s
    pw2, pb2 = _init_linear(keys[12], ENC_DIM, ENC_DIM)
    w['pr_w2'], v['pr_b2'] = pw2 * s, pb2 * s
    w['pr_w3'], v['pr_b3'] = _init_linear(keys[13], ENC_DIM, RECON_PART_M * 3)

    W_slab = jnp.concatenate([w[name] for name, _ in _W_ENTRIES], axis=1)
    V_slab = jnp.concatenate([v[name].reshape(1, -1) for name, _ in _V_ENTRIES], axis=1)
    assert W_slab.shape == (ENC_DIM, W_COLS)
    assert V_slab.shape == (1, V_COLS)
    return {'enc_w1': enc_w1, 'W': W_slab, 'V': V_slab,
            'slots_mu': slots_mu, 'slots_sigma': slots_sigma}


# ------------------------------- forward pass --------------------------------
def forward_one_iter(params, x, pose, noise_key):
    # x: (bz, 3, npoints), exactly as the PyTorch module
    bz, _, npoints = x.shape
    pts = jnp.transpose(x, (0, 2, 1))                                # (bz, N, 3)

    noise = jax.random.normal(noise_key, (bz, NUM_SLOTS, ENC_DIM), jnp.float32)
    slots0 = params['slots_mu'] + params['slots_sigma'] * noise      # (bz, S, D)

    attn_ori, slot_feats = encoder_slot_recon_forward(params, pts, slots0)
    attn = jnp.transpose(attn_ori, (0, 2, 1))                        # (bz, N, S)

    # NOTE: the reference also computes a per-slot chamfer + attention-weighted
    # local loss (attn_slot / slot_weights / lal_recon_loss), but recon_loss is
    # then overwritten with the global term only, so that path never reaches
    # the returned outputs and is skipped here (identical returned values).

    # (bz, S, M*3) -> (bz, S*M, 3) -> (bz, 3, S*M): cheap XLA layout plumbing
    flat = slot_feats.reshape(bz, NUM_SLOTS * RECON_PART_M, 3)
    flat_t = jnp.transpose(flat, (0, 2, 1))                          # (bz, 3, 384)

    down_t, glb_recon_loss = fps_global_chamfer(flat_t, pts, N_RECONSTRUCTED)
    down = jnp.transpose(down_t, (0, 2, 1))                          # (bz, 128, 3)
    recon_loss = jnp.mean(glb_recon_loss)
    return recon_loss, attn, down


def forward(params, x, pose, noise_key, nn_inter=2):
    nn_inter = 1                       # reference forces a single iteration
    tot_loss = 0.0
    cur_pts = x
    cur_pose = pose
    attn = None
    for _ in range(nn_inter):
        loss, attn, cur_pts = forward_one_iter(params, cur_pts, cur_pose, noise_key)
        tot_loss = tot_loss + loss
    return tot_loss / nn_inter, attn


# ----------------------------------- main ------------------------------------
if __name__ == "__main__":
    key = jax.random.PRNGKey(0)
    kx, kn = jax.random.split(key)
    x = jax.random.normal(kx, (BZ, 3, NPOINTS), jnp.float32)         # point cloud
    pose = jnp.tile(jnp.eye(4, dtype=jnp.float32), (BZ, NPOINTS, 1, 1))
    params = init_params(jax.random.PRNGKey(1))

    fwd = jax.jit(forward)
    loss, attn = fwd(params, x, pose, kn)
    jax.block_until_ready((loss, attn))

    assert loss.shape == ()
    assert attn.shape == (BZ, NPOINTS, NUM_SLOTS)
    assert bool(jnp.isfinite(loss))
    print("KERNEL_OK")
</pallas_src>

<mosaic_0001>
module attributes {stable_mosaic.version = 11 : i64} {
  func.func @_fps_chamfer_kernel(%arg0: i32, %arg1: memref<1x3x384xf32, #tpu.memory_space<vmem>>, %arg2: memref<1x64x3xf32, #tpu.memory_space<vmem>>, %arg3: memref<1x3x128xf32, #tpu.memory_space<vmem>>, %arg4: memref<1x1x1xf32, #tpu.memory_space<vmem>>, %arg5: memref<128x384xf32, #tpu.memory_space<vmem>>) attributes {dimension_semantics = [#tpu.dimension_semantics<parallel>], iteration_bounds = array<i64: 2>, scalar_prefetch = 0 : i64, scratch_operands = 1 : i64, tpu.core_type = #tpu.core_type<tc>, window_params = [{transform_indices = @transform_0, window_bounds = array<i64: 1, 3, 384>}, {transform_indices = @transform_1, window_bounds = array<i64: 1, 64, 3>}, {transform_indices = @transform_2, window_bounds = array<i64: 1, 3, 128>}, {transform_indices = @transform_3, window_bounds = array<i64: 1, 1, 1>}]} {
    %c0 = arith.constant 0 : index
    %c0_0 = arith.constant 0 : index
    %c0_1 = arith.constant 0 : index
    %0 = vector.load %arg1[%c0, %c0_0, %c0_1] : memref<1x3x384xf32, #tpu.memory_space<vmem>>, vector<1x3x384xf32>
    %1 = vector.shape_cast %0 : vector<1x3x384xf32> to vector<3x384xf32>
    %2 = tpu.iota {dimensions = array<i32: 1>} : vector<1x384xi32>
    %3 = arith.sitofp %2 : vector<1x384xi32> to vector<1x384xf32>
    %cst = arith.constant 1.000000e+10 : f32
    %4 = vector.broadcast %cst : f32 to vector<1x384xf32>
    %cst_2 = arith.constant 0.000000e+00 : f32
    %5 = vector.broadcast %cst_2 : f32 to vector<1x384xf32>
    %6 = arith.cmpf oeq, %3, %5 : vector<1x384xf32>
    %7 = arith.extui %6 : vector<1x384xi1> to vector<1x384xi32>
    %8 = arith.sitofp %7 : vector<1x384xi32> to vector<1x384xf32>
    %c0_i32 = arith.constant 0 : i32
    %c128_i32 = arith.constant 128 : i32
    %9 = arith.addi %c0_i32, %c128_i32 : i32
    %c1_i32 = arith.constant 1 : i32
    %10:2 = scf.for %arg6 = %c0_i32 to %9 step %c1_i32 iter_args(%arg7 = %4, %arg8 = %8) -> (vector<1x384xf32>, vector<1x384xf32>)  : i32 {
      %47 = arith.index_cast %arg6 : i32 to index
      %c0_27 = arith.constant 0 : index
      %48 = vector.load %arg5[%47, %c0_27] : memref<128x384xf32, #tpu.memory_space<vmem>>, vector<1x384xf32>
      tpu.vector_store %arg5[%47, %c0_27], %arg8 {strides = array<i32>} : memref<128x384xf32, #tpu.memory_space<vmem>>, vector<1x384xf32>,
      %49 = vector.broadcast %arg8 : vector<1x384xf32> to vector<3x384xf32>
      %50 = arith.mulf %1, %49 : vector<3x384xf32>
      %cst_28 = arith.constant dense<0.000000e+00> : vector<3xf32>
      %51 = vector.multi_reduction <add>, %50, %cst_28 [1] : vector<3x384xf32> to vector<3xf32>
      %52 = vector.shape_cast %51 : vector<3xf32> to vector<3x1xf32>
      %53 = vector.broadcast %52 : vector<3x1xf32> to vector<3x384xf32>
      %54 = arith.subf %1, %53 : vector<3x384xf32>
      %55 = arith.mulf %54, %54 : vector<3x384xf32>
      %cst_29 = arith.constant dense<0.000000e+00> : vector<384xf32>
      %56 = vector.multi_reduction <add>, %55, %cst_29 [0] : vector<3x384xf32> to vector<384xf32>
      %57 = vector.shape_cast %56 : vector<384xf32> to vector<1x384xf32>
      %58 = arith.minimumf %arg7, %57 : vector<1x384xf32>
      %cst_30 = arith.constant dense<0xFF800000> : vector<1xf32>
      %59 = vector.multi_reduction <maximumf>, %58, %cst_30 [1] : vector<1x384xf32> to vector<1xf32>
      %60 = vector.shape_cast %59 : vector<1xf32> to vector<1x1xf32>
      %61 = vector.broadcast %60 : vector<1x1xf32> to vector<1x384xf32>
      %62 = arith.cmpf oeq, %58, %61 : vector<1x384xf32>
      %cst_31 = arith.constant 3.840000e+02 : f32
      %63 = vector.broadcast %cst_31 : f32 to vector<1x384xf32>
      %64 = arith.select %62, %3, %63 : vector<1x384xi1>, vector<1x384xf32>
      %cst_32 = arith.constant dense<0x7F800000> : vector<1xf32>
      %65 = vector.multi_reduction <minimumf>, %64, %cst_32 [1] : vector<1x384xf32> to vector<1xf32>
      %66 = vector.shape_cast %65 : vector<1xf32> to vector<1x1xf32>
      %67 = vector.broadcast %66 : vector<1x1xf32> to vector<1x384xf32>
      %68 = arith.cmpf oeq, %3, %67 : vector<1x384xf32>
      %69 = arith.extui %68 : vector<1x384xi1> to vector<1x384xi32>
      %70 = arith.sitofp %69 : vector<1x384xi32> to vector<1x384xf32>
      scf.yield %58, %70 : vector<1x384xf32>, vector<1x384xf32>
    }
    %c128_i32_3 = arith.constant 128 : i32
    %c0_4 = arith.constant 0 : index
    %c0_5 = arith.constant 0 : index
    %11 = vector.load %arg5[%c0_4, %c0_5] : memref<128x384xf32, #tpu.memory_space<vmem>>, vector<128x384xf32>
    %cst_6 = arith.constant dense<0.000000e+00> : vector<3x128xf32>
    %12 = tpu.matmul %1, %11, %cst_6 {dimension_numbers = #tpu.dot_dimension_numbers<[1], [1], [0], [0], [0, 0, 1, 0], [], []>} : vector<3x384xf32>, vector<128x384xf32>, vector<3x128xf32> -> vector<3x128xf32>
    %13 = vector.shape_cast %12 : vector<3x128xf32> to vector<1x3x128xf32>
    %c0_7 = arith.constant 0 : index
    %c0_8 = arith.constant 0 : index
    %c0_9 = arith.constant 0 : index
    %14 = vector.load %arg3[%c0_7, %c0_8, %c0_9] : memref<1x3x128xf32, #tpu.memory_space<vmem>>, vector<1x3x128xf32>
    tpu.vector_store %arg3[%c0_7, %c0_8, %c0_9], %13 {strides = array<i32>} : memref<1x3x128xf32, #tpu.memory_space<vmem>>, vector<1x3x128xf32>,
    %c0_10 = arith.constant 0 : index
    %c0_11 = arith.constant 0 : index
    %c0_12 = arith.constant 0 : index
    %15 = vector.load %arg2[%c0_10, %c0_11, %c0_12] : memref<1x64x3xf32, #tpu.memory_space<vmem>>, vector<1x64x3xf32>
    %16 = vector.shape_cast %15 : vector<1x64x3xf32> to vector<64x3xf32>
    %17 = arith.mulf %16, %16 : vector<64x3xf32>
    %cst_13 = arith.constant dense<0.000000e+00> : vector<64xf32>
    %18 = vector.multi_reduction <add>, %17, %cst_13 [1] : vector<64x3xf32> to vector<64xf32>
    %19 = vector.shape_cast %18 : vector<64xf32> to vector<64x1xf32>
    %20 = arith.mulf %12, %12 : vector<3x128xf32>
    %cst_14 = arith.constant dense<0.000000e+00> : vector<128xf32>
    %21 = vector.multi_reduction <add>, %20, %cst_14 [0] : vector<3x128xf32> to vector<128xf32>
    %22 = vector.shape_cast %21 : vector<128xf32> to vector<1x128xf32>
    %cst_15 = arith.constant dense<0.000000e+00> : vector<64x128xf32>
    %23 = tpu.matmul %16, %12, %cst_15 {dimension_numbers = #tpu.dot_dimension_numbers<[1], [0], [0], [1], [0, 0, 1, 1], [], []>} : vector<64x3xf32>, vector<3x128xf32>, vector<64x128xf32> -> vector<64x128xf32>
    %cst_16 = arith.constant 2.000000e+00 : f32
    %24 = vector.broadcast %cst_16 : f32 to vector<64x128xf32>
    %25 = arith.mulf %24, %23 : vector<64x128xf32>
    %26 = vector.broadcast %19 : vector<64x1xf32> to vector<64x128xf32>
    %27 = arith.subf %26, %25 : vector<64x128xf32>
    %28 = vector.broadcast %22 : vector<1x128xf32> to vector<64x128xf32>
    %29 = arith.addf %27, %28 : vector<64x128xf32>
    %cst_17 = arith.constant 0.000000e+00 : f32
    %30 = vector.broadcast %cst_17 : f32 to vector<64x128xf32>
    %31 = arith.maximumf %29, %30 : vector<64x128xf32>
    %cst_18 = arith.constant dense<0x7F800000> : vector<128xf32>
    %32 = vector.multi_reduction <minimumf>, %31, %cst_18 [0] : vector<64x128xf32> to vector<128xf32>
    %33 = vector.shape_cast %32 : vector<128xf32> to vector<1x128xf32>
    %cst_19 = arith.constant dense<0x7F800000> : vector<64xf32>
    %34 = vector.multi_reduction <minimumf>, %31, %cst_19 [1] : vector<64x128xf32> to vector<64xf32>
    %35 = vector.shape_cast %34 : vector<64xf32> to vector<64x1xf32>
    %cst_20 = arith.constant dense<0.000000e+00> : vector<1xf32>
    %36 = vector.multi_reduction <add>, %33, %cst_20 [1] : vector<1x128xf32> to vector<1xf32>
    %37 = vector.shape_cast %36 : vector<1xf32> to vector<1x1xf32>
    %cst_21 = arith.constant 1.280000e+02 : f32
    %38 = vector.broadcast %cst_21 : f32 to vector<1x1xf32>
    %39 = arith.divf %37, %38 : vector<1x1xf32>
    %cst_22 = arith.constant dense<0.000000e+00> : vector<1xf32>
    %40 = vector.multi_reduction <add>, %35, %cst_22 [0] : vector<64x1xf32> to vector<1xf32>
    %41 = vector.shape_cast %40 : vector<1xf32> to vector<1x1xf32>
    %cst_23 = arith.constant 6.400000e+01 : f32
    %42 = vector.broadcast %cst_23 : f32 to vector<1x1xf32>
    %43 = arith.divf %41, %42 : vector<1x1xf32>
    %44 = arith.addf %39, %43 : vector<1x1xf32>
    %45 = vector.shape_cast %44 : vector<1x1xf32> to vector<1x1x1xf32>
    %c0_24 = arith.constant 0 : index
    %c0_25 = arith.constant 0 : index
    %c0_26 = arith.constant 0 : index
    %46 = vector.load %arg4[%c0_24, %c0_25, %c0_26] : memref<1x1x1xf32, #tpu.memory_space<vmem>>, vector<1x1x1xf32>
    tpu.vector_store %arg4[%c0_24, %c0_25, %c0_26], %45 {strides = array<i32>} : memref<1x1x1xf32, #tpu.memory_space<vmem>>, vector<1x1x1xf32>,
    return
  }
  func.func @transform_0(%arg0: i32) -> (i32, i32, i32) {
    %c0_i32 = arith.constant 0 : i32
    %c0_i32_0 = arith.constant 0 : i32
    %c0_i32_1 = arith.constant 0 : i32
    return %arg0, %c0_i32, %c0_i32_0 : i32, i32, i32
  }
  func.func @transform_1(%arg0: i32) -> (i32, i32, i32) {
    %c0_i32 = arith.constant 0 : i32
    %c0_i32_0 = arith.constant 0 : i32
    %c0_i32_1 = arith.constant 0 : i32
    return %arg0, %c0_i32, %c0_i32_0 : i32, i32, i32
  }
  func.func @transform_2(%arg0: i32) -> (i32, i32, i32) {
    %c0_i32 = arith.constant 0 : i32
    %c0_i32_0 = arith.constant 0 : i32
    %c0_i32_1 = arith.constant 0 : i32
    return %arg0, %c0_i32, %c0_i32_0 : i32, i32, i32
  }
  func.func @transform_3(%arg0: i32) -> (i32, i32, i32) {
    %c0_i32 = arith.constant 0 : i32
    %c0_i32_0 = arith.constant 0 : i32
    %c0_i32_1 = arith.constant 0 : i32
    return %arg0, %c0_i32, %c0_i32_0 : i32, i32, i32
  }
}

module attributes {stable_mosaic.version = 11 : i64} {
  func.func @_model_kernel(%arg0: i32, %arg1: memref<1x64x3xf32, #tpu.memory_space<vmem>>, %arg2: memref<1x4x32xf32, #tpu.memory_space<vmem>>, %arg3: memref<3x32xf32, #tpu.memory_space<vmem>>, %arg4: memref<32x736xf32, #tpu.memory_space<vmem>>, %arg5: memref<1x960xf32, #tpu.memory_space<vmem>>, %arg6: memref<1x4x64xf32, #tpu.memory_space<vmem>>, %arg7: memref<1x4x288xf32, #tpu.memory_space<vmem>>) attributes {dimension_semantics = [#tpu.dimension_semantics<parallel>], iteration_bounds = array<i64: 2>, scalar_prefetch = 0 : i64, scratch_operands = 0 : i64, tpu.core_type = #tpu.core_type<tc>, window_params = [{transform_indices = @transform_0, window_bounds = array<i64: 1, 64, 3>}, {transform_indices = @transform_1, window_bounds = array<i64: 1, 4, 32>}, {pipeline_mode = #tpu.pipeline_mode<synchronous>, transform_indices = @transform_2, window_bounds = array<i64: 3, 32>}, {pipeline_mode = #tpu.pipeline_mode<synchronous>, transform_indices = @transform_3, window_bounds = array<i64: 32, 736>}, {pipeline_mode = #tpu.pipeline_mode<synchronous>, transform_indices = @transform_4, window_bounds = array<i64: 1, 960>}, {transform_indices = @transform_5, window_bounds = array<i64: 1, 4, 64>}, {transform_indices = @transform_6, window_bounds = array<i64: 1, 4, 288>}]} {
    %c0 = arith.constant 0 : index
    %c0_0 = arith.constant 0 : index
    %c0_1 = arith.constant 0 : index
    %0 = vector.load %arg1[%c0, %c0_0, %c0_1] : memref<1x64x3xf32, #tpu.memory_space<vmem>>, vector<1x64x3xf32>
    %1 = vector.shape_cast %0 : vector<1x64x3xf32> to vector<64x3xf32>
    %c0_2 = arith.constant 0 : index
    %c0_3 = arith.constant 0 : index
    %2 = vector.load %arg3[%c0_2, %c0_3] : memref<3x32xf32, #tpu.memory_space<vmem>>, vector<3x32xf32>
    %cst = arith.constant dense<0.000000e+00> : vector<64x32xf32>
    %3 = tpu.matmul %1, %2, %cst {dimension_numbers = #tpu.dot_dimension_numbers<[1], [0], [0], [1], [0, 0, 1, 1], [], []>} : vector<64x3xf32>, vector<3x32xf32>, vector<64x32xf32> -> vector<64x32xf32>
    %c0_4 = arith.constant 0 : index
    %c0_5 = arith.constant 0 : index
    %4 = vector.load %arg5[%c0_4, %c0_5] : memref<1x960xf32, #tpu.memory_space<vmem>>, vector<1x32xf32>
    %5 = vector.broadcast %4 : vector<1x32xf32> to vector<64x32xf32>
    %6 = arith.addf %3, %5 : vector<64x32xf32>
    %cst_6 = arith.constant 0.000000e+00 : f32
    %7 = vector.broadcast %cst_6 : f32 to vector<64x32xf32>
    %8 = arith.maximumf %6, %7 : vector<64x32xf32>
    %c0_7 = arith.constant 0 : index
    %c0_8 = arith.constant 0 : index
    %9 = vector.load %arg4[%c0_7, %c0_8] : memref<32x736xf32, #tpu.memory_space<vmem>>, vector<32x32xf32>
    %cst_9 = arith.constant dense<0.000000e+00> : vector<64x32xf32>
    %10 = tpu.matmul %8, %9, %cst_9 {dimension_numbers = #tpu.dot_dimension_numbers<[1], [0], [0], [1], [0, 0, 1, 1], [], []>} : vector<64x32xf32>, vector<32x32xf32>, vector<64x32xf32> -> vector<64x32xf32>
    %c0_10 = arith.constant 0 : index
    %c32 = arith.constant 32 : index
    %11 = vector.load %arg5[%c0_10, %c32] : memref<1x960xf32, #tpu.memory_space<vmem>>, vector<1x32xf32>
    %12 = vector.broadcast %11 : vector<1x32xf32> to vector<64x32xf32>
    %13 = arith.addf %10, %12 : vector<64x32xf32>
    %c0_11 = arith.constant 0 : index
    %c768 = arith.constant 768 : index
    %14 = vector.load %arg5[%c0_11, %c768] : memref<1x960xf32, #tpu.memory_space<vmem>>, vector<1x32xf32>
    %c0_12 = arith.constant 0 : index
    %c800 = arith.constant 800 : index
    %15 = vector.load %arg5[%c0_12, %c800] : memref<1x960xf32, #tpu.memory_space<vmem>>, vector<1x32xf32>
    %cst_13 = arith.constant dense<0.000000e+00> : vector<64xf32>
    %16 = vector.multi_reduction <add>, %13, %cst_13 [1] : vector<64x32xf32> to vector<64xf32>
    %17 = vector.shape_cast %16 : vector<64xf32> to vector<64x1xf32>
    %cst_14 = arith.constant 3.200000e+01 : f32
    %18 = vector.broadcast %cst_14 : f32 to vector<64x1xf32>
    %19 = arith.divf %17, %18 : vector<64x1xf32>
    %20 = vector.broadcast %19 : vector<64x1xf32> to vector<64x32xf32>
    %21 = arith.subf %13, %20 : vector<64x32xf32>
    %22 = arith.mulf %21, %21 : vector<64x32xf32>
    %cst_15 = arith.constant dense<0.000000e+00> : vector<64xf32>
    %23 = vector.multi_reduction <add>, %22, %cst_15 [1] : vector<64x32xf32> to vector<64xf32>
    %24 = vector.shape_cast %23 : vector<64xf32> to vector<64x1xf32>
    %cst_16 = arith.constant 3.200000e+01 : f32
    %25 = vector.broadcast %cst_16 : f32 to vector<64x1xf32>
    %26 = arith.divf %24, %25 : vector<64x1xf32>
    %27 = vector.broadcast %19 : vector<64x1xf32> to vector<64x32xf32>
    %28 = arith.subf %13, %27 : vector<64x32xf32>
    %cst_17 = arith.constant 9.99999974E-6 : f32
    %29 = vector.broadcast %cst_17 : f32 to vector<64x1xf32>
    %30 = arith.addf %26, %29 : vector<64x1xf32>
    %31 = math.rsqrt %30 : vector<64x1xf32>
    %32 = vector.broadcast %31 : vector<64x1xf32> to vector<64x32xf32>
    %33 = arith.mulf %28, %32 : vector<64x32xf32>
    %34 = vector.broadcast %14 : vector<1x32xf32> to vector<64x32xf32>
    %35 = arith.mulf %33, %34 : vector<64x32xf32>
    %36 = vector.broadcast %15 : vector<1x32xf32> to vector<64x32xf32>
    %37 = arith.addf %35, %36 : vector<64x32xf32>
    %c0_18 = arith.constant 0 : index
    %c32_19 = arith.constant 32 : index
    %38 = vector.load %arg4[%c0_18, %c32_19] : memref<32x736xf32, #tpu.memory_space<vmem>>, vector<32x64xf32>
    %cst_20 = arith.constant dense<0.000000e+00> : vector<64x64xf32>
    %39 = tpu.matmul %37, %38, %cst_20 {dimension_numbers = #tpu.dot_dimension_numbers<[1], [0], [0], [1], [0, 0, 1, 1], [], []>} : vector<64x32xf32>, vector<32x64xf32>, vector<64x64xf32> -> vector<64x64xf32>
    %c0_21 = arith.constant 0 : index
    %c64 = arith.constant 64 : index
    %40 = vector.load %arg5[%c0_21, %c64] : memref<1x960xf32, #tpu.memory_space<vmem>>, vector<1x64xf32>
    %41 = vector.broadcast %40 : vector<1x64xf32> to vector<64x64xf32>
    %42 = arith.addf %39, %41 : vector<64x64xf32>
    %43 = vector.extract_strided_slice %42 {offsets = [0, 0], sizes = [64, 32], strides = [1, 1]} : vector<64x64xf32> to vector<64x32xf32>
    %44 = vector.extract_strided_slice %42 {offsets = [0, 32], sizes = [64, 32], strides = [1, 1]} : vector<64x64xf32> to vector<64x32xf32>
    %c0_22 = arith.constant 0 : index
    %c0_23 = arith.constant 0 : index
    %c0_24 = arith.constant 0 : index
    %45 = vector.load %arg2[%c0_22, %c0_23, %c0_24] : memref<1x4x32xf32, #tpu.memory_space<vmem>>, vector<1x4x32xf32>
    %46 = vector.shape_cast %45 : vector<1x4x32xf32> to vector<4x32xf32>
    %c0_25 = arith.constant 0 : index
    %c832 = arith.constant 832 : index
    %47 = vector.load %arg5[%c0_25, %c832] : memref<1x960xf32, #tpu.memory_space<vmem>>, vector<1x32xf32>
    %c0_26 = arith.constant 0 : index
    %c864 = arith.constant 864 : index
    %48 = vector.load %arg5[%c0_26, %c864] : memref<1x960xf32, #tpu.memory_space<vmem>>, vector<1x32xf32>
    %cst_27 = arith.constant dense<0.000000e+00> : vector<4xf32>
    %49 = vector.multi_reduction <add>, %46, %cst_27 [1] : vector<4x32xf32> to vector<4xf32>
    %50 = vector.shape_cast %49 : vector<4xf32> to vector<4x1xf32>
    %cst_28 = arith.constant 3.200000e+01 : f32
    %51 = vector.broadcast %cst_28 : f32 to vector<4x1xf32>
    %52 = arith.divf %50, %51 : vector<4x1xf32>
    %53 = vector.broadcast %52 : vector<4x1xf32> to vector<4x32xf32>
    %54 = arith.subf %46, %53 : vector<4x32xf32>
    %55 = arith.mulf %54, %54 : vector<4x32xf32>
    %cst_29 = arith.constant dense<0.000000e+00> : vector<4xf32>
    %56 = vector.multi_reduction <add>, %55, %cst_29 [1] : vector<4x32xf32> to vector<4xf32>
    %57 = vector.shape_cast %56 : vector<4xf32> to vector<4x1xf32>
    %cst_30 = arith.constant 3.200000e+01 : f32
    %58 = vector.broadcast %cst_30 : f32 to vector<4x1xf32>
    %59 = arith.divf %57, %58 : vector<4x1xf32>
    %60 = vector.broadcast %52 : vector<4x1xf32> to vector<4x32xf32>
    %61 = arith.subf %46, %60 : vector<4x32xf32>
    %cst_31 = arith.constant 9.99999974E-6 : f32
    %62 = vector.broadcast %cst_31 : f32 to vector<4x1xf32>
    %63 = arith.addf %59, %62 : vector<4x1xf32>
    %64 = math.rsqrt %63 : vector<4x1xf32>
    %65 = vector.broadcast %64 : vector<4x1xf32> to vector<4x32xf32>
    %66 = arith.mulf %61, %65 : vector<4x32xf32>
    %67 = vector.broadcast %47 : vector<1x32xf32> to vector<4x32xf32>
    %68 = arith.mulf %66, %67 : vector<4x32xf32>
    %69 = vector.broadcast %48 : vector<1x32xf32> to vector<4x32xf32>
    %70 = arith.addf %68, %69 : vector<4x32xf32>
    %c0_32 = arith.constant 0 : index
    %c96 = arith.constant 96 : index
    %71 = vector.load %arg4[%c0_32, %c96] : memref<32x736xf32, #tpu.memory_space<vmem>>, vector<32x32xf32>
    %cst_33 = arith.constant dense<0.000000e+00> : vector<4x32xf32>
    %72 = tpu.matmul %70, %71, %cst_33 {dimension_numbers = #tpu.dot_dimension_numbers<[1], [0], [0], [1], [0, 0, 1, 1], [], []>} : vector<4x32xf32>, vector<32x32xf32>, vector<4x32xf32> -> vector<4x32xf32>
    %c0_34 = arith.constant 0 : index
    %c128 = arith.constant 128 : index
    %73 = vector.load %arg5[%c0_34, %c128] : memref<1x960xf32, #tpu.memory_space<vmem>>, vector<1x32xf32>
    %74 = vector.broadcast %73 : vector<1x32xf32> to vector<4x32xf32>
    %75 = arith.addf %72, %74 : vector<4x32xf32>
    %cst_35 = arith.constant dense<0.000000e+00> : vector<4x64xf32>
    %76 = tpu.matmul %75, %43, %cst_35 {dimension_numbers = #tpu.dot_dimension_numbers<[1], [1], [0], [0], [0, 0, 1, 0], [], []>} : vector<4x32xf32>, vector<64x32xf32>, vector<4x64xf32> -> vector<4x64xf32>
    %cst_36 = arith.constant dense<0xFF800000> : vector<64xf32>
    %77 = vector.multi_reduction <maximumf>, %76, %cst_36 [0] : vector<4x64xf32> to vector<64xf32>
    %78 = vector.shape_cast %77 : vector<64xf32> to vector<1x64xf32>
    %79 = vector.broadcast %78 : vector<1x64xf32> to vector<4x64xf32>
    %80 = arith.subf %76, %79 : vector<4x64xf32>
    %81 = math.exp %80 : vector<4x64xf32>
    %cst_37 = arith.constant dense<0.000000e+00> : vector<64xf32>
    %82 = vector.multi_reduction <add>, %81, %cst_37 [0] : vector<4x64xf32> to vector<64xf32>
    %83 = vector.shape_cast %82 : vector<64xf32> to vector<1x64xf32>
    %84 = tpu.reciprocal %83 {approx = true} : vector<1x64xf32> -> vector<1x64xf32>
    %85 = vector.broadcast %84 : vector<1x64xf32> to vector<4x64xf32>
    %86 = arith.mulf %81, %85 : vector<4x64xf32>
    %cst_38 = arith.constant 9.99999993E-9 : f32
    %87 = vector.broadcast %cst_38 : f32 to vector<4x64xf32>
    %88 = arith.addf %86, %87 : vector<4x64xf32>
    %cst_39 = arith.constant dense<0.000000e+00> : vector<4xf32>
    %89 = vector.multi_reduction <add>, %88, %cst_39 [1] : vector<4x64xf32> to vector<4xf32>
    %90 = vector.shape_cast %89 : vector<4xf32> to vector<4x1xf32>
    %91 = tpu.reciprocal %90 {approx = true} : vector<4x1xf32> -> vector<4x1xf32>
    %92 = vector.broadcast %91 : vector<4x1xf32> to vector<4x64xf32>
    %93 = arith.mulf %88, %92 : vector<4x64xf32>
    %cst_40 = arith.constant dense<0.000000e+00> : vector<4x32xf32>
    %94 = tpu.matmul %93, %44, %cst_40 {dimension_numbers = #tpu.dot_dimension_numbers<[1], [0], [0], [1], [0, 0, 1, 1], [], []>} : vector<4x64xf32>, vector<64x32xf32>, vector<4x32xf32> -> vector<4x32xf32>
    %c0_41 = arith.constant 0 : index
    %c128_42 = arith.constant 128 : index
    %95 = vector.load %arg4[%c0_41, %c128_42] : memref<32x736xf32, #tpu.memory_space<vmem>>, vector<32x96xf32>
    %cst_43 = arith.constant dense<0.000000e+00> : vector<4x96xf32>
    %96 = tpu.matmul %94, %95, %cst_43 {dimension_numbers = #tpu.dot_dimension_numbers<[1], [0], [0], [1], [0, 0, 1, 1], [], []>} : vector<4x32xf32>, vector<32x96xf32>, vector<4x96xf32> -> vector<4x96xf32>
    %c0_44 = arith.constant 0 : index
    %c160 = arith.constant 160 : index
    %97 = vector.load %arg5[%c0_44, %c160] : memref<1x960xf32, #tpu.memory_space<vmem>>, vector<1x96xf32>
    %98 = vector.broadcast %97 : vector<1x96xf32> to vector<4x96xf32>
    %99 = arith.addf %96, %98 : vector<4x96xf32>
    %c0_45 = arith.constant 0 : index
    %c224 = arith.constant 224 : index
    %100 = vector.load %arg4[%c0_45, %c224] : memref<32x736xf32, #tpu.memory_space<vmem>>, vector<32x96xf32>
    %cst_46 = arith.constant dense<0.000000e+00> : vector<4x96xf32>
    %101 = tpu.matmul %46, %100, %cst_46 {dimension_numbers = #tpu.dot_dimension_numbers<[1], [0], [0], [1], [0, 0, 1, 1], [], []>} : vector<4x32xf32>, vector<32x96xf32>, vector<4x96xf32> -> vector<4x96xf32>
    %c0_47 = arith.constant 0 : index
    %c256 = arith.constant 256 : index
    %102 = vector.load %arg5[%c0_47, %c256] : memref<1x960xf32, #tpu.memory_space<vmem>>, vector<1x96xf32>
    %103 = vector.broadcast %102 : vector<1x96xf32> to vector<4x96xf32>
    %104 = arith.addf %101, %103 : vector<4x96xf32>
    %105 = vector.extract_strided_slice %99 {offsets = [0, 0], sizes = [4, 32], strides = [1, 1]} : vector<4x96xf32> to vector<4x32xf32>
    %106 = vector.extract_strided_slice %104 {offsets = [0, 0], sizes = [4, 32], strides = [1, 1]} : vector<4x96xf32> to vector<4x32xf32>
    %107 = arith.addf %105, %106 : vector<4x32xf32>
    %108 = arith.negf %107 : vector<4x32xf32>
    %109 = math.exp %108 : vector<4x32xf32>
    %cst_48 = arith.constant 1.000000e+00 : f32
    %110 = vector.broadcast %cst_48 : f32 to vector<4x32xf32>
    %111 = arith.addf %110, %109 : vector<4x32xf32>
    %112 = arith.divf %110, %111 : vector<4x32xf32>
    %113 = vector.extract_strided_slice %99 {offsets = [0, 32], sizes = [4, 32], strides = [1, 1]} : vector<4x96xf32> to vector<4x32xf32>
    %114 = vector.extract_strided_slice %104 {offsets = [0, 32], sizes = [4, 32], strides = [1, 1]} : vector<4x96xf32> to vector<4x32xf32>
    %115 = arith.addf %113, %114 : vector<4x32xf32>
    %116 = arith.negf %115 : vector<4x32xf32>
    %117 = math.exp %116 : vector<4x32xf32>
    %cst_49 = arith.constant 1.000000e+00 : f32
    %118 = vector.broadcast %cst_49 : f32 to vector<4x32xf32>
    %119 = arith.addf %118, %117 : vector<4x32xf32>
    %120 = arith.divf %118, %119 : vector<4x32xf32>
    %121 = vector.extract_strided_slice %99 {offsets = [0, 64], sizes = [4, 32], strides = [1, 1]} : vector<4x96xf32> to vector<4x32xf32>
    %122 = vector.extract_strided_slice %104 {offsets = [0, 64], sizes = [4, 32], strides = [1, 1]} : vector<4x96xf32> to vector<4x32xf32>
    %123 = arith.mulf %112, %122 : vector<4x32xf32>
    %124 = arith.addf %121, %123 : vector<4x32xf32>
    %125 = math.tanh %124 : vector<4x32xf32>
    %cst_50 = arith.constant 1.000000e+00 : f32
    %126 = vector.broadcast %cst_50 : f32 to vector<4x32xf32>
    %127 = arith.subf %126, %120 : vector<4x32xf32>
    %128 = arith.mulf %127, %125 : vector<4x32xf32>
    %129 = arith.mulf %120, %46 : vector<4x32xf32>
    %130 = arith.addf %128, %129 : vector<4x32xf32>
    %c0_51 = arith.constant 0 : index
    %c896 = arith.constant 896 : index
    %131 = vector.load %arg5[%c0_51, %c896] : memref<1x960xf32, #tpu.memory_space<vmem>>, vector<1x32xf32>
    %c0_52 = arith.constant 0 : index
    %c928 = arith.constant 928 : index
    %132 = vector.load %arg5[%c0_52, %c928] : memref<1x960xf32, #tpu.memory_space<vmem>>, vector<1x32xf32>
    %cst_53 = arith.constant dense<0.000000e+00> : vector<4xf32>
    %133 = vector.multi_reduction <add>, %130, %cst_53 [1] : vector<4x32xf32> to vector<4xf32>
    %134 = vector.shape_cast %133 : vector<4xf32> to vector<4x1xf32>
    %cst_54 = arith.constant 3.200000e+01 : f32
    %135 = vector.broadcast %cst_54 : f32 to vector<4x1xf32>
    %136 = arith.divf %134, %135 : vector<4x1xf32>
    %137 = vector.broadcast %136 : vector<4x1xf32> to vector<4x32xf32>
    %138 = arith.subf %130, %137 : vector<4x32xf32>
    %139 = arith.mulf %138, %138 : vector<4x32xf32>
    %cst_55 = arith.constant dense<0.000000e+00> : vector<4xf32>
    %140 = vector.multi_reduction <add>, %139, %cst_55 [1] : vector<4x32xf32> to vector<4xf32>
    %141 = vector.shape_cast %140 : vector<4xf32> to vector<4x1xf32>
    %cst_56 = arith.constant 3.200000e+01 : f32
    %142 = vector.broadcast %cst_56 : f32 to vector<4x1xf32>
    %143 = arith.divf %141, %142 : vector<4x1xf32>
    %144 = vector.broadcast %136 : vector<4x1xf32> to vector<4x32xf32>
    %145 = arith.subf %130, %144 : vector<4x32xf32>
    %cst_57 = arith.constant 9.99999974E-6 : f32
    %146 = vector.broadcast %cst_57 : f32 to vector<4x1xf32>
    %147 = arith.addf %143, %146 : vector<4x1xf32>
    %148 = math.rsqrt %147 : vector<4x1xf32>
    %149 = vector.broadcast %148 : vector<4x1xf32> to vector<4x32xf32>
    %150 = arith.mulf %145, %149 : vector<4x32xf32>
    %151 = vector.broadcast %131 : vector<1x32xf32> to vector<4x32xf32>
    %152 = arith.mulf %150, %151 : vector<4x32xf32>
    %153 = vector.broadcast %132 : vector<1x32xf32> to vector<4x32xf32>
    %154 = arith.addf %152, %153 : vector<4x32xf32>
    %c0_58 = arith.constant 0 : index
    %c320 = arith.constant 320 : index
    %155 = vector.load %arg4[%c0_58, %c320] : memref<32x736xf32, #tpu.memory_space<vmem>>, vector<32x32xf32>
    %cst_59 = arith.constant dense<0.000000e+00> : vector<4x32xf32>
    %156 = tpu.matmul %154, %155, %cst_59 {dimension_numbers = #tpu.dot_dimension_numbers<[1], [0], [0], [1], [0, 0, 1, 1], [], []>} : vector<4x32xf32>, vector<32x32xf32>, vector<4x32xf32> -> vector<4x32xf32>
    %c0_60 = arith.constant 0 : index
    %c352 = arith.constant 352 : index
    %157 = vector.load %arg5[%c0_60, %c352] : memref<1x960xf32, #tpu.memory_space<vmem>>, vector<1x32xf32>
    %158 = vector.broadcast %157 : vector<1x32xf32> to vector<4x32xf32>
    %159 = arith.addf %156, %158 : vector<4x32xf32>
    %cst_61 = arith.constant 0.000000e+00 : f32
    %160 = vector.broadcast %cst_61 : f32 to vector<4x32xf32>
    %161 = arith.maximumf %159, %160 : vector<4x32xf32>
    %c0_62 = arith.constant 0 : index
    %c352_63 = arith.constant 352 : index
    %162 = vector.load %arg4[%c0_62, %c352_63] : memref<32x736xf32, #tpu.memory_space<vmem>>, vector<32x32xf32>
    %cst_64 = arith.constant dense<0.000000e+00> : vector<4x32xf32>
    %163 = tpu.matmul %161, %162, %cst_64 {dimension_numbers = #tpu.dot_dimension_numbers<[1], [0], [0], [1], [0, 0, 1, 1], [], []>} : vector<4x32xf32>, vector<32x32xf32>, vector<4x32xf32> -> vector<4x32xf32>
    %c0_65 = arith.constant 0 : index
    %c384 = arith.constant 384 : index
    %164 = vector.load %arg5[%c0_65, %c384] : memref<1x960xf32, #tpu.memory_space<vmem>>, vector<1x32xf32>
    %165 = vector.broadcast %164 : vector<1x32xf32> to vector<4x32xf32>
    %166 = arith.addf %163, %165 : vector<4x32xf32>
    %167 = arith.addf %130, %166 : vector<4x32xf32>
    %c0_66 = arith.constant 0 : index
    %c832_67 = arith.constant 832 : index
    %168 = vector.load %arg5[%c0_66, %c832_67] : memref<1x960xf32, #tpu.memory_space<vmem>>, vector<1x32xf32>
    %c0_68 = arith.constant 0 : index
    %c864_69 = arith.constant 864 : index
    %169 = vector.load %arg5[%c0_68, %c864_69] : memref<1x960xf32, #tpu.memory_space<vmem>>, vector<1x32xf32>
    %cst_70 = arith.constant dense<0.000000e+00> : vector<4xf32>
    %170 = vector.multi_reduction <add>, %167, %cst_70 [1] : vector<4x32xf32> to vector<4xf32>
    %171 = vector.shape_cast %170 : vector<4xf32> to vector<4x1xf32>
    %cst_71 = arith.constant 3.200000e+01 : f32
    %172 = vector.broadcast %cst_71 : f32 to vector<4x1xf32>
    %173 = arith.divf %171, %172 : vector<4x1xf32>
    %174 = vector.broadcast %173 : vector<4x1xf32> to vector<4x32xf32>
    %175 = arith.subf %167, %174 : vector<4x32xf32>
    %176 = arith.mulf %175, %175 : vector<4x32xf32>
    %cst_72 = arith.constant dense<0.000000e+00> : vector<4xf32>
    %177 = vector.multi_reduction <add>, %176, %cst_72 [1] : vector<4x32xf32> to vector<4xf32>
    %178 = vector.shape_cast %177 : vector<4xf32> to vector<4x1xf32>
    %cst_73 = arith.constant 3.200000e+01 : f32
    %179 = vector.broadcast %cst_73 : f32 to vector<4x1xf32>
    %180 = arith.divf %178, %179 : vector<4x1xf32>
    %181 = vector.broadcast %173 : vector<4x1xf32> to vector<4x32xf32>
    %182 = arith.subf %167, %181 : vector<4x32xf32>
    %cst_74 = arith.constant 9.99999974E-6 : f32
    %183 = vector.broadcast %cst_74 : f32 to vector<4x1xf32>
    %184 = arith.addf %180, %183 : vector<4x1xf32>
    %185 = math.rsqrt %184 : vector<4x1xf32>
    %186 = vector.broadcast %185 : vector<4x1xf32> to vector<4x32xf32>
    %187 = arith.mulf %182, %186 : vector<4x32xf32>
    %188 = vector.broadcast %168 : vector<1x32xf32> to vector<4x32xf32>
    %189 = arith.mulf %187, %188 : vector<4x32xf32>
    %190 = vector.broadcast %169 : vector<1x32xf32> to vector<4x32xf32>
    %191 = arith.addf %189, %190 : vector<4x32xf32>
    %c0_75 = arith.constant 0 : index
    %c96_76 = arith.constant 96 : index
    %192 = vector.load %arg4[%c0_75, %c96_76] : memref<32x736xf32, #tpu.memory_space<vmem>>, vector<32x32xf32>
    %cst_77 = arith.constant dense<0.000000e+00> : vector<4x32xf32>
    %193 = tpu.matmul %191, %192, %cst_77 {dimension_numbers = #tpu.dot_dimension_numbers<[1], [0], [0], [1], [0, 0, 1, 1], [], []>} : vector<4x32xf32>, vector<32x32xf32>, vector<4x32xf32> -> vector<4x32xf32>
    %c0_78 = arith.constant 0 : index
    %c128_79 = arith.constant 128 : index
    %194 = vector.load %arg5[%c0_78, %c128_79] : memref<1x960xf32, #tpu.memory_space<vmem>>, vector<1x32xf32>
    %195 = vector.broadcast %194 : vector<1x32xf32> to vector<4x32xf32>
    %196 = arith.addf %193, %195 : vector<4x32xf32>
    %cst_80 = arith.constant dense<0.000000e+00> : vector<4x64xf32>
    %197 = tpu.matmul %196, %43, %cst_80 {dimension_numbers = #tpu.dot_dimension_numbers<[1], [1], [0], [0], [0, 0, 1, 0], [], []>} : vector<4x32xf32>, vector<64x32xf32>, vector<4x64xf32> -> vector<4x64xf32>
    %cst_81 = arith.constant dense<0xFF800000> : vector<64xf32>
    %198 = vector.multi_reduction <maximumf>, %197, %cst_81 [0] : vector<4x64xf32> to vector<64xf32>
    %199 = vector.shape_cast %198 : vector<64xf32> to vector<1x64xf32>
    %200 = vector.broadcast %199 : vector<1x64xf32> to vector<4x64xf32>
    %201 = arith.subf %197, %200 : vector<4x64xf32>
    %202 = math.exp %201 : vector<4x64xf32>
    %cst_82 = arith.constant dense<0.000000e+00> : vector<64xf32>
    %203 = vector.multi_reduction <add>, %202, %cst_82 [0] : vector<4x64xf32> to vector<64xf32>
    %204 = vector.shape_cast %203 : vector<64xf32> to vector<1x64xf32>
    %205 = tpu.reciprocal %204 {approx = true} : vector<1x64xf32> -> vector<1x64xf32>
    %206 = vector.broadcast %205 : vector<1x64xf32> to vector<4x64xf32>
    %207 = arith.mulf %202, %206 : vector<4x64xf32>
    %cst_83 = arith.constant 9.99999993E-9 : f32
    %208 = vector.broadcast %cst_83 : f32 to vector<4x64xf32>
    %209 = arith.addf %207, %208 : vector<4x64xf32>
    %cst_84 = arith.constant dense<0.000000e+00> : vector<4xf32>
    %210 = vector.multi_reduction <add>, %209, %cst_84 [1] : vector<4x64xf32> to vector<4xf32>
    %211 = vector.shape_cast %210 : vector<4xf32> to vector<4x1xf32>
    %212 = tpu.reciprocal %211 {approx = true} : vector<4x1xf32> -> vector<4x1xf32>
    %213 = vector.broadcast %212 : vector<4x1xf32> to vector<4x64xf32>
    %214 = arith.mulf %209, %213 : vector<4x64xf32>
    %cst_85 = arith.constant dense<0.000000e+00> : vector<4x32xf32>
    %215 = tpu.matmul %214, %44, %cst_85 {dimension_numbers = #tpu.dot_dimension_numbers<[1], [0], [0], [1], [0, 0, 1, 1], [], []>} : vector<4x64xf32>, vector<64x32xf32>, vector<4x32xf32> -> vector<4x32xf32>
    %c0_86 = arith.constant 0 : index
    %c128_87 = arith.constant 128 : index
    %216 = vector.load %arg4[%c0_86, %c128_87] : memref<32x736xf32, #tpu.memory_space<vmem>>, vector<32x96xf32>
    %cst_88 = arith.constant dense<0.000000e+00> : vector<4x96xf32>
    %217 = tpu.matmul %215, %216, %cst_88 {dimension_numbers = #tpu.dot_dimension_numbers<[1], [0], [0], [1], [0, 0, 1, 1], [], []>} : vector<4x32xf32>, vector<32x96xf32>, vector<4x96xf32> -> vector<4x96xf32>
    %c0_89 = arith.constant 0 : index
    %c160_90 = arith.constant 160 : index
    %218 = vector.load %arg5[%c0_89, %c160_90] : memref<1x960xf32, #tpu.memory_space<vmem>>, vector<1x96xf32>
    %219 = vector.broadcast %218 : vector<1x96xf32> to vector<4x96xf32>
    %220 = arith.addf %217, %219 : vector<4x96xf32>
    %c0_91 = arith.constant 0 : index
    %c224_92 = arith.constant 224 : index
    %221 = vector.load %arg4[%c0_91, %c224_92] : memref<32x736xf32, #tpu.memory_space<vmem>>, vector<32x96xf32>
    %cst_93 = arith.constant dense<0.000000e+00> : vector<4x96xf32>
    %222 = tpu.matmul %167, %221, %cst_93 {dimension_numbers = #tpu.dot_dimension_numbers<[1], [0], [0], [1], [0, 0, 1, 1], [], []>} : vector<4x32xf32>, vector<32x96xf32>, vector<4x96xf32> -> vector<4x96xf32>
    %c0_94 = arith.constant 0 : index
    %c256_95 = arith.constant 256 : index
    %223 = vector.load %arg5[%c0_94, %c256_95] : memref<1x960xf32, #tpu.memory_space<vmem>>, vector<1x96xf32>
    %224 = vector.broadcast %223 : vector<1x96xf32> to vector<4x96xf32>
    %225 = arith.addf %222, %224 : vector<4x96xf32>
    %226 = vector.extract_strided_slice %220 {offsets = [0, 0], sizes = [4, 32], strides = [1, 1]} : vector<4x96xf32> to vector<4x32xf32>
    %227 = vector.extract_strided_slice %225 {offsets = [0, 0], sizes = [4, 32], strides = [1, 1]} : vector<4x96xf32> to vector<4x32xf32>
    %228 = arith.addf %226, %227 : vector<4x32xf32>
    %229 = arith.negf %228 : vector<4x32xf32>
    %230 = math.exp %229 : vector<4x32xf32>
    %cst_96 = arith.constant 1.000000e+00 : f32
    %231 = vector.broadcast %cst_96 : f32 to vector<4x32xf32>
    %232 = arith.addf %231, %230 : vector<4x32xf32>
    %233 = arith.divf %231, %232 : vector<4x32xf32>
    %234 = vector.extract_strided_slice %220 {offsets = [0, 32], sizes = [4, 32], strides = [1, 1]} : vector<4x96xf32> to vector<4x32xf32>
    %235 = vector.extract_strided_slice %225 {offsets = [0, 32], sizes = [4, 32], strides = [1, 1]} : vector<4x96xf32> to vector<4x32xf32>
    %236 = arith.addf %234, %235 : vector<4x32xf32>
    %237 = arith.negf %236 : vector<4x32xf32>
    %238 = math.exp %237 : vector<4x32xf32>
    %cst_97 = arith.constant 1.000000e+00 : f32
    %239 = vector.broadcast %cst_97 : f32 to vector<4x32xf32>
    %240 = arith.addf %239, %238 : vector<4x32xf32>
    %241 = arith.divf %239, %240 : vector<4x32xf32>
    %242 = vector.extract_strided_slice %220 {offsets = [0, 64], sizes = [4, 32], strides = [1, 1]} : vector<4x96xf32> to vector<4x32xf32>
    %243 = vector.extract_strided_slice %225 {offsets = [0, 64], sizes = [4, 32], strides = [1, 1]} : vector<4x96xf32> to vector<4x32xf32>
    %244 = arith.mulf %233, %243 : vector<4x32xf32>
    %245 = arith.addf %242, %244 : vector<4x32xf32>
    %246 = math.tanh %245 : vector<4x32xf32>
    %cst_98 = arith.constant 1.000000e+00 : f32
    %247 = vector.broadcast %cst_98 : f32 to vector<4x32xf32>
    %248 = arith.subf %247, %241 : vector<4x32xf32>
    %249 = arith.mulf %248, %246 : vector<4x32xf32>
    %250 = arith.mulf %241, %167 : vector<4x32xf32>
    %251 = arith.addf %249, %250 : vector<4x32xf32>
    %c0_99 = arith.constant 0 : index
    %c896_100 = arith.constant 896 : index
    %252 = vector.load %arg5[%c0_99, %c896_100] : memref<1x960xf32, #tpu.memory_space<vmem>>, vector<1x32xf32>
    %c0_101 = arith.constant 0 : index
    %c928_102 = arith.constant 928 : index
    %253 = vector.load %arg5[%c0_101, %c928_102] : memref<1x960xf32, #tpu.memory_space<vmem>>, vector<1x32xf32>
    %cst_103 = arith.constant dense<0.000000e+00> : vector<4xf32>
    %254 = vector.multi_reduction <add>, %251, %cst_103 [1] : vector<4x32xf32> to vector<4xf32>
    %255 = vector.shape_cast %254 : vector<4xf32> to vector<4x1xf32>
    %cst_104 = arith.constant 3.200000e+01 : f32
    %256 = vector.broadcast %cst_104 : f32 to vector<4x1xf32>
    %257 = arith.divf %255, %256 : vector<4x1xf32>
    %258 = vector.broadcast %257 : vector<4x1xf32> to vector<4x32xf32>
    %259 = arith.subf %251, %258 : vector<4x32xf32>
    %260 = arith.mulf %259, %259 : vector<4x32xf32>
    %cst_105 = arith.constant dense<0.000000e+00> : vector<4xf32>
    %261 = vector.multi_reduction <add>, %260, %cst_105 [1] : vector<4x32xf32> to vector<4xf32>
    %262 = vector.shape_cast %261 : vector<4xf32> to vector<4x1xf32>
    %cst_106 = arith.constant 3.200000e+01 : f32
    %263 = vector.broadcast %cst_106 : f32 to vector<4x1xf32>
    %264 = arith.divf %262, %263 : vector<4x1xf32>
    %265 = vector.broadcast %257 : vector<4x1xf32> to vector<4x32xf32>
    %266 = arith.subf %251, %265 : vector<4x32xf32>
    %cst_107 = arith.constant 9.99999974E-6 : f32
    %267 = vector.broadcast %cst_107 : f32 to vector<4x1xf32>
    %268 = arith.addf %264, %267 : vector<4x1xf32>
    %269 = math.rsqrt %268 : vector<4x1xf32>
    %270 = vector.broadcast %269 : vector<4x1xf32> to vector<4x32xf32>
    %271 = arith.mulf %266, %270 : vector<4x32xf32>
    %272 = vector.broadcast %252 : vector<1x32xf32> to vector<4x32xf32>
    %273 = arith.mulf %271, %272 : vector<4x32xf32>
    %274 = vector.broadcast %253 : vector<1x32xf32> to vector<4x32xf32>
    %275 = arith.addf %273, %274 : vector<4x32xf32>
    %c0_108 = arith.constant 0 : index
    %c320_109 = arith.constant 320 : index
    %276 = vector.load %arg4[%c0_108, %c320_109] : memref<32x736xf32, #tpu.memory_space<vmem>>, vector<32x32xf32>
    %cst_110 = arith.constant dense<0.000000e+00> : vector<4x32xf32>
    %277 = tpu.matmul %275, %276, %cst_110 {dimension_numbers = #tpu.dot_dimension_numbers<[1], [0], [0], [1], [0, 0, 1, 1], [], []>} : vector<4x32xf32>, vector<32x32xf32>, vector<4x32xf32> -> vector<4x32xf32>
    %c0_111 = arith.constant 0 : index
    %c352_112 = arith.constant 352 : index
    %278 = vector.load %arg5[%c0_111, %c352_112] : memref<1x960xf32, #tpu.memory_space<vmem>>, vector<1x32xf32>
    %279 = vector.broadcast %278 : vector<1x32xf32> to vector<4x32xf32>
    %280 = arith.addf %277, %279 : vector<4x32xf32>
    %cst_113 = arith.constant 0.000000e+00 : f32
    %281 = vector.broadcast %cst_113 : f32 to vector<4x32xf32>
    %282 = arith.maximumf %280, %281 : vector<4x32xf32>
    %c0_114 = arith.constant 0 : index
    %c352_115 = arith.constant 352 : index
    %283 = vector.load %arg4[%c0_114, %c352_115] : memref<32x736xf32, #tpu.memory_space<vmem>>, vector<32x32xf32>
    %cst_116 = arith.constant dense<0.000000e+00> : vector<4x32xf32>
    %284 = tpu.matmul %282, %283, %cst_116 {dimension_numbers = #tpu.dot_dimension_numbers<[1], [0], [0], [1], [0, 0, 1, 1], [], []>} : vector<4x32xf32>, vector<32x32xf32>, vector<4x32xf32> -> vector<4x32xf32>
    %c0_117 = arith.constant 0 : index
    %c384_118 = arith.constant 384 : index
    %285 = vector.load %arg5[%c0_117, %c384_118] : memref<1x960xf32, #tpu.memory_space<vmem>>, vector<1x32xf32>
    %286 = vector.broadcast %285 : vector<1x32xf32> to vector<4x32xf32>
    %287 = arith.addf %284, %286 : vector<4x32xf32>
    %288 = arith.addf %251, %287 : vector<4x32xf32>
    %c0_119 = arith.constant 0 : index
    %c832_120 = arith.constant 832 : index
    %289 = vector.load %arg5[%c0_119, %c832_120] : memref<1x960xf32, #tpu.memory_space<vmem>>, vector<1x32xf32>
    %c0_121 = arith.constant 0 : index
    %c864_122 = arith.constant 864 : index
    %290 = vector.load %arg5[%c0_121, %c864_122] : memref<1x960xf32, #tpu.memory_space<vmem>>, vector<1x32xf32>
    %cst_123 = arith.constant dense<0.000000e+00> : vector<4xf32>
    %291 = vector.multi_reduction <add>, %288, %cst_123 [1] : vector<4x32xf32> to vector<4xf32>
    %292 = vector.shape_cast %291 : vector<4xf32> to vector<4x1xf32>
    %cst_124 = arith.constant 3.200000e+01 : f32
    %293 = vector.broadcast %cst_124 : f32 to vector<4x1xf32>
    %294 = arith.divf %292, %293 : vector<4x1xf32>
    %295 = vector.broadcast %294 : vector<4x1xf32> to vector<4x32xf32>
    %296 = arith.subf %288, %295 : vector<4x32xf32>
    %297 = arith.mulf %296, %296 : vector<4x32xf32>
    %cst_125 = arith.constant dense<0.000000e+00> : vector<4xf32>
    %298 = vector.multi_reduction <add>, %297, %cst_125 [1] : vector<4x32xf32> to vector<4xf32>
    %299 = vector.shape_cast %298 : vector<4xf32> to vector<4x1xf32>
    %cst_126 = arith.constant 3.200000e+01 : f32
    %300 = vector.broadcast %cst_126 : f32 to vector<4x1xf32>
    %301 = arith.divf %299, %300 : vector<4x1xf32>
    %302 = vector.broadcast %294 : vector<4x1xf32> to vector<4x32xf32>
    %303 = arith.subf %288, %302 : vector<4x32xf32>
    %cst_127 = arith.constant 9.99999974E-6 : f32
    %304 = vector.broadcast %cst_127 : f32 to vector<4x1xf32>
    %305 = arith.addf %301, %304 : vector<4x1xf32>
    %306 = math.rsqrt %305 : vector<4x1xf32>
    %307 = vector.broadcast %306 : vector<4x1xf32> to vector<4x32xf32>
    %308 = arith.mulf %303, %307 : vector<4x32xf32>
    %309 = vector.broadcast %289 : vector<1x32xf32> to vector<4x32xf32>
    %310 = arith.mulf %308, %309 : vector<4x32xf32>
    %311 = vector.broadcast %290 : vector<1x32xf32> to vector<4x32xf32>
    %312 = arith.addf %310, %311 : vector<4x32xf32>
    %c0_128 = arith.constant 0 : index
    %c96_129 = arith.constant 96 : index
    %313 = vector.load %arg4[%c0_128, %c96_129] : memref<32x736xf32, #tpu.memory_space<vmem>>, vector<32x32xf32>
    %cst_130 = arith.constant dense<0.000000e+00> : vector<4x32xf32>
    %314 = tpu.matmul %312, %313, %cst_130 {dimension_numbers = #tpu.dot_dimension_numbers<[1], [0], [0], [1], [0, 0, 1, 1], [], []>} : vector<4x32xf32>, vector<32x32xf32>, vector<4x32xf32> -> vector<4x32xf32>
    %c0_131 = arith.constant 0 : index
    %c128_132 = arith.constant 128 : index
    %315 = vector.load %arg5[%c0_131, %c128_132] : memref<1x960xf32, #tpu.memory_space<vmem>>, vector<1x32xf32>
    %316 = vector.broadcast %315 : vector<1x32xf32> to vector<4x32xf32>
    %317 = arith.addf %314, %316 : vector<4x32xf32>
    %cst_133 = arith.constant dense<0.000000e+00> : vector<4x64xf32>
    %318 = tpu.matmul %317, %43, %cst_133 {dimension_numbers = #tpu.dot_dimension_numbers<[1], [1], [0], [0], [0, 0, 1, 0], [], []>} : vector<4x32xf32>, vector<64x32xf32>, vector<4x64xf32> -> vector<4x64xf32>
    %cst_134 = arith.constant dense<0xFF800000> : vector<64xf32>
    %319 = vector.multi_reduction <maximumf>, %318, %cst_134 [0] : vector<4x64xf32> to vector<64xf32>
    %320 = vector.shape_cast %319 : vector<64xf32> to vector<1x64xf32>
    %321 = vector.broadcast %320 : vector<1x64xf32> to vector<4x64xf32>
    %322 = arith.subf %318, %321 : vector<4x64xf32>
    %323 = math.exp %322 : vector<4x64xf32>
    %cst_135 = arith.constant dense<0.000000e+00> : vector<64xf32>
    %324 = vector.multi_reduction <add>, %323, %cst_135 [0] : vector<4x64xf32> to vector<64xf32>
    %325 = vector.shape_cast %324 : vector<64xf32> to vector<1x64xf32>
    %326 = tpu.reciprocal %325 {approx = true} : vector<1x64xf32> -> vector<1x64xf32>
    %327 = vector.broadcast %326 : vector<1x64xf32> to vector<4x64xf32>
    %328 = arith.mulf %323, %327 : vector<4x64xf32>
    %cst_136 = arith.constant 9.99999993E-9 : f32
    %329 = vector.broadcast %cst_136 : f32 to vector<4x64xf32>
    %330 = arith.addf %328, %329 : vector<4x64xf32>
    %cst_137 = arith.constant dense<0.000000e+00> : vector<4xf32>
    %331 = vector.multi_reduction <add>, %330, %cst_137 [1] : vector<4x64xf32> to vector<4xf32>
    %332 = vector.shape_cast %331 : vector<4xf32> to vector<4x1xf32>
    %333 = tpu.reciprocal %332 {approx = true} : vector<4x1xf32> -> vector<4x1xf32>
    %334 = vector.broadcast %333 : vector<4x1xf32> to vector<4x64xf32>
    %335 = arith.mulf %330, %334 : vector<4x64xf32>
    %cst_138 = arith.constant dense<0.000000e+00> : vector<4x32xf32>
    %336 = tpu.matmul %335, %44, %cst_138 {dimension_numbers = #tpu.dot_dimension_numbers<[1], [0], [0], [1], [0, 0, 1, 1], [], []>} : vector<4x64xf32>, vector<64x32xf32>, vector<4x32xf32> -> vector<4x32xf32>
    %c0_139 = arith.constant 0 : index
    %c128_140 = arith.constant 128 : index
    %337 = vector.load %arg4[%c0_139, %c128_140] : memref<32x736xf32, #tpu.memory_space<vmem>>, vector<32x96xf32>
    %cst_141 = arith.constant dense<0.000000e+00> : vector<4x96xf32>
    %338 = tpu.matmul %336, %337, %cst_141 {dimension_numbers = #tpu.dot_dimension_numbers<[1], [0], [0], [1], [0, 0, 1, 1], [], []>} : vector<4x32xf32>, vector<32x96xf32>, vector<4x96xf32> -> vector<4x96xf32>
    %c0_142 = arith.constant 0 : index
    %c160_143 = arith.constant 160 : index
    %339 = vector.load %arg5[%c0_142, %c160_143] : memref<1x960xf32, #tpu.memory_space<vmem>>, vector<1x96xf32>
    %340 = vector.broadcast %339 : vector<1x96xf32> to vector<4x96xf32>
    %341 = arith.addf %338, %340 : vector<4x96xf32>
    %c0_144 = arith.constant 0 : index
    %c224_145 = arith.constant 224 : index
    %342 = vector.load %arg4[%c0_144, %c224_145] : memref<32x736xf32, #tpu.memory_space<vmem>>, vector<32x96xf32>
    %cst_146 = arith.constant dense<0.000000e+00> : vector<4x96xf32>
    %343 = tpu.matmul %288, %342, %cst_146 {dimension_numbers = #tpu.dot_dimension_numbers<[1], [0], [0], [1], [0, 0, 1, 1], [], []>} : vector<4x32xf32>, vector<32x96xf32>, vector<4x96xf32> -> vector<4x96xf32>
    %c0_147 = arith.constant 0 : index
    %c256_148 = arith.constant 256 : index
    %344 = vector.load %arg5[%c0_147, %c256_148] : memref<1x960xf32, #tpu.memory_space<vmem>>, vector<1x96xf32>
    %345 = vector.broadcast %344 : vector<1x96xf32> to vector<4x96xf32>
    %346 = arith.addf %343, %345 : vector<4x96xf32>
    %347 = vector.extract_strided_slice %341 {offsets = [0, 0], sizes = [4, 32], strides = [1, 1]} : vector<4x96xf32> to vector<4x32xf32>
    %348 = vector.extract_strided_slice %346 {offsets = [0, 0], sizes = [4, 32], strides = [1, 1]} : vector<4x96xf32> to vector<4x32xf32>
    %349 = arith.addf %347, %348 : vector<4x32xf32>
    %350 = arith.negf %349 : vector<4x32xf32>
    %351 = math.exp %350 : vector<4x32xf32>
    %cst_149 = arith.constant 1.000000e+00 : f32
    %352 = vector.broadcast %cst_149 : f32 to vector<4x32xf32>
    %353 = arith.addf %352, %351 : vector<4x32xf32>
    %354 = arith.divf %352, %353 : vector<4x32xf32>
    %355 = vector.extract_strided_slice %341 {offsets = [0, 32], sizes = [4, 32], strides = [1, 1]} : vector<4x96xf32> to vector<4x32xf32>
    %356 = vector.extract_strided_slice %346 {offsets = [0, 32], sizes = [4, 32], strides = [1, 1]} : vector<4x96xf32> to vector<4x32xf32>
    %357 = arith.addf %355, %356 : vector<4x32xf32>
    %358 = arith.negf %357 : vector<4x32xf32>
    %359 = math.exp %358 : vector<4x32xf32>
    %cst_150 = arith.constant 1.000000e+00 : f32
    %360 = vector.broadcast %cst_150 : f32 to vector<4x32xf32>
    %361 = arith.addf %360, %359 : vector<4x32xf32>
    %362 = arith.divf %360, %361 : vector<4x32xf32>
    %363 = vector.extract_strided_slice %341 {offsets = [0, 64], sizes = [4, 32], strides = [1, 1]} : vector<4x96xf32> to vector<4x32xf32>
    %364 = vector.extract_strided_slice %346 {offsets = [0, 64], sizes = [4, 32], strides = [1, 1]} : vector<4x96xf32> to vector<4x32xf32>
    %365 = arith.mulf %354, %364 : vector<4x32xf32>
    %366 = arith.addf %363, %365 : vector<4x32xf32>
    %367 = math.tanh %366 : vector<4x32xf32>
    %cst_151 = arith.constant 1.000000e+00 : f32
    %368 = vector.broadcast %cst_151 : f32 to vector<4x32xf32>
    %369 = arith.subf %368, %362 : vector<4x32xf32>
    %370 = arith.mulf %369, %367 : vector<4x32xf32>
    %371 = arith.mulf %362, %288 : vector<4x32xf32>
    %372 = arith.addf %370, %371 : vector<4x32xf32>
    %c0_152 = arith.constant 0 : index
    %c896_153 = arith.constant 896 : index
    %373 = vector.load %arg5[%c0_152, %c896_153] : memref<1x960xf32, #tpu.memory_space<vmem>>, vector<1x32xf32>
    %c0_154 = arith.constant 0 : index
    %c928_155 = arith.constant 928 : index
    %374 = vector.load %arg5[%c0_154, %c928_155] : memref<1x960xf32, #tpu.memory_space<vmem>>, vector<1x32xf32>
    %cst_156 = arith.constant dense<0.000000e+00> : vector<4xf32>
    %375 = vector.multi_reduction <add>, %372, %cst_156 [1] : vector<4x32xf32> to vector<4xf32>
    %376 = vector.shape_cast %375 : vector<4xf32> to vector<4x1xf32>
    %cst_157 = arith.constant 3.200000e+01 : f32
    %377 = vector.broadcast %cst_157 : f32 to vector<4x1xf32>
    %378 = arith.divf %376, %377 : vector<4x1xf32>
    %379 = vector.broadcast %378 : vector<4x1xf32> to vector<4x32xf32>
    %380 = arith.subf %372, %379 : vector<4x32xf32>
    %381 = arith.mulf %380, %380 : vector<4x32xf32>
    %cst_158 = arith.constant dense<0.000000e+00> : vector<4xf32>
    %382 = vector.multi_reduction <add>, %381, %cst_158 [1] : vector<4x32xf32> to vector<4xf32>
    %383 = vector.shape_cast %382 : vector<4xf32> to vector<4x1xf32>
    %cst_159 = arith.constant 3.200000e+01 : f32
    %384 = vector.broadcast %cst_159 : f32 to vector<4x1xf32>
    %385 = arith.divf %383, %384 : vector<4x1xf32>
    %386 = vector.broadcast %378 : vector<4x1xf32> to vector<4x32xf32>
    %387 = arith.subf %372, %386 : vector<4x32xf32>
    %cst_160 = arith.constant 9.99999974E-6 : f32
    %388 = vector.broadcast %cst_160 : f32 to vector<4x1xf32>
    %389 = arith.addf %385, %388 : vector<4x1xf32>
    %390 = math.rsqrt %389 : vector<4x1xf32>
    %391 = vector.broadcast %390 : vector<4x1xf32> to vector<4x32xf32>
    %392 = arith.mulf %387, %391 : vector<4x32xf32>
    %393 = vector.broadcast %373 : vector<1x32xf32> to vector<4x32xf32>
    %394 = arith.mulf %392, %393 : vector<4x32xf32>
    %395 = vector.broadcast %374 : vector<1x32xf32> to vector<4x32xf32>
    %396 = arith.addf %394, %395 : vector<4x32xf32>
    %c0_161 = arith.constant 0 : index
    %c320_162 = arith.constant 320 : index
    %397 = vector.load %arg4[%c0_161, %c320_162] : memref<32x736xf32, #tpu.memory_space<vmem>>, vector<32x32xf32>
    %cst_163 = arith.constant dense<0.000000e+00> : vector<4x32xf32>
    %398 = tpu.matmul %396, %397, %cst_163 {dimension_numbers = #tpu.dot_dimension_numbers<[1], [0], [0], [1], [0, 0, 1, 1], [], []>} : vector<4x32xf32>, vector<32x32xf32>, vector<4x32xf32> -> vector<4x32xf32>
    %c0_164 = arith.constant 0 : index
    %c352_165 = arith.constant 352 : index
    %399 = vector.load %arg5[%c0_164, %c352_165] : memref<1x960xf32, #tpu.memory_space<vmem>>, vector<1x32xf32>
    %400 = vector.broadcast %399 : vector<1x32xf32> to vector<4x32xf32>
    %401 = arith.addf %398, %400 : vector<4x32xf32>
    %cst_166 = arith.constant 0.000000e+00 : f32
    %402 = vector.broadcast %cst_166 : f32 to vector<4x32xf32>
    %403 = arith.maximumf %401, %402 : vector<4x32xf32>
    %c0_167 = arith.constant 0 : index
    %c352_168 = arith.constant 352 : index
    %404 = vector.load %arg4[%c0_167, %c352_168] : memref<32x736xf32, #tpu.memory_space<vmem>>, vector<32x32xf32>
    %cst_169 = arith.constant dense<0.000000e+00> : vector<4x32xf32>
    %405 = tpu.matmul %403, %404, %cst_169 {dimension_numbers = #tpu.dot_dimension_numbers<[1], [0], [0], [1], [0, 0, 1, 1], [], []>} : vector<4x32xf32>, vector<32x32xf32>, vector<4x32xf32> -> vector<4x32xf32>
    %c0_170 = arith.constant 0 : index
    %c384_171 = arith.constant 384 : index
    %406 = vector.load %arg5[%c0_170, %c384_171] : memref<1x960xf32, #tpu.memory_space<vmem>>, vector<1x32xf32>
    %407 = vector.broadcast %406 : vector<1x32xf32> to vector<4x32xf32>
    %408 = arith.addf %405, %407 : vector<4x32xf32>
    %409 = arith.addf %372, %408 : vector<4x32xf32>
    %410 = vector.shape_cast %330 : vector<4x64xf32> to vector<1x4x64xf32>
    %c0_172 = arith.constant 0 : index
    %c0_173 = arith.constant 0 : index
    %c0_174 = arith.constant 0 : index
    %411 = vector.load %arg6[%c0_172, %c0_173, %c0_174] : memref<1x4x64xf32, #tpu.memory_space<vmem>>, vector<1x4x64xf32>
    tpu.vector_store %arg6[%c0_172, %c0_173, %c0_174], %410 {strides = array<i32>} : memref<1x4x64xf32, #tpu.memory_space<vmem>>, vector<1x4x64xf32>,
    %c0_175 = arith.constant 0 : index
    %c384_176 = arith.constant 384 : index
    %412 = vector.load %arg4[%c0_175, %c384_176] : memref<32x736xf32, #tpu.memory_space<vmem>>, vector<32x32xf32>
    %cst_177 = arith.constant dense<0.000000e+00> : vector<4x32xf32>
    %413 = tpu.matmul %409, %412, %cst_177 {dimension_numbers = #tpu.dot_dimension_numbers<[1], [0], [0], [1], [0, 0, 1, 1], [], []>} : vector<4x32xf32>, vector<32x32xf32>, vector<4x32xf32> -> vector<4x32xf32>
    %c0_178 = arith.constant 0 : index
    %c416 = arith.constant 416 : index
    %414 = vector.load %arg5[%c0_178, %c416] : memref<1x960xf32, #tpu.memory_space<vmem>>, vector<1x32xf32>
    %415 = vector.broadcast %414 : vector<1x32xf32> to vector<4x32xf32>
    %416 = arith.addf %413, %415 : vector<4x32xf32>
    %cst_179 = arith.constant 0.000000e+00 : f32
    %417 = vector.broadcast %cst_179 : f32 to vector<4x32xf32>
    %418 = arith.maximumf %416, %417 : vector<4x32xf32>
    %c0_180 = arith.constant 0 : index
    %c416_181 = arith.constant 416 : index
    %419 = vector.load %arg4[%c0_180, %c416_181] : memref<32x736xf32, #tpu.memory_space<vmem>>, vector<32x32xf32>
    %cst_182 = arith.constant dense<0.000000e+00> : vector<4x32xf32>
    %420 = tpu.matmul %418, %419, %cst_182 {dimension_numbers = #tpu.dot_dimension_numbers<[1], [0], [0], [1], [0, 0, 1, 1], [], []>} : vector<4x32xf32>, vector<32x32xf32>, vector<4x32xf32> -> vector<4x32xf32>
    %c0_183 = arith.constant 0 : index
    %c448 = arith.constant 448 : index
    %421 = vector.load %arg5[%c0_183, %c448] : memref<1x960xf32, #tpu.memory_space<vmem>>, vector<1x32xf32>
    %422 = vector.broadcast %421 : vector<1x32xf32> to vector<4x32xf32>
    %423 = arith.addf %420, %422 : vector<4x32xf32>
    %cst_184 = arith.constant 0.000000e+00 : f32
    %424 = vector.broadcast %cst_184 : f32 to vector<4x32xf32>
    %425 = arith.maximumf %423, %424 : vector<4x32xf32>
    %c0_185 = arith.constant 0 : index
    %c448_186 = arith.constant 448 : index
    %426 = vector.load %arg4[%c0_185, %c448_186] : memref<32x736xf32, #tpu.memory_space<vmem>>, vector<32x288xf32>
    %cst_187 = arith.constant dense<0.000000e+00> : vector<4x288xf32>
    %427 = tpu.matmul %425, %426, %cst_187 {dimension_numbers = #tpu.dot_dimension_numbers<[1], [0], [0], [1], [0, 0, 1, 1], [], []>} : vector<4x32xf32>, vector<32x288xf32>, vector<4x288xf32> -> vector<4x288xf32>
    %c0_188 = arith.constant 0 : index
    %c480 = arith.constant 480 : index
    %428 = vector.load %arg5[%c0_188, %c480] : memref<1x960xf32, #tpu.memory_space<vmem>>, vector<1x288xf32>
    %429 = vector.broadcast %428 : vector<1x288xf32> to vector<4x288xf32>
    %430 = arith.addf %427, %429 : vector<4x288xf32>
    %431 = vector.shape_cast %430 : vector<4x288xf32> to vector<1x4x288xf32>
    %c0_189 = arith.constant 0 : index
    %c0_190 = arith.constant 0 : index
    %c0_191 = arith.constant 0 : index
    %432 = vector.load %arg7[%c0_189, %c0_190, %c0_191] : memref<1x4x288xf32, #tpu.memory_space<vmem>>, vector<1x4x288xf32>
    tpu.vector_store %arg7[%c0_189, %c0_190, %c0_191], %431 {strides = array<i32>} : memref<1x4x288xf32, #tpu.memory_space<vmem>>, vector<1x4x288xf32>,
    return
  }
  func.func @transform_0(%arg0: i32) -> (i32, i32, i32) {
    %c0_i32 = arith.constant 0 : i32
    %c0_i32_0 = arith.constant 0 : i32
    %c0_i32_1 = arith.constant 0 : i32
    return %arg0, %c0_i32, %c0_i32_0 : i32, i32, i32
  }
  func.func @transform_1(%arg0: i32) -> (i32, i32, i32) {
    %c0_i32 = arith.constant 0 : i32
    %c0_i32_0 = arith.constant 0 : i32
    %c0_i32_1 = arith.constant 0 : i32
    return %arg0, %c0_i32, %c0_i32_0 : i32, i32, i32
  }
  func.func @transform_2(%arg0: i32) -> (i32, i32) {
    %c0_i32 = arith.constant 0 : i32
    %c0_i32_0 = arith.constant 0 : i32
    %c0_i32_1 = arith.constant 0 : i32
    return %c0_i32, %c0_i32_0 : i32, i32
  }
  func.func @transform_3(%arg0: i32) -> (i32, i32) {
    %c0_i32 = arith.constant 0 : i32
    %c0_i32_0 = arith.constant 0 : i32
    %c0_i32_1 = arith.constant 0 : i32
    return %c0_i32, %c0_i32_0 : i32, i32
  }
  func.func @transform_4(%arg0: i32) -> (i32, i32) {
    %c0_i32 = arith.constant 0 : i32
    %c0_i32_0 = arith.constant 0 : i32
    %c0_i32_1 = arith.constant 0 : i32
    return %c0_i32, %c0_i32_0 : i32, i32
  }
  func.func @transform_5(%arg0: i32) -> (i32, i32, i32) {
    %c0_i32 = arith.constant 0 : i32
    %c0_i32_0 = arith.constant 0 : i32
    %c0_i32_1 = arith.constant 0 : i32
    return %arg0, %c0_i32, %c0_i32_0 : i32, i32, i32
  }
  func.func @transform_6(%arg0: i32) -> (i32, i32, i32) {
    %c0_i32 = arith.constant 0 : i32
    %c0_i32_0 = arith.constant 0 : i32
    %c0_i32_1 = arith.constant 0 : i32
    return %arg0, %c0_i32, %c0_i32_0 : i32, i32, i32
  }
}

</mosaic_0001>

<llo_original>
// kernel: forward.3
$region0: #{forward.3}
  #allocation0 [shape = 'u32[]', space=smem, size = 0x4, offset = 0x4, fixed_abs, tag = 'smem constant byte address 0x4 - core index']
  #allocation1 [shape = 'u32[72,128]{1,0:T(1,128)}', space=vmem, size = 0x9000, scoped, tag = 'internal scratch']
  #allocation2 [shape = 'f32[128,384]{1,0:T(8,128)}', space=vmem, size = 0x30000, scoped, tag = 'scratch operand']
  %s0 = inlined_call_operand.vmem [shape: f32[2,3,384], index: 0, kind: input, shape index: {}]
  %s1 = inlined_call_operand.vmem [shape: f32[2,64,3], index: 1, kind: input, shape index: {}]
  %s2 = inlined_call_operand.hbm [shape: f32[2,3,128], index: 2, kind: output, shape index: {0}]
  %s3 = inlined_call_operand.vmem [shape: f32[2,1,1], index: 3, kind: output, shape index: {1}]
  %4 = xla_tuple %s2, %s3
  %s5 = sld [smem:[#allocation0]]
  $region56: #{forward.3} parent=0
    _
  %s7 = ssub.s32 1, %s5
  %s8 = scalar_select 0, %s7, %s5
  $region1: #{forward.3} parent=0
    #allocation3 [shape = 'u8[4096]{0}', space=vmem, size = 0x1000, scoped, tag = 'output window, operand 0']
    #allocation4 [shape = 's32[2]{0}', space=sflag, size = 0x8, scoped, tag = 'scoped memory for forward.3']
    %9 = vsyncpa [#allocation4], 0
    %s10 = scalar_lea.sflag [#allocation4], 1
    %11 = vsyncpa %s10, 0
    loop: start=0, step=1, limit=4
    $region2: #{forward.3} parent=1 // loop_pre_header
      _
    $region3: #{forward.3} parent=1 // loop_header
      %s13 = sphi 0, %s17
      %p14 = scmp.ge.s32.totalorder %s13, 4
      %s23 = sphi 0, %s25
      %s26 = sphi 0, %s23
      %s27 = sphi 0, %s26
      %s43 = sphi 0, %s27
      %s49 = sphi 0, %s51
      %s52 = sphi 0, %s49
      %s53 = sphi 0, %s52
      %s69 = sphi 0, %s53
      %s75 = sphi 0, %s77
      %s78 = sphi 0, %s75
      %s79 = sphi 0, %s78
      %s95 = sphi 0, %s79
      %s101 = sphi 0, %s103
      %s104 = sphi 0, %s101
      %s105 = sphi 0, %s104
      %s121 = sphi 0, %s105
    $region4: #{forward.3} parent=1 // loop_header_branch
      %16 = sbr.rel (%p14) target = $region8
    $region5: #{forward.3} parent=1 // loop_body
      %s18 = ssub.s32 %s13, 1
      %s19 = ssub.s32 %s13, 2
      %s20 = sadd.s32 %s13, 1
      %s21 = ssub.s32 %s13, %s20
      %p22 = scmp.eq.s32.totalorder %s21, 0
      %s24 = sadd.s32 %s23, 1
      %s25 = scalar_select %p22, %s23, %s24
      %p28 = pneg %p22
      %p29 = scmp.eq.s32.totalorder %s13, 1
      %p30 = por %p28, %p29
      %p31 = scmp.ne.s32.totalorder %s23, %s26
      %p32 = scmp.eq.s32.totalorder %s13, 0
      %p33 = por %p31, %p32
      %p34 = scmp.ne.s32.totalorder %s23, %s26
      %p35 = scmp.eq.s32.totalorder %s18, 1
      %p36 = por %p34, %p35
      %p37 = scmp.ne.s32.totalorder %s26, %s27
      %p38 = scmp.eq.s32.totalorder %s18, 0
      %p39 = por %p37, %p38
      %p40 = scmp.ne.s32.totalorder %s26, %s27
      %p41 = scmp.eq.s32.totalorder %s19, 1
      %p42 = por %p40, %p41
      %p44 = scmp.ne.s32.totalorder %s27, %s43
      %p45 = scmp.eq.s32.totalorder %s19, 0
      %p46 = por %p44, %p45
      %s47 = ssub.s32 %s13, %s20
      %p48 = scmp.eq.s32.totalorder %s47, 0
      %s50 = sadd.s32 %s49, 1
      %s51 = scalar_select %p48, %s49, %s50
      %p54 = pneg %p48
      %p55 = scmp.eq.s32.totalorder %s13, 1
      %p56 = por %p54, %p55
      %p57 = scmp.ne.s32.totalorder %s49, %s52
      %p58 = scmp.eq.s32.totalorder %s13, 0
      %p59 = por %p57, %p58
      %p60 = scmp.ne.s32.totalorder %s49, %s52
      %p61 = scmp.eq.s32.totalorder %s18, 1
      %p62 = por %p60, %p61
      %p63 = scmp.ne.s32.totalorder %s52, %s53
      %p64 = scmp.eq.s32.totalorder %s18, 0
      %p65 = por %p63, %p64
      %p66 = scmp.ne.s32.totalorder %s52, %s53
      %p67 = scmp.eq.s32.totalorder %s19, 1
      %p68 = por %p66, %p67
      %p70 = scmp.ne.s32.totalorder %s53, %s69
      %p71 = scmp.eq.s32.totalorder %s19, 0
      %p72 = por %p70, %p71
      %s73 = ssub.s32 %s13, %s20
      %p74 = scmp.eq.s32.totalorder %s73, 0
      %s76 = sadd.s32 %s75, 1
      %s77 = scalar_select %p74, %s75, %s76
      %p80 = pneg %p74
      %p81 = scmp.eq.s32.totalorder %s13, 1
      %p82 = por %p80, %p81
      %p83 = scmp.ne.s32.totalorder %s75, %s78
      %p84 = scmp.eq.s32.totalorder %s13, 0
      %p85 = por %p83, %p84
      %p86 = scmp.ne.s32.totalorder %s75, %s78
      %p87 = scmp.eq.s32.totalorder %s18, 1
      %p88 = por %p86, %p87
      %p89 = scmp.ne.s32.totalorder %s78, %s79
      %p90 = scmp.eq.s32.totalorder %s18, 0
      %p91 = por %p89, %p90
      %p92 = scmp.ne.s32.totalorder %s78, %s79
      %p93 = scmp.eq.s32.totalorder %s19, 1
      %p94 = por %p92, %p93
      %p96 = scmp.ne.s32.totalorder %s79, %s95
      %p97 = scmp.eq.s32.totalorder %s19, 0
      %p98 = por %p96, %p97
      %s99 = ssub.s32 %s13, %s20
      %p100 = scmp.eq.s32.totalorder %s99, 0
      %s102 = sadd.s32 %s101, 1
      %s103 = scalar_select %p100, %s101, %s102
      %p106 = pneg %p100
      %p107 = scmp.eq.s32.totalorder %s13, 1
      %p108 = por %p106, %p107
      %p109 = scmp.ne.s32.totalorder %s101, %s104
      %p110 = scmp.eq.s32.totalorder %s13, 0
      %p111 = por %p109, %p110
      %p112 = scmp.ne.s32.totalorder %s101, %s104
      %p113 = scmp.eq.s32.totalorder %s18, 1
      %p114 = por %p112, %p113
      %p115 = scmp.ne.s32.totalorder %s104, %s105
      %p116 = scmp.eq.s32.totalorder %s18, 0
      %p117 = por %p115, %p116
      %p118 = scmp.ne.s32.totalorder %s104, %s105
      %p119 = scmp.eq.s32.totalorder %s19, 1
      %p120 = por %p118, %p119
      %p122 = scmp.ne.s32.totalorder %s105, %s121
      %p123 = scmp.eq.s32.totalorder %s19, 0
      %p124 = por %p122, %p123
      %p125 = scmp.le.s32.totalorder 1, %s13
      %p126 = scmp.lt.s32.totalorder %s13, 3
      %p127 = pnand %p125, %p126
      %p128 = pneg %p127
      // Predicated region
      $region9: #{forward.3} parent=5 // pred_check
        _
      $region10: #{forward.3} parent=5 // pred_check_branch
        %130 = sbr.rel (%p127) target = $region12
      $region11: #{forward.3} parent=5 // pred_region
        %s131 = ssub.s32 %s13, 1
      $region12: #{forward.3} parent=5 // pred_fallthru
        _
      %p132 = scmp.lt.s32.totalorder %s13, 2
      // Predicated region
      $region13: #{forward.3} parent=5 // pred_check
        %p133 = pneg %p132
      $region14: #{forward.3} parent=5 // pred_check_branch
        %135 = sbr.rel (%p133) target = $region16
      $region15: #{forward.3} parent=5 // pred_region
        // Predicated region
        $region17: #{forward.3} parent=15 // pred_check
          %p136 = pneg %p33
        $region18: #{forward.3} parent=15 // pred_check_branch
          %138 = sbr.rel (%p136) target = $region20
        $region19: #{forward.3} parent=15 // pred_region
          %p139 = scmp.lt.s32.totalorder %s13, 1
          %s140 = scalar_select %p139, %s13, 1
          %s141 = smul.addr %s140, 3
          %s142 = smul.addr %s141, 4
          %s143 = scalar_lea.vmem %s0, %s142
        $region20: #{forward.3} parent=15 // pred_fallthru
          _
        // Predicated region
        $region21: #{forward.3} parent=15 // pred_check
          %p144 = pneg %p59
        $region22: #{forward.3} parent=15 // pred_check_branch
          %146 = sbr.rel (%p144) target = $region24
        $region23: #{forward.3} parent=15 // pred_region
          %p147 = scmp.lt.s32.totalorder %s13, 1
          %s148 = scalar_select %p147, %s13, 1
          %s149 = smul.addr %s148, 8
          %s150 = smul.addr %s149, 8
          %s151 = scalar_lea.vmem %s1, %s150
        $region24: #{forward.3} parent=15 // pred_fallthru
          _
      $region16: #{forward.3} parent=5 // pred_fallthru
        _
      %p152 = scmp.le.s32.totalorder 1, %s13
      %p153 = scmp.lt.s32.totalorder %s13, 3
      %p154 = pnand %p152, %p153
      %p155 = pneg %p154
      // Predicated region
      $region25: #{forward.3} parent=5 // pred_check
        _
      $region26: #{forward.3} parent=5 // pred_check_branch
        %157 = sbr.rel (%p154) target = $region28
      $region27: #{forward.3} parent=5 // pred_region
        %s158 = ssub.s32 %s13, 1
        %p159 = scmp.lt.s32.totalorder %s18, 1
        %s160 = scalar_select %p159, %s18, 1
        %s161 = smul.addr %s160, 3
        %s162 = smul.addr %s161, 4
        %s163 = scalar_lea.vmem %s0, %s162
        %p164 = pneg %p39
        %p165 = pneg %p36
        %p166 = scmp.lt.s32.totalorder %s18, 1
        %s167 = scalar_select %p166, %s18, 1
        %s168 = smul.addr %s167, 8
        %s169 = smul.addr %s168, 8
        %s170 = scalar_lea.vmem %s1, %s169
        %p171 = pneg %p65
        %p172 = pneg %p62
        %p173 = pneg %p91
        %p174 = pneg %p88
        %s175 = sand.u32 %s78, 1
        %s176 = scalar_lea.sflag [#allocation4], %s175
        %s177 = sand.u32 %s78, 1
        %s178 = smul.addr %s177, 4
        %s179 = scalar_lea.vmem [#allocation3], %s178
        %p180 = pneg %p117
        %p181 = pneg %p114
        %p182 = scmp.lt.s32.totalorder %s18, 1
        %s183 = scalar_select %p182, %s18, 1
        %s184 = scalar_lea.vmem %s3, %s183
        %p185 = scmp.lt.s32.totalorder %s18, 1
        %s186 = scalar_select %p185, %s18, 1
        %s187 = smul.addr %s186, 3
        %s188 = smul.addr %s187, 4
        %s189 = scalar_lea.vmem %s0, %s188
        %p190 = scmp.lt.s32.totalorder %s18, 1
        %s191 = scalar_select %p190, %s18, 1
        %s192 = smul.addr %s191, 8
        %s193 = smul.addr %s192, 8
        %s194 = scalar_lea.vmem %s1, %s193
        %p195 = scmp.lt.s32.totalorder %s18, 1
        %s196 = scalar_select %p195, %s18, 1
        %s197 = scalar_lea.vmem %s3, %s196
        %v198 = vld [vmem:[%s189] sm:$0x77]
        %v199 = vld [vmem:[%s189 + $0x8] sm:$0x7]
        %v200 = vlaneseq
        %v201 = vand.u32 %v200, 127
        %v202 = vadd.s32 %v201, 128
        %v203 = vadd.s32 %v201, 256
        %v204 = vcvt.s32.f32 %v201
        %v205 = vcvt.s32.f32 %v202
        %v206 = vcvt.s32.f32 %v203
        %vm207 = vcmp.eq.f32.partialorder %v204, 0.0
        %vm208 = vcmp.eq.f32.partialorder %v205, 0.0
        %vm209 = vcmp.eq.f32.partialorder %v206, 0.0
        %v210 = vsel %vm207, 1, 0
        %v211 = vsel %vm208, 1, 0
        %v212 = vsel %vm209, 1, 0
        %v213 = vcvt.s32.f32 %v210
        %v214 = vcvt.s32.f32 %v211
        %v215 = vcvt.s32.f32 %v212
        loop: start=0, step=1, limit=128
        $region29: #{forward.3} parent=27 // loop_pre_header
          _
        $region30: #{forward.3} parent=27 // loop_header
          %s217 = sphi 0, %s221
          %p218 = scmp.ge.s32.totalorder %s217, 128
          %v222 = vphi 1e+10, %v319
          %v223 = vphi 1e+10, %v320
          %v224 = vphi 1e+10, %v321
          %v225 = vphi %v213, %v342
          %v226 = vphi %v214, %v343
          %v227 = vphi %v215, %v344
        $region31: #{forward.3} parent=27 // loop_header_branch
          %220 = sbr.rel (%p218) target = $region35
        $region32: #{forward.3} parent=27 // loop_body
          %v231 = vrot.slane %v226, 7
          %v232 = vrot.slane %v227, 6
          %vm233 = vcmask 1040384
          %v234 = vsel %vm233, %v225, %v231
          %vm235 = vcmask 1041408
          %v236 = vsel %vm235, %v234, %v232
          %v238 = vlaneseq
          %vm239 = vcmp.ge.s32.totalorder %v238, 0
          %vm240 = vcmp.lt.s32.totalorder %v238, 384
          %vm241 = vmand %vm239, %vm240
          %s242 = sshra.s32 %s217, 3
          %s243 = sand.u32 %s217, 7
          %s244 = sshra.s32 %s217, 3
          %s245 = sand.u32 %s217, 7
          %s246 = smul.u32 %s242, 3
          %s247 = smul.u32 %s246, 8
          %s248 = sadd.s32 %s247, %s245
          %s249 = scalar_lea.vmem [#allocation2], %s248
          %250 = vst.msk [vmem:[%s249] ss:$8 sm:$0x7] %vm241, %v236
          %251 = vst.msk [vmem:[%s249] ss:$8 sm:$0x0] %vm241, %v236
          %v252 = vrot.slane %v226, 4
          %vm253 = vcmask 1043456
          %v254 = vsel %vm253, %v225, %v252
          %v256 = vmul.f32 %v198, %v254
          %v257 = vmul.f32 %v199, %v227
          %260 = vst [vmem:[#allocation1] ss:$2 sm:$0xff] %v256
          %s261 = scalar_lea.vmem [#allocation1], 16
          %262 = vst [vmem:[%s261] ss:$2 sm:$0xff] %v257
          %v263 = vld.sshfl [vmem:[#allocation1] sm:$0xff pattern:$0x75316420]
          %v264 = vld.sshfl [vmem:[#allocation1 + $0x8] sm:$0xff pattern:$0x75316420]
          %v265 = vld.sshfl [vmem:[#allocation1 + $0x10] sm:$0xff pattern:$0x75316420]
          %vm269 = vcmask 1042432
          %v270 = vsel %vm269, %v263, 0.0
          %v271 = vsel %vm269, %v264, 0.0
          %v272 = vadd.f32 %v270, %v271
          %v273 = vsel %vm269, %v265, 0.0
          %v274 = vadd.f32 %v272, %v273
          %275 = vadd.xlane.f32.xlu0 %v274
          %v276 = vpop.xlane.xlu0 %275
          %v279 = vunpack.c.l.s4 839922192
          %v280 = vunpack.c.0.s8 %v279
          %v281 = vperm.slane %v276, %v280
          %v283 = vsub.f32 %v198, %v281
          %v284 = vsub.f32 %v199, %v281
          %v285 = vmul.f32 %v283, %v283
          %v286 = vmul.f32 %v284, %v284
          %289 = vst [vmem:[#allocation1] ss:$2 sm:$0xff] %v285
          %s290 = scalar_lea.vmem [#allocation1], 16
          %291 = vst [vmem:[%s290] ss:$2 sm:$0xff] %v286
          %v292 = vld.sshfl [vmem:[#allocation1] sm:$0xff pattern:$0x75316420]
          %v293 = vld.sshfl [vmem:[#allocation1 + $0x8] sm:$0xff pattern:$0x75316420]
          %v294 = vld.sshfl [vmem:[#allocation1 + $0x10] sm:$0xff pattern:$0x75316420]
          %v298 = vsel %vm269, %v292, 0.0
          %v299 = vrot.slane %v298, 4
          %v300 = vadd.f32 %v298, %v299
          %v301 = vrot.slane %v300, 2
          %v302 = vadd.f32 %v300, %v301
          %v303 = vrot.slane %v302, 1
          %v304 = vadd.f32 %v302, %v303
          %v305 = vsel %vm269, %v293, 0.0
          %v306 = vrot.slane %v305, 4
          %v307 = vadd.f32 %v305, %v306
          %v308 = vrot.slane %v307, 2
          %v309 = vadd.f32 %v307, %v308
          %v310 = vrot.slane %v309, 1
          %v311 = vadd.f32 %v309, %v310
          %v312 = vsel %vm269, %v294, 0.0
          %v313 = vrot.slane %v312, 4
          %v314 = vadd.f32 %v312, %v313
          %v315 = vrot.slane %v314, 2
          %v316 = vadd.f32 %v314, %v315
          %v317 = vrot.slane %v316, 1
          %v318 = vadd.f32 %v316, %v317
          %v319 = vmin.f32 %v222, %v304
          %v320 = vmin.f32 %v223, %v311
          %v321 = vmin.f32 %v224, %v318
          %v322 = vmax.f32 %v319, %v320
          %v323 = vmax.f32 %v322, %v321
          %324 = vmax.xlane.f32.xlu0 %v323
          %v325 = vpop.xlane.xlu0 %324
          %vm326 = vcmp.eq.f32.partialorder %v319, %v325
          %vm327 = vcmp.eq.f32.partialorder %v320, %v325
          %vm328 = vcmp.eq.f32.partialorder %v321, %v325
          %v329 = vsel %vm326, %v204, 384.0
          %v330 = vsel %vm327, %v205, 384.0
          %v331 = vsel %vm328, %v206, 384.0
          %v332 = vmin.f32 %v329, %v330
          %v333 = vmin.f32 %v332, %v331
          %334 = vmin.xlane.f32.xlu0 %v333
          %v335 = vpop.xlane.xlu0 %334
          %vm336 = vcmp.eq.f32.partialorder %v204, %v335
          %vm337 = vcmp.eq.f32.partialorder %v205, %v335
          %vm338 = vcmp.eq.f32.partialorder %v206, %v335
          %v339 = vsel %vm336, 1, 0
          %v340 = vsel %vm337, 1, 0
          %v341 = vsel %vm338, 1, 0
          %v342 = vcvt.s32.f32 %v339
          %v343 = vcvt.s32.f32 %v340
          %v344 = vcvt.s32.f32 %v341
        $region33: #{forward.3} parent=27 // loop_footer
          %s221 = sadd.s32 1, %s217
        $region34: #{forward.3} parent=27 // loop_footer_branch
          %216 = sbr.rel target = $region30
        $region35: #{forward.3} parent=27 // loop_exit
          _
        %v345 = vld [vmem:[#allocation2] sm:$0xff]
        %v346 = vld [vmem:[#allocation2 + $0x8] sm:$0xff]
        %v347 = vld [vmem:[#allocation2 + $0x10] sm:$0xff]
        %v348 = vld [vmem:[#allocation2 + $0x18] sm:$0xff]
        %v349 = vld [vmem:[#allocation2 + $0x20] sm:$0xff]
        %v350 = vld [vmem:[#allocation2 + $0x28] sm:$0xff]
        %v351 = vld [vmem:[#allocation2 + $0x30] sm:$0xff]
        %v352 = vld [vmem:[#allocation2 + $0x38] sm:$0xff]
        %v353 = vld [vmem:[#allocation2 + $0x40] sm:$0xff]
        %v354 = vld [vmem:[#allocation2 + $0x48] sm:$0xff]
        %v355 = vld [vmem:[#allocation2 + $0x50] sm:$0xff]
        %v356 = vld [vmem:[#allocation2 + $0x58] sm:$0xff]
        %v357 = vld [vmem:[#allocation2 + $0x60] sm:$0xff]
        %v358 = vld [vmem:[#allocation2 + $0x68] sm:$0xff]
        %v359 = vld [vmem:[#allocation2 + $0x70] sm:$0xff]
        %v360 = vld [vmem:[#allocation2 + $0x78] sm:$0xff]
        %v361 = vld [vmem:[#allocation2 + $0x80] sm:$0xff]
        %v362 = vld [vmem:[#allocation2 + $0x88] sm:$0xff]
        %v363 = vld [vmem:[#allocation2 + $0x90] sm:$0xff]
        %v364 = vld [vmem:[#allocation2 + $0x98] sm:$0xff]
        %v365 = vld [vmem:[#allocation2 + $0xa0] sm:$0xff]
        %v366 = vld [vmem:[#allocation2 + $0xa8] sm:$0xff]
        %v367 = vld [vmem:[#allocation2 + $0xb0] sm:$0xff]
        %v368 = vld [vmem:[#allocation2 + $0xb8] sm:$0xff]
        %v369 = vld [vmem:[#allocation2 + $0xc0] sm:$0xff]
        %v370 = vld [vmem:[#allocation2 + $0xc8] sm:$0xff]
        %v371 = vld [vmem:[#allocation2 + $0xd0] sm:$0xff]
        %v372 = vld [vmem:[#allocation2 + $0xd8] sm:$0xff]
        %v373 = vld [vmem:[#allocation2 + $0xe0] sm:$0xff]
        %v374 = vld [vmem:[#allocation2 + $0xe8] sm:$0xff]
        %v375 = vld [vmem:[#allocation2 + $0xf0] sm:$0xff]
        %v376 = vld [vmem:[#allocation2 + $0xf8] sm:$0xff]
        %v377 = vld [vmem:[#allocation2 + $0x100] sm:$0xff]
        %v378 = vld [vmem:[#allocation2 + $0x108] sm:$0xff]
        %v379 = vld [vmem:[#allocation2 + $0x110] sm:$0xff]
        %v380 = vld [vmem:[#allocation2 + $0x118] sm:$0xff]
        %v381 = vld [vmem:[#allocation2 + $0x120] sm:$0xff]
        %v382 = vld [vmem:[#allocation2 + $0x128] sm:$0xff]
        %v383 = vld [vmem:[#allocation2 + $0x130] sm:$0xff]
        %v384 = vld [vmem:[#allocation2 + $0x138] sm:$0xff]
        %v385 = vld [vmem:[#allocation2 + $0x140] sm:$0xff]
        %v386 = vld [vmem:[#allocation2 + $0x148] sm:$0xff]
        %v387 = vld [vmem:[#allocation2 + $0x150] sm:$0xff]
        %v388 = vld [vmem:[#allocation2 + $0x158] sm:$0xff]
        %v389 = vld [vmem:[#allocation2 + $0x160] sm:$0xff]
        %v390 = vld [vmem:[#allocation2 + $0x168] sm:$0xff]
        %v391 = vld [vmem:[#allocation2 + $0x170] sm:$0xff]
        %v392 = vld [vmem:[#allocation2 + $0x178] sm:$0xff]
        %395 = vst [vmem:[#allocation1] ss:$2 sm:$0xff] %v198
        %s396 = scalar_lea.vmem [#allocation1], 16
        %397 = vst [vmem:[%s396] ss:$2 sm:$0xff] %v199
        %v398 = vld.sshfl [vmem:[#allocation1] sm:$0xff pattern:$0x75316420]
        %v399 = vld.sshfl [vmem:[#allocation1 + $0x8] sm:$0xff pattern:$0x75316420]
        %v400 = vld.sshfl [vmem:[#allocation1 + $0x10] sm:$0xff pattern:$0x75316420]
        %404 = vmatpush.xpose.msra.mxu0 %v390
        %405 = vmatpush.xpose.msra.mxu0 %v387
        %406 = vmatpush.xpose.msra.mxu0 %v384
        %407 = vmatpush.xpose.msra.mxu0 %v381
        %408 = vmatpush.xpose.msra.mxu0 %v378
        %409 = vmatpush.xpose.msra.mxu0 %v375
        %410 = vmatpush.xpose.msra.mxu0 %v372
        %411 = vmatpush.xpose.msra.mxu0 %v369
        %412 = vmatpush.xpose.msra.mxu0 %v366
        %413 = vmatpush.xpose.msra.mxu0 %v363
        %414 = vmatpush.xpose.msra.mxu0 %v360
        %415 = vmatpush.xpose.msra.mxu0 %v357
        %416 = vmatpush.xpose.msra.mxu0 %v354
        %417 = vmatpush.xpose.msra.mxu0 %v351
        %418 = vmatpush.xpose.msra.mxu0 %v348
        %419 = vmatpush.xpose.msra.mxu0 %v345
        %420 = vmatmul.f32.gmra.mxu0 %v398
        %v421 = vpop.f32.mrf.mxu0
        %v422 = vadd.f32 0.0, %v421
        %423 = vdwg.mxu0
        %424 = vmatpush.xpose.msra.mxu0 %v391
        %425 = vmatpush.xpose.msra.mxu0 %v388
        %426 = vmatpush.xpose.msra.mxu0 %v385
        %427 = vmatpush.xpose.msra.mxu0 %v382
        %428 = vmatpush.xpose.msra.mxu0 %v379
        %429 = vmatpush.xpose.msra.mxu0 %v376
        %430 = vmatpush.xpose.msra.mxu0 %v373
        %431 = vmatpush.xpose.msra.mxu0 %v370
        %432 = vmatpush.xpose.msra.mxu0 %v367
        %433 = vmatpush.xpose.msra.mxu0 %v364
        %434 = vmatpush.xpose.msra.mxu0 %v361
        %435 = vmatpush.xpose.msra.mxu0 %v358
        %436 = vmatpush.xpose.msra.mxu0 %v355
        %437 = vmatpush.xpose.msra.mxu0 %v352
        %438 = vmatpush.xpose.msra.mxu0 %v349
        %439 = vmatpush.xpose.msra.mxu0 %v346
        %440 = vmatmul.f32.gmra.mxu0 %v399
        %v441 = vpop.f32.mrf.mxu0
        %v442 = vadd.f32 %v422, %v441
        %443 = vdwg.mxu0
        %444 = vmatpush.xpose.msra.mxu0 %v392
        %445 = vmatpush.xpose.msra.mxu0 %v389
        %446 = vmatpush.xpose.msra.mxu0 %v386
        %447 = vmatpush.xpose.msra.mxu0 %v383
        %448 = vmatpush.xpose.msra.mxu0 %v380
        %449 = vmatpush.xpose.msra.mxu0 %v377
        %450 = vmatpush.xpose.msra.mxu0 %v374
        %451 = vmatpush.xpose.msra.mxu0 %v371
        %452 = vmatpush.xpose.msra.mxu0 %v368
        %453 = vmatpush.xpose.msra.mxu0 %v365
        %454 = vmatpush.xpose.msra.mxu0 %v362
        %455 = vmatpush.xpose.msra.mxu0 %v359
        %456 = vmatpush.xpose.msra.mxu0 %v356
        %457 = vmatpush.xpose.msra.mxu0 %v353
        %458 = vmatpush.xpose.msra.mxu0 %v350
        %459 = vmatpush.xpose.msra.mxu0 %v347
        %460 = vmatmul.f32.gmra.mxu0 %v400
        %v461 = vpop.f32.mrf.mxu0
        %v462 = vadd.f32 %v442, %v461
        %463 = vdwg.mxu0
        %464 = vst [vmem:[%s179] sm:$0x7] %v462
        %v465 = vld [vmem:[%s194] sm:$0xff]
        %v466 = vld [vmem:[%s194 + $0x8] sm:$0xff]
        %v467 = vld [vmem:[%s194 + $0x10] sm:$0xff]
        %v468 = vld [vmem:[%s194 + $0x18] sm:$0xff]
        %v469 = vld [vmem:[%s194 + $0x20] sm:$0xff]
        %v470 = vld [vmem:[%s194 + $0x28] sm:$0xff]
        %v471 = vld [vmem:[%s194 + $0x30] sm:$0xff]
        %v472 = vld [vmem:[%s194 + $0x38] sm:$0xff]
        %v473 = vmul.f32 %v465, %v465
        %v474 = vmul.f32 %v466, %v466
        %v475 = vmul.f32 %v467, %v467
        %v476 = vmul.f32 %v468, %v468
        %v477 = vmul.f32 %v469, %v469
        %v478 = vmul.f32 %v470, %v470
        %v479 = vmul.f32 %v471, %v471
        %v480 = vmul.f32 %v472, %v472
        %vm481 = vcmask 23552
        %v482 = vsel %vm481, %v473, 0.0
        %483 = vadd.xlane.f32.xlu0 %v482
        %v484 = vpop.xlane.xlu0 %483
        %v485 = vsel %vm481, %v474, 0.0
        %486 = vadd.xlane.f32.xlu0 %v485
        %v487 = vpop.xlane.xlu0 %486
        %v488 = vsel %vm481, %v475, 0.0
        %489 = vadd.xlane.f32.xlu0 %v488
        %v490 = vpop.xlane.xlu0 %489
        %v491 = vsel %vm481, %v476, 0.0
        %492 = vadd.xlane.f32.xlu0 %v491
        %v493 = vpop.xlane.xlu0 %492
        %v494 = vsel %vm481, %v477, 0.0
        %495 = vadd.xlane.f32.xlu0 %v494
        %v496 = vpop.xlane.xlu0 %495
        %v497 = vsel %vm481, %v478, 0.0
        %498 = vadd.xlane.f32.xlu0 %v497
        %v499 = vpop.xlane.xlu0 %498
        %v500 = vsel %vm481, %v479, 0.0
        %501 = vadd.xlane.f32.xlu0 %v500
        %v502 = vpop.xlane.xlu0 %501
        %v503 = vsel %vm481, %v480, 0.0
        %504 = vadd.xlane.f32.xlu0 %v503
        %v505 = vpop.xlane.xlu0 %504
        %v506 = vmul.f32 %v462, %v462
        %vm507 = vcmask 1042432
        %v508 = vsel %vm507, %v506, 0.0
        %v509 = vrot.slane %v508, 4
        %v510 = vadd.f32 %v508, %v509
        %v511 = vrot.slane %v510, 2
        %v512 = vadd.f32 %v510, %v511
        %v513 = vrot.slane %v512, 1
        %v514 = vadd.f32 %v512, %v513
        %v516 = vsel %vm481, %v465, 0
        %v519 = vsel %vm481, %v466, 0
        %v522 = vsel %vm481, %v467, 0
        %v525 = vsel %vm481, %v468, 0
        %v528 = vsel %vm481, %v469, 0
        %v531 = vsel %vm481, %v470, 0
        %v534 = vsel %vm481, %v471, 0
        %v537 = vsel %vm481, %v472, 0
        %v540 = vsel %vm507, %v462, 0
        %542 = vmatpush.msra.mxu0 0.0
        %543 = vmatpush.msra.mxu0 0.0
        %544 = vmatpush.msra.mxu0 0.0
        %545 = vmatpush.msra.mxu0 0.0
        %546 = vmatpush.msra.mxu0 0.0
        %547 = vmatpush.msra.mxu0 0.0
        %548 = vmatpush.msra.mxu0 0.0
        %549 = vmatpush.msra.mxu0 0.0
        %550 = vmatpush.msra.mxu0 0.0
        %551 = vmatpush.msra.mxu0 0.0
        %552 = vmatpush.msra.mxu0 0.0
        %553 = vmatpush.msra.mxu0 0.0
        %554 = vmatpush.msra.mxu0 0.0
        %555 = vmatpush.msra.mxu0 0.0
        %556 = vmatpush.msra.mxu0 0.0
        %557 = vmatpush.msra.mxu0 %v540
        %558 = vmatmul.f32.gmra.mxu0 %v516
        %v559 = vpop.f32.mrf.mxu0
        %v560 = vadd.f32 0.0, %v559
        %561 = vmatmul.f32.gmra.mxu0 %v519
        %v562 = vpop.f32.mrf.mxu0
        %v563 = vadd.f32 0.0, %v562
        %564 = vmatmul.f32.gmra.mxu0 %v522
        %v565 = vpop.f32.mrf.mxu0
        %v566 = vadd.f32 0.0, %v565
        %567 = vmatmul.f32.gmra.mxu0 %v525
        %v568 = vpop.f32.mrf.mxu0
        %v569 = vadd.f32 0.0, %v568
        %570 = vmatmul.f32.gmra.mxu0 %v528
        %v571 = vpop.f32.mrf.mxu0
        %v572 = vadd.f32 0.0, %v571
        %573 = vmatmul.f32.gmra.mxu0 %v531
        %v574 = vpop.f32.mrf.mxu0
        %v575 = vadd.f32 0.0, %v574
        %576 = vmatmul.f32.gmra.mxu0 %v534
        %v577 = vpop.f32.mrf.mxu0
        %v578 = vadd.f32 0.0, %v577
        %579 = vmatmul.f32.gmra.mxu0 %v537
        %v580 = vpop.f32.mrf.mxu0
        %v581 = vadd.f32 0.0, %v580
        %582 = vdwg.mxu0
        %v583 = vmul.f32 %v560, 2.0
        %v584 = vmul.f32 %v563, 2.0
        %v585 = vmul.f32 %v566, 2.0
        %v586 = vmul.f32 %v569, 2.0
        %v587 = vmul.f32 %v572, 2.0
        %v588 = vmul.f32 %v575, 2.0
        %v589 = vmul.f32 %v578, 2.0
        %v590 = vmul.f32 %v581, 2.0
        %v591 = vsub.f32 %v484, %v583
        %v592 = vsub.f32 %v487, %v584
        %v593 = vsub.f32 %v490, %v585
        %v594 = vsub.f32 %v493, %v586
        %v595 = vsub.f32 %v496, %v587
        %v596 = vsub.f32 %v499, %v588
        %v597 = vsub.f32 %v502, %v589
        %v598 = vsub.f32 %v505, %v590
        %v599 = vadd.f32 %v591, %v514
        %v600 = vadd.f32 %v592, %v514
        %v601 = vadd.f32 %v593, %v514
        %v602 = vadd.f32 %v594, %v514
        %v603 = vadd.f32 %v595, %v514
        %v604 = vadd.f32 %v596, %v514
        %v605 = vadd.f32 %v597, %v514
        %v606 = vadd.f32 %v598, %v514
        %v607 = vmax.f32 %v599, 0.0
        %v608 = vmax.f32 %v600, 0.0
        %v609 = vmax.f32 %v601, 0.0
        %v610 = vmax.f32 %v602, 0.0
        %v611 = vmax.f32 %v603, 0.0
        %v612 = vmax.f32 %v604, 0.0
        %v613 = vmax.f32 %v605, 0.0
        %v614 = vmax.f32 %v606, 0.0
        %v615 = vmin.f32 %v607, %v611
        %v616 = vmin.f32 %v608, %v612
        %v617 = vmin.f32 %v609, %v613
        %v618 = vmin.f32 %v610, %v614
        %v619 = vmin.f32 %v615, %v616
        %v620 = vmin.f32 %v617, %v618
        %v621 = vmin.f32 %v619, %v620
        %v622 = vrot.slane %v621, 4
        %v623 = vmin.f32 %v621, %v622
        %v624 = vrot.slane %v623, 2
        %v625 = vmin.f32 %v623, %v624
        %v626 = vrot.slane %v625, 1
        %v627 = vmin.f32 %v625, %v626
        %628 = vmin.xlane.f32.xlu0 %v607
        %v629 = vpop.xlane.xlu0 %628
        %630 = vmin.xlane.f32.xlu0 %v608
        %v631 = vpop.xlane.xlu0 %630
        %632 = vmin.xlane.f32.xlu0 %v609
        %v633 = vpop.xlane.xlu0 %632
        %634 = vmin.xlane.f32.xlu0 %v610
        %v635 = vpop.xlane.xlu0 %634
        %636 = vmin.xlane.f32.xlu0 %v611
        %v637 = vpop.xlane.xlu0 %636
        %638 = vmin.xlane.f32.xlu0 %v612
        %v639 = vpop.xlane.xlu0 %638
        %640 = vmin.xlane.f32.xlu0 %v613
        %v641 = vpop.xlane.xlu0 %640
        %642 = vmin.xlane.f32.xlu0 %v614
        %v643 = vpop.xlane.xlu0 %642
        %644 = vadd.xlane.f32.xlu0 %v627
        %v645 = vpop.xlane.xlu0 %644
        %v646 = vrcp.pop 128.0
        %v647 = vmul.f32 128.0, %v646
        %v648 = vsub.f32 1.0, %v647
        %v649 = vmul.f32 %v646, %v648
        %v650 = vadd.f32 %v646, %v649
        %vm651 = vweird.f32 %v646
        %v652 = vsel %vm651, %v646, %v650
        %v653 = vmul.f32 %v645, %v652
        %v654 = vadd.f32 %v629, %v631
        %v655 = vadd.f32 %v654, %v633
        %v656 = vadd.f32 %v655, %v635
        %v657 = vadd.f32 %v656, %v637
        %v658 = vadd.f32 %v657, %v639
        %v659 = vadd.f32 %v658, %v641
        %v660 = vadd.f32 %v659, %v643
        %v661 = vrot.slane %v660, 4
        %v662 = vadd.f32 %v660, %v661
        %v663 = vrot.slane %v662, 2
        %v664 = vadd.f32 %v662, %v663
        %v665 = vrot.slane %v664, 1
        %v666 = vadd.f32 %v664, %v665
        %v667 = vrcp.pop 64.0
        %v668 = vmul.f32 64.0, %v667
        %v669 = vsub.f32 1.0, %v668
        %v670 = vmul.f32 %v667, %v669
        %v671 = vadd.f32 %v667, %v670
        %vm672 = vweird.f32 %v667
        %v673 = vsel %vm672, %v667, %v671
        %v674 = vmul.f32 %v666, %v673
        %v675 = vadd.f32 %v653, %v674
        %vm676 = vcmask 0
        %677 = vst.msk [vmem:[%s197] sm:$0x1] %vm676, %v675
        %s678 = sand.u32 %s78, 1
        %s679 = scalar_lea.sflag [#allocation4], %s678
        %s680 = sand.u32 %s78, 1
        %s681 = smul.addr %s680, 4
        %s682 = scalar_lea.vmem [#allocation3], %s681
        %p683 = scmp.lt.s32.totalorder %s18, 1
        %s684 = scalar_select %p683, %s18, 1
        %s685 = scalar_lea.vmem %s3, %s684
        // Predicated region
        $region36: #{forward.3} parent=27 // pred_check
          %p686 = pneg %p88
        $region37: #{forward.3} parent=27 // pred_check_branch
          %688 = sbr.rel (%p686) target = $region39
        $region38: #{forward.3} parent=27 // pred_region
          %690 = vsyncadd %s679, 0
          %s691 = smul.addr %s18, 4
          %s692 = scalar_lea.hbm %s2, %s691
          %s694 = sshll.u32 %s682, 4
          %s695 = int_to_ptr.vmem [resolvable:$true] %s694
          %s696 = sshll.u32 %s692, 4
          %s697 = int_to_ptr.hbm [resolvable:$true] %s696
          %699 = dma.vmem_to_hbm [thread:$0]  %s695, 64, %s697, %s679
        $region39: #{forward.3} parent=27 // pred_fallthru
          _
        // Predicated region
        $region40: #{forward.3} parent=27 // pred_check
          %p700 = pneg %p114
        $region41: #{forward.3} parent=27 // pred_check_branch
          %702 = sbr.rel (%p700) target = $region43
        $region42: #{forward.3} parent=27 // pred_region
          _
        $region43: #{forward.3} parent=27 // pred_fallthru
          _
      $region28: #{forward.3} parent=5 // pred_fallthru
        _
      %p703 = scmp.le.s32.totalorder 2, %s13
      // Predicated region
      $region44: #{forward.3} parent=5 // pred_check
        %p704 = pneg %p703
      $region45: #{forward.3} parent=5 // pred_check_branch
        %706 = sbr.rel (%p704) target = $region47
      $region46: #{forward.3} parent=5 // pred_region
        %s707 = ssub.s32 %s13, 2
        // Predicated region
        $region48: #{forward.3} parent=46 // pred_check
          %p708 = pneg %p94
        $region49: #{forward.3} parent=46 // pred_check_branch
          %710 = sbr.rel (%p708) target = $region51
        $region50: #{forward.3} parent=46 // pred_region
          %s711 = sand.u32 %s79, 1
          %s712 = scalar_lea.sflag [#allocation4], %s711
          %s713 = sand.u32 %s79, 1
          %s714 = smul.addr %s713, 4
          %s715 = scalar_lea.vmem [#allocation3], %s714
          %717 = dma.done %s712, 64
        $region51: #{forward.3} parent=46 // pred_fallthru
          _
        // Predicated region
        $region52: #{forward.3} parent=46 // pred_check
          %p718 = pneg %p120
        $region53: #{forward.3} parent=46 // pred_check_branch
          %720 = sbr.rel (%p718) target = $region55
        $region54: #{forward.3} parent=46 // pred_region
          %p721 = scmp.lt.s32.totalorder %s19, 1
          %s722 = scalar_select %p721, %s19, 1
          %s723 = scalar_lea.vmem %s3, %s722
        $region55: #{forward.3} parent=46 // pred_fallthru
          _
      $region47: #{forward.3} parent=5 // pred_fallthru
        _
    $region6: #{forward.3} parent=1 // loop_footer
      %s17 = sadd.s32 1, %s13
    $region7: #{forward.3} parent=1 // loop_footer_branch
      %12 = sbr.rel target = $region3
    $region8: #{forward.3} parent=1 // loop_exit
      _
    %724 = vsyncpa [#allocation4], 1
    %s725 = scalar_lea.sflag [#allocation4], 1
    %726 = vsyncpa %s725, 1

// kernel: forward.2
$region0: #{forward.2}
  #allocation0 [shape = 'u32[]', space=smem, size = 0x4, offset = 0x4, fixed_abs, tag = 'smem constant byte address 0x4 - core index']
  #allocation1 [shape = 'u32[72,128]{1,0:T(1,128)}', space=vmem, size = 0x9000, scoped, tag = 'internal scratch']
  %s0 = inlined_call_operand.vmem [shape: f32[2,64,3], index: 0, kind: input, shape index: {}]
  %s1 = inlined_call_operand.vmem [shape: f32[2,4,32], index: 1, kind: input, shape index: {}]
  %s2 = inlined_call_operand.vmem [shape: f32[3,32], index: 2, kind: input, shape index: {}]
  %s3 = inlined_call_operand.hbm [shape: f32[32,736], index: 3, kind: input, shape index: {}]
  %s4 = inlined_call_operand.vmem [shape: f32[1,960], index: 4, kind: input, shape index: {}]
  %s5 = inlined_call_operand.hbm [shape: f32[2,4,64], index: 5, kind: output, shape index: {0}]
  %s6 = inlined_call_operand.vmem [shape: f32[2,4,288], index: 6, kind: output, shape index: {1}]
  %7 = xla_tuple %s5, %s6
  %s8 = sld [smem:[#allocation0]]
  $region65: #{forward.2} parent=0
    _
  %s10 = ssub.s32 1, %s8
  %s11 = scalar_select 0, %s10, %s8
  $region1: #{forward.2} parent=0
    #allocation2 [shape = 'u8[98304]{0}', space=vmem, size = 0x18000, scoped, tag = 'input window, operand 3, single buffered']
    #allocation3 [shape = 's32[2]{0}', space=sflag, size = 0x8, scoped, tag = 'scoped memory for forward.2']
    #allocation4 [shape = 's32[2]{0}', space=sflag, size = 0x8, scoped, tag = 'scoped memory for forward.2']
    #allocation5 [shape = 'u8[4096]{0}', space=vmem, size = 0x1000, scoped, tag = 'output window, operand 0']
    %12 = vsyncpa [#allocation3], 0
    %13 = vsyncpa [#allocation4], 0
    %s14 = scalar_lea.sflag [#allocation4], 1
    %15 = vsyncpa %s14, 0
    loop: start=0, step=1, limit=4
    $region2: #{forward.2} parent=1 // loop_pre_header
      _
    $region3: #{forward.2} parent=1 // loop_header
      %s17 = sphi 0, %s21
      %p18 = scmp.ge.s32.totalorder %s17, 4
      %s27 = sphi 0, %s29
      %s30 = sphi 0, %s27
      %s31 = sphi 0, %s30
      %s47 = sphi 0, %s31
      %s53 = sphi 0, %s55
      %s56 = sphi 0, %s53
      %s57 = sphi 0, %s56
      %s73 = sphi 0, %s57
      %s77 = sphi 0, %s77
      %s79 = sphi 0, %s77
      %s80 = sphi 0, %s79
      %s94 = sphi 0, %s80
      %s98 = sphi 0, %s98
      %s100 = sphi 0, %s98
      %s101 = sphi 0, %s100
      %s115 = sphi 0, %s101
      %s119 = sphi 0, %s119
      %s121 = sphi 0, %s119
      %s122 = sphi 0, %s121
      %s136 = sphi 0, %s122
      %s142 = sphi 0, %s144
      %s145 = sphi 0, %s142
      %s146 = sphi 0, %s145
      %s162 = sphi 0, %s146
      %s168 = sphi 0, %s170
      %s171 = sphi 0, %s168
      %s172 = sphi 0, %s171
      %s188 = sphi 0, %s172
    $region4: #{forward.2} parent=1 // loop_header_branch
      %20 = sbr.rel (%p18) target = $region8
    $region5: #{forward.2} parent=1 // loop_body
      %s22 = ssub.s32 %s17, 1
      %s23 = ssub.s32 %s17, 2
      %s24 = sadd.s32 %s17, 1
      %s25 = ssub.s32 %s17, %s24
      %p26 = scmp.eq.s32.totalorder %s25, 0
      %s28 = sadd.s32 %s27, 1
      %s29 = scalar_select %p26, %s27, %s28
      %p32 = pneg %p26
      %p33 = scmp.eq.s32.totalorder %s17, 1
      %p34 = por %p32, %p33
      %p35 = scmp.ne.s32.totalorder %s27, %s30
      %p36 = scmp.eq.s32.totalorder %s17, 0
      %p37 = por %p35, %p36
      %p38 = scmp.ne.s32.totalorder %s27, %s30
      %p39 = scmp.eq.s32.totalorder %s22, 1
      %p40 = por %p38, %p39
      %p41 = scmp.ne.s32.totalorder %s30, %s31
      %p42 = scmp.eq.s32.totalorder %s22, 0
      %p43 = por %p41, %p42
      %p44 = scmp.ne.s32.totalorder %s30, %s31
      %p45 = scmp.eq.s32.totalorder %s23, 1
      %p46 = por %p44, %p45
      %p48 = scmp.ne.s32.totalorder %s31, %s47
      %p49 = scmp.eq.s32.totalorder %s23, 0
      %p50 = por %p48, %p49
      %s51 = ssub.s32 %s17, %s24
      %p52 = scmp.eq.s32.totalorder %s51, 0
      %s54 = sadd.s32 %s53, 1
      %s55 = scalar_select %p52, %s53, %s54
      %p58 = pneg %p52
      %p59 = scmp.eq.s32.totalorder %s17, 1
      %p60 = por %p58, %p59
      %p61 = scmp.ne.s32.totalorder %s53, %s56
      %p62 = scmp.eq.s32.totalorder %s17, 0
      %p63 = por %p61, %p62
      %p64 = scmp.ne.s32.totalorder %s53, %s56
      %p65 = scmp.eq.s32.totalorder %s22, 1
      %p66 = por %p64, %p65
      %p67 = scmp.ne.s32.totalorder %s56, %s57
      %p68 = scmp.eq.s32.totalorder %s22, 0
      %p69 = por %p67, %p68
      %p70 = scmp.ne.s32.totalorder %s56, %s57
      %p71 = scmp.eq.s32.totalorder %s23, 1
      %p72 = por %p70, %p71
      %p74 = scmp.ne.s32.totalorder %s57, %s73
      %p75 = scmp.eq.s32.totalorder %s23, 0
      %p76 = por %p74, %p75
      %s78 = sadd.s32 %s77, 1
      %p81 = scmp.eq.s32.totalorder %s17, 1
      %p82 = scmp.ne.s32.totalorder %s77, %s79
      %p83 = scmp.eq.s32.totalorder %s17, 0
      %p84 = por %p82, %p83
      %p85 = scmp.ne.s32.totalorder %s77, %s79
      %p86 = scmp.eq.s32.totalorder %s22, 1
      %p87 = por %p85, %p86
      %p88 = scmp.ne.s32.totalorder %s79, %s80
      %p89 = scmp.eq.s32.totalorder %s22, 0
      %p90 = por %p88, %p89
      %p91 = scmp.ne.s32.totalorder %s79, %s80
      %p92 = scmp.eq.s32.totalorder %s23, 1
      %p93 = por %p91, %p92
      %p95 = scmp.ne.s32.totalorder %s80, %s94
      %p96 = scmp.eq.s32.totalorder %s23, 0
      %p97 = por %p95, %p96
      %s99 = sadd.s32 %s98, 1
      %p102 = scmp.eq.s32.totalorder %s17, 1
      %p103 = scmp.ne.s32.totalorder %s98, %s100
      %p104 = scmp.eq.s32.totalorder %s17, 0
      %p105 = por %p103, %p104
      %p106 = scmp.ne.s32.totalorder %s98, %s100
      %p107 = scmp.eq.s32.totalorder %s22, 1
      %p108 = por %p106, %p107
      %p109 = scmp.ne.s32.totalorder %s100, %s101
      %p110 = scmp.eq.s32.totalorder %s22, 0
      %p111 = por %p109, %p110
      %p112 = scmp.ne.s32.totalorder %s100, %s101
      %p113 = scmp.eq.s32.totalorder %s23, 1
      %p114 = por %p112, %p113
      %p116 = scmp.ne.s32.totalorder %s101, %s115
      %p117 = scmp.eq.s32.totalorder %s23, 0
      %p118 = por %p116, %p117
      %s120 = sadd.s32 %s119, 1
      %p123 = scmp.eq.s32.totalorder %s17, 1
      %p124 = scmp.ne.s32.totalorder %s119, %s121
      %p125 = scmp.eq.s32.totalorder %s17, 0
      %p126 = por %p124, %p125
      %p127 = scmp.ne.s32.totalorder %s119, %s121
      %p128 = scmp.eq.s32.totalorder %s22, 1
      %p129 = por %p127, %p128
      %p130 = scmp.ne.s32.totalorder %s121, %s122
      %p131 = scmp.eq.s32.totalorder %s22, 0
      %p132 = por %p130, %p131
      %p133 = scmp.ne.s32.totalorder %s121, %s122
      %p134 = scmp.eq.s32.totalorder %s23, 1
      %p135 = por %p133, %p134
      %p137 = scmp.ne.s32.totalorder %s122, %s136
      %p138 = scmp.eq.s32.totalorder %s23, 0
      %p139 = por %p137, %p138
      %s140 = ssub.s32 %s17, %s24
      %p141 = scmp.eq.s32.totalorder %s140, 0
      %s143 = sadd.s32 %s142, 1
      %s144 = scalar_select %p141, %s142, %s143
      %p147 = pneg %p141
      %p148 = scmp.eq.s32.totalorder %s17, 1
      %p149 = por %p147, %p148
      %p150 = scmp.ne.s32.totalorder %s142, %s145
      %p151 = scmp.eq.s32.totalorder %s17, 0
      %p152 = por %p150, %p151
      %p153 = scmp.ne.s32.totalorder %s142, %s145
      %p154 = scmp.eq.s32.totalorder %s22, 1
      %p155 = por %p153, %p154
      %p156 = scmp.ne.s32.totalorder %s145, %s146
      %p157 = scmp.eq.s32.totalorder %s22, 0
      %p158 = por %p156, %p157
      %p159 = scmp.ne.s32.totalorder %s145, %s146
      %p160 = scmp.eq.s32.totalorder %s23, 1
      %p161 = por %p159, %p160
      %p163 = scmp.ne.s32.totalorder %s146, %s162
      %p164 = scmp.eq.s32.totalorder %s23, 0
      %p165 = por %p163, %p164
      %s166 = ssub.s32 %s17, %s24
      %p167 = scmp.eq.s32.totalorder %s166, 0
      %s169 = sadd.s32 %s168, 1
      %s170 = scalar_select %p167, %s168, %s169
      %p173 = pneg %p167
      %p174 = scmp.eq.s32.totalorder %s17, 1
      %p175 = por %p173, %p174
      %p176 = scmp.ne.s32.totalorder %s168, %s171
      %p177 = scmp.eq.s32.totalorder %s17, 0
      %p178 = por %p176, %p177
      %p179 = scmp.ne.s32.totalorder %s168, %s171
      %p180 = scmp.eq.s32.totalorder %s22, 1
      %p181 = por %p179, %p180
      %p182 = scmp.ne.s32.totalorder %s171, %s172
      %p183 = scmp.eq.s32.totalorder %s22, 0
      %p184 = por %p182, %p183
      %p185 = scmp.ne.s32.totalorder %s171, %s172
      %p186 = scmp.eq.s32.totalorder %s23, 1
      %p187 = por %p185, %p186
      %p189 = scmp.ne.s32.totalorder %s172, %s188
      %p190 = scmp.eq.s32.totalorder %s23, 0
      %p191 = por %p189, %p190
      %p192 = scmp.le.s32.totalorder 1, %s17
      %p193 = scmp.lt.s32.totalorder %s17, 3
      %p194 = pnand %p192, %p193
      %p195 = pneg %p194
      // Predicated region
      $region9: #{forward.2} parent=5 // pred_check
        _
      $region10: #{forward.2} parent=5 // pred_check_branch
        %197 = sbr.rel (%p194) target = $region12
      $region11: #{forward.2} parent=5 // pred_region
        %s198 = ssub.s32 %s17, 1
        // Predicated region
        $region13: #{forward.2} parent=11 // pred_check
          %p199 = pneg %p90
        $region14: #{forward.2} parent=11 // pred_check_branch
          %201 = sbr.rel (%p199) target = $region16
        $region15: #{forward.2} parent=11 // pred_region
          _
        $region16: #{forward.2} parent=11 // pred_fallthru
          _
        // Predicated region
        $region17: #{forward.2} parent=11 // pred_check
          %p202 = pneg %p111
        $region18: #{forward.2} parent=11 // pred_check_branch
          %204 = sbr.rel (%p202) target = $region20
        $region19: #{forward.2} parent=11 // pred_region
          %206 = vsyncadd [#allocation3], 0
          %s207 = sshll.u32 %s3, 4
          %s208 = int_to_ptr.hbm [resolvable:$true] %s207
          %s209 = sshll.u32 [#allocation2], 4
          %s210 = int_to_ptr.vmem [resolvable:$true] %s209
          %215 = dma.hbm_to_vmem [thread:$0]  %s208, 3072, %s210, [#allocation3], 768, 768, 48
        $region20: #{forward.2} parent=11 // pred_fallthru
          _
        // Predicated region
        $region21: #{forward.2} parent=11 // pred_check
          %p216 = pneg %p132
        $region22: #{forward.2} parent=11 // pred_check_branch
          %218 = sbr.rel (%p216) target = $region24
        $region23: #{forward.2} parent=11 // pred_region
          _
        $region24: #{forward.2} parent=11 // pred_fallthru
          _
      $region12: #{forward.2} parent=5 // pred_fallthru
        _
      %p219 = scmp.lt.s32.totalorder %s17, 2
      // Predicated region
      $region25: #{forward.2} parent=5 // pred_check
        %p220 = pneg %p219
      $region26: #{forward.2} parent=5 // pred_check_branch
        %222 = sbr.rel (%p220) target = $region28
      $region27: #{forward.2} parent=5 // pred_region
        // Predicated region
        $region29: #{forward.2} parent=27 // pred_check
          %p223 = pneg %p37
        $region30: #{forward.2} parent=27 // pred_check_branch
          %225 = sbr.rel (%p223) target = $region32
        $region31: #{forward.2} parent=27 // pred_region
          %p226 = scmp.lt.s32.totalorder %s17, 1
          %s227 = scalar_select %p226, %s17, 1
          %s228 = smul.addr %s227, 8
          %s229 = smul.addr %s228, 8
          %s230 = scalar_lea.vmem %s0, %s229
        $region32: #{forward.2} parent=27 // pred_fallthru
          _
        // Predicated region
        $region33: #{forward.2} parent=27 // pred_check
          %p231 = pneg %p63
        $region34: #{forward.2} parent=27 // pred_check_branch
          %233 = sbr.rel (%p231) target = $region36
        $region35: #{forward.2} parent=27 // pred_region
          %p234 = scmp.lt.s32.totalorder %s17, 1
          %s235 = scalar_select %p234, %s17, 1
          %s236 = smul.addr %s235, 4
          %s237 = scalar_lea.vmem %s1, %s236
        $region36: #{forward.2} parent=27 // pred_fallthru
          _
      $region28: #{forward.2} parent=5 // pred_fallthru
        _
      %p238 = scmp.le.s32.totalorder 1, %s17
      %p239 = scmp.lt.s32.totalorder %s17, 3
      %p240 = pnand %p238, %p239
      %p241 = pneg %p240
      // Predicated region
      $region37: #{forward.2} parent=5 // pred_check
        _
      $region38: #{forward.2} parent=5 // pred_check_branch
        %243 = sbr.rel (%p240) target = $region40
      $region39: #{forward.2} parent=5 // pred_region
        %s244 = ssub.s32 %s17, 1
        // Predicated region
        $region41: #{forward.2} parent=39 // pred_check
          %p245 = pneg %p111
        $region42: #{forward.2} parent=39 // pred_check_branch
          %247 = sbr.rel (%p245) target = $region44
        $region43: #{forward.2} parent=39 // pred_region
          %249 = dma.done [#allocation3], 3072
        $region44: #{forward.2} parent=39 // pred_fallthru
          _
        %p250 = scmp.lt.s32.totalorder %s22, 1
        %s251 = scalar_select %p250, %s22, 1
        %s252 = smul.addr %s251, 8
        %s253 = smul.addr %s252, 8
        %s254 = scalar_lea.vmem %s0, %s253
        %p255 = pneg %p43
        %p256 = pneg %p40
        %p257 = scmp.lt.s32.totalorder %s22, 1
        %s258 = scalar_select %p257, %s22, 1
        %s259 = smul.addr %s258, 4
        %s260 = scalar_lea.vmem %s1, %s259
        %p261 = pneg %p69
        %p262 = pneg %p66
        %p263 = pneg %p90
        %p264 = pneg %p87
        %p265 = pneg %p111
        %p266 = pneg %p108
        %p267 = pneg %p132
        %p268 = pneg %p129
        %p269 = pneg %p158
        %p270 = pneg %p155
        %s271 = sand.u32 %s145, 1
        %s272 = scalar_lea.sflag [#allocation4], %s271
        %s273 = sand.u32 %s145, 1
        %s274 = smul.addr %s273, 4
        %s275 = scalar_lea.vmem [#allocation5], %s274
        %p276 = pneg %p184
        %p277 = pneg %p181
        %p278 = scmp.lt.s32.totalorder %s22, 1
        %s279 = scalar_select %p278, %s22, 1
        %s280 = smul.addr %s279, 3
        %s281 = smul.addr %s280, 4
        %s282 = scalar_lea.vmem %s6, %s281
        %p283 = scmp.lt.s32.totalorder %s22, 1
        %s284 = scalar_select %p283, %s22, 1
        %s285 = smul.addr %s284, 8
        %s286 = smul.addr %s285, 8
        %s287 = scalar_lea.vmem %s0, %s286
        %p288 = scmp.lt.s32.totalorder %s22, 1
        %s289 = scalar_select %p288, %s22, 1
        %s290 = smul.addr %s289, 4
        %s291 = scalar_lea.vmem %s1, %s290
        %p292 = scmp.lt.s32.totalorder %s22, 1
        %s293 = scalar_select %p292, %s22, 1
        %s294 = smul.addr %s293, 3
        %s295 = smul.addr %s294, 4
        %s296 = scalar_lea.vmem %s6, %s295
        %v297 = vld [vmem:[%s287] sm:$0xff]
        %v298 = vld [vmem:[%s287 + $0x8] sm:$0xff]
        %v299 = vld [vmem:[%s287 + $0x10] sm:$0xff]
        %v300 = vld [vmem:[%s287 + $0x18] sm:$0xff]
        %v301 = vld [vmem:[%s287 + $0x20] sm:$0xff]
        %v302 = vld [vmem:[%s287 + $0x28] sm:$0xff]
        %v303 = vld [vmem:[%s287 + $0x30] sm:$0xff]
        %v304 = vld [vmem:[%s287 + $0x38] sm:$0xff]
        %v305 = vld [vmem:[%s2] sm:$0x7]
        %v306 = vld [vmem:[%s4] sm:$0x1]
        %v308 = vperm.slane %v306, 0
        %vm310 = vcmask 23552
        %v312 = vsel %vm310, %v297, 0
        %v315 = vsel %vm310, %v298, 0
        %v318 = vsel %vm310, %v299, 0
        %v321 = vsel %vm310, %v300, 0
        %v324 = vsel %vm310, %v301, 0
        %v327 = vsel %vm310, %v302, 0
        %v330 = vsel %vm310, %v303, 0
        %v333 = vsel %vm310, %v304, 0
        %vm335 = vcmask 1042432
        %v337 = vsel %vm335, %v305, 0
        %339 = vmatpush.msra.mxu0 0.0
        %340 = vmatpush.msra.mxu0 0.0
        %341 = vmatpush.msra.mxu0 0.0
        %342 = vmatpush.msra.mxu0 0.0
        %343 = vmatpush.msra.mxu0 0.0
        %344 = vmatpush.msra.mxu0 0.0
        %345 = vmatpush.msra.mxu0 0.0
        %346 = vmatpush.msra.mxu0 0.0
        %347 = vmatpush.msra.mxu0 0.0
        %348 = vmatpush.msra.mxu0 0.0
        %349 = vmatpush.msra.mxu0 0.0
        %350 = vmatpush.msra.mxu0 0.0
        %351 = vmatpush.msra.mxu0 0.0
        %352 = vmatpush.msra.mxu0 0.0
        %353 = vmatpush.msra.mxu0 0.0
        %354 = vmatpush.msra.mxu0 %v337
        %355 = vmatmul.f32.gmra.mxu0 %v312
        %v356 = vpop.f32.mrf.mxu0
        %v357 = vadd.f32 %v308, %v356
        %358 = vmatmul.f32.gmra.mxu0 %v315
        %v359 = vpop.f32.mrf.mxu0
        %v360 = vadd.f32 %v308, %v359
        %361 = vmatmul.f32.gmra.mxu0 %v318
        %v362 = vpop.f32.mrf.mxu0
        %v363 = vadd.f32 %v308, %v362
        %364 = vmatmul.f32.gmra.mxu0 %v321
        %v365 = vpop.f32.mrf.mxu0
        %v366 = vadd.f32 %v308, %v365
        %367 = vmatmul.f32.gmra.mxu0 %v324
        %v368 = vpop.f32.mrf.mxu0
        %v369 = vadd.f32 %v308, %v368
        %370 = vmatmul.f32.gmra.mxu0 %v327
        %v371 = vpop.f32.mrf.mxu0
        %v372 = vadd.f32 %v308, %v371
        %373 = vmatmul.f32.gmra.mxu0 %v330
        %v374 = vpop.f32.mrf.mxu0
        %v375 = vadd.f32 %v308, %v374
        %376 = vmatmul.f32.gmra.mxu0 %v333
        %v377 = vpop.f32.mrf.mxu0
        %v378 = vadd.f32 %v308, %v377
        %379 = vdwg.mxu0
        %v380 = vmax.f32 %v357, 0.0
        %v381 = vmax.f32 %v360, 0.0
        %v382 = vmax.f32 %v363, 0.0
        %v383 = vmax.f32 %v366, 0.0
        %v384 = vmax.f32 %v369, 0.0
        %v385 = vmax.f32 %v372, 0.0
        %v386 = vmax.f32 %v375, 0.0
        %v387 = vmax.f32 %v378, 0.0
        %v388 = vld [vmem:[#allocation2] sm:$0xff]
        %v389 = vld [vmem:[#allocation2 + $0x30] sm:$0xff]
        %v390 = vld [vmem:[#allocation2 + $0x60] sm:$0xff]
        %v391 = vld [vmem:[#allocation2 + $0x90] sm:$0xff]
        %392 = vrot.lane.b32.xlu0 %v308, 96
        %v393 = vpop.permute.xlu0 %392
        %vm395 = vcmask 261120
        %v397 = vsel %vm395, %v380, 0
        %v400 = vsel %vm395, %v381, 0
        %v403 = vsel %vm395, %v382, 0
        %v406 = vsel %vm395, %v383, 0
        %v409 = vsel %vm395, %v384, 0
        %v412 = vsel %vm395, %v385, 0
        %v415 = vsel %vm395, %v386, 0
        %v418 = vsel %vm395, %v387, 0
        %420 = vmatpush.msra.mxu0 0.0
        %421 = vmatpush.msra.mxu0 0.0
        %422 = vmatpush.msra.mxu0 0.0
        %423 = vmatpush.msra.mxu0 0.0
        %424 = vmatpush.msra.mxu0 0.0
        %425 = vmatpush.msra.mxu0 0.0
        %426 = vmatpush.msra.mxu0 0.0
        %427 = vmatpush.msra.mxu0 0.0
        %428 = vmatpush.msra.mxu0 0.0
        %429 = vmatpush.msra.mxu0 0.0
        %430 = vmatpush.msra.mxu0 0.0
        %431 = vmatpush.msra.mxu0 0.0
        %432 = vmatpush.msra.mxu0 %v391
        %433 = vmatpush.msra.mxu0 %v390
        %434 = vmatpush.msra.mxu0 %v389
        %435 = vmatpush.msra.mxu0 %v388
        %436 = vmatmul.f32.gmra.mxu0 %v397
        %v437 = vpop.f32.mrf.mxu0
        %v438 = vadd.f32 %v393, %v437
        %439 = vmatmul.f32.gmra.mxu0 %v400
        %v440 = vpop.f32.mrf.mxu0
        %v441 = vadd.f32 %v393, %v440
        %442 = vmatmul.f32.gmra.mxu0 %v403
        %v443 = vpop.f32.mrf.mxu0
        %v444 = vadd.f32 %v393, %v443
        %445 = vmatmul.f32.gmra.mxu0 %v406
        %v446 = vpop.f32.mrf.mxu0
        %v447 = vadd.f32 %v393, %v446
        %448 = vmatmul.f32.gmra.mxu0 %v409
        %v449 = vpop.f32.mrf.mxu0
        %v450 = vadd.f32 %v393, %v449
        %451 = vmatmul.f32.gmra.mxu0 %v412
        %v452 = vpop.f32.mrf.mxu0
        %v453 = vadd.f32 %v393, %v452
        %454 = vmatmul.f32.gmra.mxu0 %v415
        %v455 = vpop.f32.mrf.mxu0
        %v456 = vadd.f32 %v393, %v455
        %457 = vmatmul.f32.gmra.mxu0 %v418
        %v458 = vpop.f32.mrf.mxu0
        %v459 = vadd.f32 %v393, %v458
        %460 = vdwg.mxu0
        %v461 = vld [vmem:[%s4 + $0x6] sm:$0x1]
        %v462 = vsel %vm395, %v438, 0.0
        %463 = vadd.xlane.f32.xlu0 %v462
        %v464 = vpop.xlane.xlu0 %463
        %v465 = vsel %vm395, %v441, 0.0
        %466 = vadd.xlane.f32.xlu0 %v465
        %v467 = vpop.xlane.xlu0 %466
        %v468 = vsel %vm395, %v444, 0.0
        %469 = vadd.xlane.f32.xlu0 %v468
        %v470 = vpop.xlane.xlu0 %469
        %v471 = vsel %vm395, %v447, 0.0
        %472 = vadd.xlane.f32.xlu0 %v471
        %v473 = vpop.xlane.xlu0 %472
        %v474 = vsel %vm395, %v450, 0.0
        %475 = vadd.xlane.f32.xlu0 %v474
        %v476 = vpop.xlane.xlu0 %475
        %v477 = vsel %vm395, %v453, 0.0
        %478 = vadd.xlane.f32.xlu0 %v477
        %v479 = vpop.xlane.xlu0 %478
        %v480 = vsel %vm395, %v456, 0.0
        %481 = vadd.xlane.f32.xlu0 %v480
        %v482 = vpop.xlane.xlu0 %481
        %v483 = vsel %vm395, %v459, 0.0
        %484 = vadd.xlane.f32.xlu0 %v483
        %v485 = vpop.xlane.xlu0 %484
        %v486 = vrcp.pop 32.0
        %v487 = vmul.f32 32.0, %v486
        %v488 = vsub.f32 1.0, %v487
        %v489 = vmul.f32 %v486, %v488
        %v490 = vadd.f32 %v486, %v489
        %vm491 = vweird.f32 %v486
        %v492 = vsel %vm491, %v486, %v490
        %v493 = vmul.f32 %v464, %v492
        %v494 = vmul.f32 %v467, %v492
        %v495 = vmul.f32 %v470, %v492
        %v496 = vmul.f32 %v473, %v492
        %v497 = vmul.f32 %v476, %v492
        %v498 = vmul.f32 %v479, %v492
        %v499 = vmul.f32 %v482, %v492
        %v500 = vmul.f32 %v485, %v492
        %v501 = vsub.f32 %v438, %v493
        %v502 = vsub.f32 %v441, %v494
        %v503 = vsub.f32 %v444, %v495
        %v504 = vsub.f32 %v447, %v496
        %v505 = vsub.f32 %v450, %v497
        %v506 = vsub.f32 %v453, %v498
        %v507 = vsub.f32 %v456, %v499
        %v508 = vsub.f32 %v459, %v500
        %v509 = vmul.f32 %v501, %v501
        %v510 = vmul.f32 %v502, %v502
        %v511 = vmul.f32 %v503, %v503
        %v512 = vmul.f32 %v504, %v504
        %v513 = vmul.f32 %v505, %v505
        %v514 = vmul.f32 %v506, %v506
        %v515 = vmul.f32 %v507, %v507
        %v516 = vmul.f32 %v508, %v508
        %v517 = vsel %vm395, %v509, 0.0
        %518 = vadd.xlane.f32.xlu0 %v517
        %v519 = vpop.xlane.xlu0 %518
        %v520 = vsel %vm395, %v510, 0.0
        %521 = vadd.xlane.f32.xlu0 %v520
        %v522 = vpop.xlane.xlu0 %521
        %v523 = vsel %vm395, %v511, 0.0
        %524 = vadd.xlane.f32.xlu0 %v523
        %v525 = vpop.xlane.xlu0 %524
        %v526 = vsel %vm395, %v512, 0.0
        %527 = vadd.xlane.f32.xlu0 %v526
        %v528 = vpop.xlane.xlu0 %527
        %v529 = vsel %vm395, %v513, 0.0
        %530 = vadd.xlane.f32.xlu0 %v529
        %v531 = vpop.xlane.xlu0 %530
        %v532 = vsel %vm395, %v514, 0.0
        %533 = vadd.xlane.f32.xlu0 %v532
        %v534 = vpop.xlane.xlu0 %533
        %v535 = vsel %vm395, %v515, 0.0
        %536 = vadd.xlane.f32.xlu0 %v535
        %v537 = vpop.xlane.xlu0 %536
        %v538 = vsel %vm395, %v516, 0.0
        %539 = vadd.xlane.f32.xlu0 %v538
        %v540 = vpop.xlane.xlu0 %539
        %v541 = vmul.f32 %v519, %v492
        %v542 = vmul.f32 %v522, %v492
        %v543 = vmul.f32 %v525, %v492
        %v544 = vmul.f32 %v528, %v492
        %v545 = vmul.f32 %v531, %v492
        %v546 = vmul.f32 %v534, %v492
        %v547 = vmul.f32 %v537, %v492
        %v548 = vmul.f32 %v540, %v492
        %v549 = vadd.f32 %v541, 1e-05
        %v550 = vadd.f32 %v542, 1e-05
        %v551 = vadd.f32 %v543, 1e-05
        %v552 = vadd.f32 %v544, 1e-05
        %v553 = vadd.f32 %v545, 1e-05
        %v554 = vadd.f32 %v546, 1e-05
        %v555 = vadd.f32 %v547, 1e-05
        %v556 = vadd.f32 %v548, 1e-05
        %v557 = vrsqrt.pop %v549
        %v558 = vmul.f32 %v557, %v549
        %v559 = vmul.f32 %v558, %v557
        %v560 = vmul.f32 0.5, %v559
        %v561 = vsub.f32 1.5, %v560
        %v562 = vmul.f32 %v557, %v561
        %vm563 = vweird.f32 %v549
        %vm564 = vweird.f32 %v557
        %vm565 = vmor %vm563, %vm564
        %v566 = vsel %vm565, %v557, %v562
        %v567 = vrsqrt.pop %v550
        %v568 = vmul.f32 %v567, %v550
        %v569 = vmul.f32 %v568, %v567
        %v570 = vmul.f32 0.5, %v569
        %v571 = vsub.f32 1.5, %v570
        %v572 = vmul.f32 %v567, %v571
        %vm573 = vweird.f32 %v550
        %vm574 = vweird.f32 %v567
        %vm575 = vmor %vm573, %vm574
        %v576 = vsel %vm575, %v567, %v572
        %v577 = vrsqrt.pop %v551
        %v578 = vmul.f32 %v577, %v551
        %v579 = vmul.f32 %v578, %v577
        %v580 = vmul.f32 0.5, %v579
        %v581 = vsub.f32 1.5, %v580
        %v582 = vmul.f32 %v577, %v581
        %vm583 = vweird.f32 %v551
        %vm584 = vweird.f32 %v577
        %vm585 = vmor %vm583, %vm584
        %v586 = vsel %vm585, %v577, %v582
        %v587 = vrsqrt.pop %v552
        %v588 = vmul.f32 %v587, %v552
        %v589 = vmul.f32 %v588, %v587
        %v590 = vmul.f32 0.5, %v589
        %v591 = vsub.f32 1.5, %v590
        %v592 = vmul.f32 %v587, %v591
        %vm593 = vweird.f32 %v552
        %vm594 = vweird.f32 %v587
        %vm595 = vmor %vm593, %vm594
        %v596 = vsel %vm595, %v587, %v592
        %v597 = vrsqrt.pop %v553
        %v598 = vmul.f32 %v597, %v553
        %v599 = vmul.f32 %v598, %v597
        %v600 = vmul.f32 0.5, %v599
        %v601 = vsub.f32 1.5, %v600
        %v602 = vmul.f32 %v597, %v601
        %vm603 = vweird.f32 %v553
        %vm604 = vweird.f32 %v597
        %vm605 = vmor %vm603, %vm604
        %v606 = vsel %vm605, %v597, %v602
        %v607 = vrsqrt.pop %v554
        %v608 = vmul.f32 %v607, %v554
        %v609 = vmul.f32 %v608, %v607
        %v610 = vmul.f32 0.5, %v609
        %v611 = vsub.f32 1.5, %v610
        %v612 = vmul.f32 %v607, %v611
        %vm613 = vweird.f32 %v554
        %vm614 = vweird.f32 %v607
        %vm615 = vmor %vm613, %vm614
        %v616 = vsel %vm615, %v607, %v612
        %v617 = vrsqrt.pop %v555
        %v618 = vmul.f32 %v617, %v555
        %v619 = vmul.f32 %v618, %v617
        %v620 = vmul.f32 0.5, %v619
        %v621 = vsub.f32 1.5, %v620
        %v622 = vmul.f32 %v617, %v621
        %vm623 = vweird.f32 %v555
        %vm624 = vweird.f32 %v617
        %vm625 = vmor %vm623, %vm624
        %v626 = vsel %vm625, %v617, %v622
        %v627 = vrsqrt.pop %v556
        %v628 = vmul.f32 %v627, %v556
        %v629 = vmul.f32 %v628, %v627
        %v630 = vmul.f32 0.5, %v629
        %v631 = vsub.f32 1.5, %v630
        %v632 = vmul.f32 %v627, %v631
        %vm633 = vweird.f32 %v556
        %vm634 = vweird.f32 %v627
        %vm635 = vmor %vm633, %vm634
        %v636 = vsel %vm635, %v627, %v632
        %v637 = vmul.f32 %v501, %v566
        %v638 = vmul.f32 %v502, %v576
        %v639 = vmul.f32 %v503, %v586
        %v640 = vmul.f32 %v504, %v596
        %v641 = vmul.f32 %v505, %v606
        %v642 = vmul.f32 %v506, %v616
        %v643 = vmul.f32 %v507, %v626
        %v644 = vmul.f32 %v508, %v636
        %v646 = vperm.slane %v461, 0
        %v648 = vmul.f32 %v637, %v646
        %v649 = vmul.f32 %v638, %v646
        %v650 = vmul.f32 %v639, %v646
        %v651 = vmul.f32 %v640, %v646
        %v652 = vmul.f32 %v641, %v646
        %v653 = vmul.f32 %v642, %v646
        %v654 = vmul.f32 %v643, %v646
        %v655 = vmul.f32 %v644, %v646
        %656 = vrot.lane.b32.xlu0 %v646, 96
        %v657 = vpop.permute.xlu0 %656
        %v659 = vadd.f32 %v648, %v657
        %v660 = vadd.f32 %v649, %v657
        %v661 = vadd.f32 %v650, %v657
        %v662 = vadd.f32 %v651, %v657
        %v663 = vadd.f32 %v652, %v657
        %v664 = vadd.f32 %v653, %v657
        %v665 = vadd.f32 %v654, %v657
        %v666 = vadd.f32 %v655, %v657
        %671 = vrot.lane.b32.xlu0 %v388, 96
        %v672 = vpop.permute.xlu0 %671
        %673 = vrot.lane.b32.xlu0 %v389, 96
        %v674 = vpop.permute.xlu0 %673
        %675 = vrot.lane.b32.xlu0 %v390, 96
        %v676 = vpop.permute.xlu0 %675
        %677 = vrot.lane.b32.xlu0 %v391, 96
        %v678 = vpop.permute.xlu0 %677
        %683 = vrot.lane.b32.xlu0 %v308, 64
        %v684 = vpop.permute.xlu0 %683
        %v687 = vsel %vm395, %v659, 0
        %v690 = vsel %vm395, %v660, 0
        %v693 = vsel %vm395, %v661, 0
        %v696 = vsel %vm395, %v662, 0
        %v699 = vsel %vm395, %v663, 0
        %v702 = vsel %vm395, %v664, 0
        %v705 = vsel %vm395, %v665, 0
        %v708 = vsel %vm395, %v666, 0
        %710 = vmatpush.msra.mxu0 0.0
        %711 = vmatpush.msra.mxu0 0.0
        %712 = vmatpush.msra.mxu0 0.0
        %713 = vmatpush.msra.mxu0 0.0
        %714 = vmatpush.msra.mxu0 0.0
        %715 = vmatpush.msra.mxu0 0.0
        %716 = vmatpush.msra.mxu0 0.0
        %717 = vmatpush.msra.mxu0 0.0
        %718 = vmatpush.msra.mxu0 0.0
        %719 = vmatpush.msra.mxu0 0.0
        %720 = vmatpush.msra.mxu0 0.0
        %721 = vmatpush.msra.mxu0 0.0
        %722 = vmatpush.msra.mxu0 %v678
        %723 = vmatpush.msra.mxu0 %v676
        %724 = vmatpush.msra.mxu0 %v674
        %725 = vmatpush.msra.mxu0 %v672
        %726 = vmatmul.f32.gmra.mxu0 %v687
        %v727 = vpop.f32.mrf.mxu0
        %v728 = vadd.f32 %v684, %v727
        %729 = vmatmul.f32.gmra.mxu0 %v690
        %v730 = vpop.f32.mrf.mxu0
        %v731 = vadd.f32 %v684, %v730
        %732 = vmatmul.f32.gmra.mxu0 %v693
        %v733 = vpop.f32.mrf.mxu0
        %v734 = vadd.f32 %v684, %v733
        %735 = vmatmul.f32.gmra.mxu0 %v696
        %v736 = vpop.f32.mrf.mxu0
        %v737 = vadd.f32 %v684, %v736
        %738 = vmatmul.f32.gmra.mxu0 %v699
        %v739 = vpop.f32.mrf.mxu0
        %v740 = vadd.f32 %v684, %v739
        %741 = vmatmul.f32.gmra.mxu0 %v702
        %v742 = vpop.f32.mrf.mxu0
        %v743 = vadd.f32 %v684, %v742
        %744 = vmatmul.f32.gmra.mxu0 %v705
        %v745 = vpop.f32.mrf.mxu0
        %v746 = vadd.f32 %v684, %v745
        %747 = vmatmul.f32.gmra.mxu0 %v708
        %v748 = vpop.f32.mrf.mxu0
        %v749 = vadd.f32 %v684, %v748
        %750 = vdwg.mxu0
        %v751 = vld [vmem:[%s291] sm:$0xf]
        %vm752 = vcmask 257024
        %v753 = vsel %vm752, %v751, 0.0
        %754 = vadd.xlane.f32.xlu0 %v753
        %v755 = vpop.xlane.xlu0 %754
        %v756 = vmul.f32 %v755, %v492
        %v757 = vsub.f32 %v751, %v756
        %v758 = vmul.f32 %v757, %v757
        %v759 = vsel %vm752, %v758, 0.0
        %760 = vadd.xlane.f32.xlu0 %v759
        %v761 = vpop.xlane.xlu0 %760
        %v762 = vmul.f32 %v761, %v492
        %v763 = vadd.f32 %v762, 1e-05
        %v764 = vrsqrt.pop %v763
        %v765 = vmul.f32 %v764, %v763
        %v766 = vmul.f32 %v765, %v764
        %v767 = vmul.f32 0.5, %v766
        %v768 = vsub.f32 1.5, %v767
        %v769 = vmul.f32 %v764, %v768
        %vm770 = vweird.f32 %v763
        %vm771 = vweird.f32 %v764
        %vm772 = vmor %vm770, %vm771
        %v773 = vsel %vm772, %v764, %v769
        %v774 = vmul.f32 %v757, %v773
        %775 = vrot.lane.b32.xlu0 %v646, 64
        %v776 = vpop.permute.xlu0 %775
        %v778 = vmul.f32 %v774, %v776
        %779 = vrot.lane.b32.xlu0 %v646, 32
        %v780 = vpop.permute.xlu0 %779
        %v782 = vadd.f32 %v778, %v780
        %v783 = vld [vmem:[%s4 + $0x1] sm:$0x1]
        %v785 = vperm.slane %v783, 0
        %787 = vrot.lane.b32.xlu0 %v388, 32
        %v788 = vpop.permute.xlu0 %787
        %789 = vrot.lane.b32.xlu0 %v389, 32
        %v790 = vpop.permute.xlu0 %789
        %791 = vrot.lane.b32.xlu0 %v390, 32
        %v792 = vpop.permute.xlu0 %791
        %793 = vrot.lane.b32.xlu0 %v391, 32
        %v794 = vpop.permute.xlu0 %793
        %v800 = vsel %vm395, %v782, 0
        %802 = vmatpush.msra.mxu0 0.0
        %803 = vmatpush.msra.mxu0 0.0
        %804 = vmatpush.msra.mxu0 0.0
        %805 = vmatpush.msra.mxu0 0.0
        %806 = vmatpush.msra.mxu0 0.0
        %807 = vmatpush.msra.mxu0 0.0
        %808 = vmatpush.msra.mxu0 0.0
        %809 = vmatpush.msra.mxu0 0.0
        %810 = vmatpush.msra.mxu0 0.0
        %811 = vmatpush.msra.mxu0 0.0
        %812 = vmatpush.msra.mxu0 0.0
        %813 = vmatpush.msra.mxu0 0.0
        %814 = vmatpush.msra.mxu0 %v794
        %815 = vmatpush.msra.mxu0 %v792
        %816 = vmatpush.msra.mxu0 %v790
        %817 = vmatpush.msra.mxu0 %v788
        %818 = vmatmul.f32.gmra.mxu0 %v800
        %v819 = vpop.f32.mrf.mxu0
        %v820 = vadd.f32 %v785, %v819
        %821 = vdwg.mxu0
        %v823 = vsel %vm395, %v820, 0
        %v826 = vsel %vm395, %v728, 0
        %v829 = vsel %vm395, %v731, 0
        %v832 = vsel %vm395, %v734, 0
        %v835 = vsel %vm395, %v737, 0
        %v838 = vsel %vm395, %v740, 0
        %v841 = vsel %vm395, %v743, 0
        %v844 = vsel %vm395, %v746, 0
        %v847 = vsel %vm395, %v749, 0
        %849 = vmatpush.xpose.msra.mxu0 0.0
        %850 = vmatpush.xpose.msra.mxu0 0.0
        %851 = vmatpush.xpose.msra.mxu0 0.0
        %852 = vmatpush.xpose.msra.mxu0 0.0
        %853 = vmatpush.xpose.msra.mxu0 0.0
        %854 = vmatpush.xpose.msra.mxu0 0.0
        %855 = vmatpush.xpose.msra.mxu0 0.0
        %856 = vmatpush.xpose.msra.mxu0 0.0
        %857 = vmatpush.xpose.msra.mxu0 %v847
        %858 = vmatpush.xpose.msra.mxu0 %v844
        %859 = vmatpush.xpose.msra.mxu0 %v841
        %860 = vmatpush.xpose.msra.mxu0 %v838
        %861 = vmatpush.xpose.msra.mxu0 %v835
        %862 = vmatpush.xpose.msra.mxu0 %v832
        %863 = vmatpush.xpose.msra.mxu0 %v829
        %864 = vmatpush.xpose.msra.mxu0 %v826
        %865 = vmatmul.f32.gmra.mxu0 %v823
        %v866 = vpop.f32.mrf.mxu0
        %v867 = vadd.f32 0.0, %v866
        %868 = vdwg.mxu0
        %vm869 = vcmask 519168
        %v870 = vsel %vm869, %v867, -inf
        %v871 = vrot.slane %v870, 4
        %v872 = vmax.f32 %v870, %v871
        %v873 = vrot.slane %v872, 2
        %v874 = vmax.f32 %v872, %v873
        %v875 = vrot.slane %v874, 1
        %v876 = vmax.f32 %v874, %v875
        %v877 = vsub.f32 %v867, %v876
        %v878 = vmul.f32 %v877, 1.442695
        %v879 = vpow.pop %v878
        %v880 = vsel %vm869, %v879, 0.0
        %v881 = vrot.slane %v880, 4
        %v882 = vadd.f32 %v880, %v881
        %v883 = vrot.slane %v882, 2
        %v884 = vadd.f32 %v882, %v883
        %v885 = vrot.slane %v884, 1
        %v886 = vadd.f32 %v884, %v885
        %v887 = vrcp.pop %v886
        %v888 = vmul.f32 %v879, %v887
        %v889 = vadd.f32 %v888, 1e-08
        %v890 = vsel %vm869, %v889, 0.0
        %891 = vadd.xlane.f32.xlu0 %v890
        %v892 = vpop.xlane.xlu0 %891
        %v893 = vrcp.pop %v892
        %v894 = vmul.f32 %v889, %v893
        %895 = vrot.lane.b32.xlu0 %v728, 96
        %v896 = vpop.permute.xlu0 %895
        %897 = vrot.lane.b32.xlu0 %v731, 96
        %v898 = vpop.permute.xlu0 %897
        %899 = vrot.lane.b32.xlu0 %v734, 96
        %v900 = vpop.permute.xlu0 %899
        %901 = vrot.lane.b32.xlu0 %v737, 96
        %v902 = vpop.permute.xlu0 %901
        %903 = vrot.lane.b32.xlu0 %v740, 96
        %v904 = vpop.permute.xlu0 %903
        %905 = vrot.lane.b32.xlu0 %v743, 96
        %v906 = vpop.permute.xlu0 %905
        %907 = vrot.lane.b32.xlu0 %v746, 96
        %v908 = vpop.permute.xlu0 %907
        %909 = vrot.lane.b32.xlu0 %v749, 96
        %v910 = vpop.permute.xlu0 %909
        %vm919 = vcmask 523264
        %v921 = vsel %vm919, %v894, 0
        %923 = vmatpush.msra.mxu0 0.0
        %924 = vmatpush.msra.mxu0 0.0
        %925 = vmatpush.msra.mxu0 0.0
        %926 = vmatpush.msra.mxu0 0.0
        %927 = vmatpush.msra.mxu0 0.0
        %928 = vmatpush.msra.mxu0 0.0
        %929 = vmatpush.msra.mxu0 0.0
        %930 = vmatpush.msra.mxu0 0.0
        %931 = vmatpush.msra.mxu0 %v910
        %932 = vmatpush.msra.mxu0 %v908
        %933 = vmatpush.msra.mxu0 %v906
        %934 = vmatpush.msra.mxu0 %v904
        %935 = vmatpush.msra.mxu0 %v902
        %936 = vmatpush.msra.mxu0 %v900
        %937 = vmatpush.msra.mxu0 %v898
        %938 = vmatpush.msra.mxu0 %v896
        %939 = vmatmul.f32.gmra.mxu0 %v921
        %v940 = vpop.f32.mrf.mxu0
        %v941 = vadd.f32 0.0, %v940
        %942 = vdwg.mxu0
        %v943 = vld [vmem:[#allocation2 + $0x8] sm:$0xff]
        %v944 = vld [vmem:[#allocation2 + $0x38] sm:$0xff]
        %v945 = vld [vmem:[#allocation2 + $0x68] sm:$0xff]
        %v946 = vld [vmem:[#allocation2 + $0x98] sm:$0xff]
        %947 = vrot.lane.b32.xlu0 %v785, 96
        %v948 = vpop.permute.xlu0 %947
        %v951 = vsel %vm395, %v941, 0
        %953 = vmatpush.msra.mxu0 0.0
        %954 = vmatpush.msra.mxu0 0.0
        %955 = vmatpush.msra.mxu0 0.0
        %956 = vmatpush.msra.mxu0 0.0
        %957 = vmatpush.msra.mxu0 0.0
        %958 = vmatpush.msra.mxu0 0.0
        %959 = vmatpush.msra.mxu0 0.0
        %960 = vmatpush.msra.mxu0 0.0
        %961 = vmatpush.msra.mxu0 0.0
        %962 = vmatpush.msra.mxu0 0.0
        %963 = vmatpush.msra.mxu0 0.0
        %964 = vmatpush.msra.mxu0 0.0
        %965 = vmatpush.msra.mxu0 %v946
        %966 = vmatpush.msra.mxu0 %v945
        %967 = vmatpush.msra.mxu0 %v944
        %968 = vmatpush.msra.mxu0 %v943
        %969 = vmatmul.f32.gmra.mxu0 %v951
        %v970 = vpop.f32.mrf.mxu0
        %v971 = vadd.f32 %v948, %v970
        %972 = vdwg.mxu0
        %v973 = vld [vmem:[#allocation2 + $0x8] sm:$0xff]
        %v974 = vld [vmem:[#allocation2 + $0x10] sm:$0xff]
        %v975 = vld [vmem:[#allocation2 + $0x38] sm:$0xff]
        %v976 = vld [vmem:[#allocation2 + $0x40] sm:$0xff]
        %v977 = vld [vmem:[#allocation2 + $0x68] sm:$0xff]
        %v978 = vld [vmem:[#allocation2 + $0x70] sm:$0xff]
        %v979 = vld [vmem:[#allocation2 + $0x98] sm:$0xff]
        %v980 = vld [vmem:[#allocation2 + $0xa0] sm:$0xff]
        %v981 = vld [vmem:[%s4 + $0x2] sm:$0x1]
        %v983 = vperm.slane %v981, 0
        %993 = vrot.lane.b32.xlu0 %v973, 32
        %v994 = vpop.permute.xlu0 %993
        %995 = vrot.lane.b32.xlu0 %v974, 32
        %v996 = vpop.permute.xlu0 %995
        %997 = vrot.lane.b32.xlu0 %v975, 32
        %v998 = vpop.permute.xlu0 %997
        %999 = vrot.lane.b32.xlu0 %v976, 32
        %v1000 = vpop.permute.xlu0 %999
        %1001 = vrot.lane.b32.xlu0 %v977, 32
        %v1002 = vpop.permute.xlu0 %1001
        %1003 = vrot.lane.b32.xlu0 %v978, 32
        %v1004 = vpop.permute.xlu0 %1003
        %1005 = vrot.lane.b32.xlu0 %v979, 32
        %v1006 = vpop.permute.xlu0 %1005
        %1007 = vrot.lane.b32.xlu0 %v980, 32
        %v1008 = vpop.permute.xlu0 %1007
        %v1009 = vsel %vm395, %v994, %v996
        %v1010 = vsel %vm395, %v998, %v1000
        %v1011 = vsel %vm395, %v1002, %v1004
        %v1012 = vsel %vm395, %v1006, %v1008
        %v1018 = vsel %vm395, %v751, 0
        %1020 = vmatpush.msra.mxu0 0.0
        %1021 = vmatpush.msra.mxu0 0.0
        %1022 = vmatpush.msra.mxu0 0.0
        %1023 = vmatpush.msra.mxu0 0.0
        %1024 = vmatpush.msra.mxu0 0.0
        %1025 = vmatpush.msra.mxu0 0.0
        %1026 = vmatpush.msra.mxu0 0.0
        %1027 = vmatpush.msra.mxu0 0.0
        %1028 = vmatpush.msra.mxu0 0.0
        %1029 = vmatpush.msra.mxu0 0.0
        %1030 = vmatpush.msra.mxu0 0.0
        %1031 = vmatpush.msra.mxu0 0.0
        %1032 = vmatpush.msra.mxu0 %v1012
        %1033 = vmatpush.msra.mxu0 %v1011
        %1034 = vmatpush.msra.mxu0 %v1010
        %1035 = vmatpush.msra.mxu0 %v1009
        %1036 = vmatmul.f32.gmra.mxu0 %v1018
        %v1037 = vpop.f32.mrf.mxu0
        %v1038 = vadd.f32 %v983, %v1037
        %1039 = vdwg.mxu0
        %v1040 = vadd.f32 %v971, %v1038
        %v1041 = vxor.u32 %v1040, 2147483648
        %v1042 = vmul.f32 %v1041, 1.442695
        %v1043 = vpow.pop %v1042
        %v1044 = vadd.f32 %v1043, 1.0
        %v1045 = vrcp.pop %v1044
        %v1046 = vmul.f32 %v1044, %v1045
        %v1047 = vsub.f32 1.0, %v1046
        %v1048 = vmul.f32 %v1045, %v1047
        %v1049 = vadd.f32 %v1045, %v1048
        %vm1050 = vweird.f32 %v1044
        %vm1051 = vweird.f32 %v1045
        %vm1052 = vmor %vm1050, %vm1051
        %v1053 = vsel %vm1052, %v1045, %v1049
        %v1054 = vand.u32 2147483647, %v1044
        %vm1055 = vcmp.eq.f32.partialorder %v1054, 8.507059e+37
        %v1056 = vand.u32 %v1044, 2147483648
        %v1057 = vor.u32 1.1754944e-38, %v1056
        %v1058 = vsel %vm1055, %v1057, %v1053
        %v1059 = vmul.f32 1.0, %v1058
        %1061 = vrot.lane.b32.xlu0 %v1038, 64
        %v1062 = vpop.permute.xlu0 %1061
        %v1064 = vmul.f32 %v1059, %v1062
        %1066 = vrot.lane.b32.xlu0 %v1064, 64
        %v1067 = vpop.permute.xlu0 %1066
        %v1069 = vadd.f32 %v971, %v1067
        %v1070 = vtanh.pop %v1069
        %v1071 = vsub.f32 1.0, %v1059
        %1073 = vrot.lane.b32.xlu0 %v1070, 96
        %v1074 = vpop.permute.xlu0 %1073
        %v1076 = vmul.f32 %v1071, %v1074
        %1077 = vrot.lane.b32.xlu0 %v751, 32
        %v1078 = vpop.permute.xlu0 %1077
        %v1080 = vmul.f32 %v1059, %v1078
        %v1081 = vadd.f32 %v1076, %v1080
        %v1082 = vld [vmem:[%s4 + $0x7] sm:$0x1]
        %1084 = vrot.lane.b32.xlu0 %v1081, 96
        %v1085 = vpop.permute.xlu0 %1084
        %v1087 = vsel %vm752, %v1085, 0.0
        %1088 = vadd.xlane.f32.xlu0 %v1087
        %v1089 = vpop.xlane.xlu0 %1088
        %v1090 = vmul.f32 %v1089, %v492
        %v1091 = vsub.f32 %v1081, %v1090
        %v1092 = vmul.f32 %v1091, %v1091
        %1094 = vrot.lane.b32.xlu0 %v1092, 96
        %v1095 = vpop.permute.xlu0 %1094
        %v1097 = vsel %vm752, %v1095, 0.0
        %1098 = vadd.xlane.f32.xlu0 %v1097
        %v1099 = vpop.xlane.xlu0 %1098
        %v1100 = vmul.f32 %v1099, %v492
        %v1101 = vadd.f32 %v1100, 1e-05
        %v1102 = vrsqrt.pop %v1101
        %v1103 = vmul.f32 %v1102, %v1101
        %v1104 = vmul.f32 %v1103, %v1102
        %v1105 = vmul.f32 0.5, %v1104
        %v1106 = vsub.f32 1.5, %v1105
        %v1107 = vmul.f32 %v1102, %v1106
        %vm1108 = vweird.f32 %v1101
        %vm1109 = vweird.f32 %v1102
        %vm1110 = vmor %vm1108, %vm1109
        %v1111 = vsel %vm1110, %v1102, %v1107
        %v1112 = vmul.f32 %v1091, %v1111
        %v1114 = vperm.slane %v1082, 0
        %1115 = vrot.lane.b32.xlu0 %v1114, 32
        %v1116 = vpop.permute.xlu0 %1115
        %v1118 = vmul.f32 %v1112, %v1116
        %v1120 = vadd.f32 %v1118, %v1114
        %1122 = vrot.lane.b32.xlu0 %v1120, 96
        %v1123 = vpop.permute.xlu0 %1122
        %1124 = vrot.lane.b32.xlu0 %v974, 64
        %v1125 = vpop.permute.xlu0 %1124
        %1126 = vrot.lane.b32.xlu0 %v976, 64
        %v1127 = vpop.permute.xlu0 %1126
        %1128 = vrot.lane.b32.xlu0 %v978, 64
        %v1129 = vpop.permute.xlu0 %1128
        %1130 = vrot.lane.b32.xlu0 %v980, 64
        %v1131 = vpop.permute.xlu0 %1130
        %1136 = vrot.lane.b32.xlu0 %v983, 32
        %v1137 = vpop.permute.xlu0 %1136
        %v1139 = vsel %vm395, %v1123, 0
        %1141 = vmatpush.msra.mxu0 0.0
        %1142 = vmatpush.msra.mxu0 0.0
        %1143 = vmatpush.msra.mxu0 0.0
        %1144 = vmatpush.msra.mxu0 0.0
        %1145 = vmatpush.msra.mxu0 0.0
        %1146 = vmatpush.msra.mxu0 0.0
        %1147 = vmatpush.msra.mxu0 0.0
        %1148 = vmatpush.msra.mxu0 0.0
        %1149 = vmatpush.msra.mxu0 0.0
        %1150 = vmatpush.msra.mxu0 0.0
        %1151 = vmatpush.msra.mxu0 0.0
        %1152 = vmatpush.msra.mxu0 0.0
        %1153 = vmatpush.msra.mxu0 %v1131
        %1154 = vmatpush.msra.mxu0 %v1129
        %1155 = vmatpush.msra.mxu0 %v1127
        %1156 = vmatpush.msra.mxu0 %v1125
        %1157 = vmatmul.f32.gmra.mxu0 %v1139
        %v1158 = vpop.f32.mrf.mxu0
        %v1159 = vadd.f32 %v1137, %v1158
        %1160 = vdwg.mxu0
        %v1161 = vmax.f32 %v1159, 0.0
        %v1162 = vld [vmem:[%s4 + $0x3] sm:$0x1]
        %v1164 = vperm.slane %v1162, 0
        %v1171 = vsel %vm395, %v1161, 0
        %1173 = vmatpush.msra.mxu0 0.0
        %1174 = vmatpush.msra.mxu0 0.0
        %1175 = vmatpush.msra.mxu0 0.0
        %1176 = vmatpush.msra.mxu0 0.0
        %1177 = vmatpush.msra.mxu0 0.0
        %1178 = vmatpush.msra.mxu0 0.0
        %1179 = vmatpush.msra.mxu0 0.0
        %1180 = vmatpush.msra.mxu0 0.0
        %1181 = vmatpush.msra.mxu0 0.0
        %1182 = vmatpush.msra.mxu0 0.0
        %1183 = vmatpush.msra.mxu0 0.0
        %1184 = vmatpush.msra.mxu0 0.0
        %1185 = vmatpush.msra.mxu0 %v1008
        %1186 = vmatpush.msra.mxu0 %v1004
        %1187 = vmatpush.msra.mxu0 %v1000
        %1188 = vmatpush.msra.mxu0 %v996
        %1189 = vmatmul.f32.gmra.mxu0 %v1171
        %v1190 = vpop.f32.mrf.mxu0
        %v1191 = vadd.f32 %v1164, %v1190
        %1192 = vdwg.mxu0
        %1194 = vrot.lane.b32.xlu0 %v1191, 32
        %v1195 = vpop.permute.xlu0 %1194
        %v1197 = vadd.f32 %v1081, %v1195
        %1199 = vrot.lane.b32.xlu0 %v1197, 96
        %v1200 = vpop.permute.xlu0 %1199
        %v1202 = vsel %vm752, %v1200, 0.0
        %1203 = vadd.xlane.f32.xlu0 %v1202
        %v1204 = vpop.xlane.xlu0 %1203
        %v1205 = vmul.f32 %v1204, %v492
        %v1206 = vsub.f32 %v1197, %v1205
        %v1207 = vmul.f32 %v1206, %v1206
        %1209 = vrot.lane.b32.xlu0 %v1207, 96
        %v1210 = vpop.permute.xlu0 %1209
        %v1212 = vsel %vm752, %v1210, 0.0
        %1213 = vadd.xlane.f32.xlu0 %v1212
        %v1214 = vpop.xlane.xlu0 %1213
        %v1215 = vmul.f32 %v1214, %v492
        %v1216 = vadd.f32 %v1215, 1e-05
        %v1217 = vrsqrt.pop %v1216
        %v1218 = vmul.f32 %v1217, %v1216
        %v1219 = vmul.f32 %v1218, %v1217
        %v1220 = vmul.f32 0.5, %v1219
        %v1221 = vsub.f32 1.5, %v1220
        %v1222 = vmul.f32 %v1217, %v1221
        %vm1223 = vweird.f32 %v1216
        %vm1224 = vweird.f32 %v1217
        %vm1225 = vmor %vm1223, %vm1224
        %v1226 = vsel %vm1225, %v1217, %v1222
        %v1227 = vmul.f32 %v1206, %v1226
        %v1228 = vmul.f32 %v1227, %v657
        %v1229 = vadd.f32 %v1228, %v776
        %1231 = vrot.lane.b32.xlu0 %v1229, 96
        %v1232 = vpop.permute.xlu0 %1231
        %v1233 = vsel %vm395, %v1232, 0
        %1235 = vmatpush.msra.mxu0 0.0
        %1236 = vmatpush.msra.mxu0 0.0
        %1237 = vmatpush.msra.mxu0 0.0
        %1238 = vmatpush.msra.mxu0 0.0
        %1239 = vmatpush.msra.mxu0 0.0
        %1240 = vmatpush.msra.mxu0 0.0
        %1241 = vmatpush.msra.mxu0 0.0
        %1242 = vmatpush.msra.mxu0 0.0
        %1243 = vmatpush.msra.mxu0 0.0
        %1244 = vmatpush.msra.mxu0 0.0
        %1245 = vmatpush.msra.mxu0 0.0
        %1246 = vmatpush.msra.mxu0 0.0
        %1247 = vmatpush.msra.mxu0 %v794
        %1248 = vmatpush.msra.mxu0 %v792
        %1249 = vmatpush.msra.mxu0 %v790
        %1250 = vmatpush.msra.mxu0 %v788
        %1251 = vmatmul.f32.gmra.mxu0 %v1233
        %v1252 = vpop.f32.mrf.mxu0
        %v1253 = vadd.f32 %v785, %v1252
        %1254 = vdwg.mxu0
        %v1256 = vsel %vm395, %v1253, 0
        %1258 = vmatpush.xpose.msra.mxu0 0.0
        %1259 = vmatpush.xpose.msra.mxu0 0.0
        %1260 = vmatpush.xpose.msra.mxu0 0.0
        %1261 = vmatpush.xpose.msra.mxu0 0.0
        %1262 = vmatpush.xpose.msra.mxu0 0.0
        %1263 = vmatpush.xpose.msra.mxu0 0.0
        %1264 = vmatpush.xpose.msra.mxu0 0.0
        %1265 = vmatpush.xpose.msra.mxu0 0.0
        %1266 = vmatpush.xpose.msra.mxu0 %v847
        %1267 = vmatpush.xpose.msra.mxu0 %v844
        %1268 = vmatpush.xpose.msra.mxu0 %v841
        %1269 = vmatpush.xpose.msra.mxu0 %v838
        %1270 = vmatpush.xpose.msra.mxu0 %v835
        %1271 = vmatpush.xpose.msra.mxu0 %v832
        %1272 = vmatpush.xpose.msra.mxu0 %v829
        %1273 = vmatpush.xpose.msra.mxu0 %v826
        %1274 = vmatmul.f32.gmra.mxu0 %v1256
        %v1275 = vpop.f32.mrf.mxu0
        %v1276 = vadd.f32 0.0, %v1275
        %1277 = vdwg.mxu0
        %v1278 = vsel %vm869, %v1276, -inf
        %v1279 = vrot.slane %v1278, 4
        %v1280 = vmax.f32 %v1278, %v1279
        %v1281 = vrot.slane %v1280, 2
        %v1282 = vmax.f32 %v1280, %v1281
        %v1283 = vrot.slane %v1282, 1
        %v1284 = vmax.f32 %v1282, %v1283
        %v1285 = vsub.f32 %v1276, %v1284
        %v1286 = vmul.f32 %v1285, 1.442695
        %v1287 = vpow.pop %v1286
        %v1288 = vsel %vm869, %v1287, 0.0
        %v1289 = vrot.slane %v1288, 4
        %v1290 = vadd.f32 %v1288, %v1289
        %v1291 = vrot.slane %v1290, 2
        %v1292 = vadd.f32 %v1290, %v1291
        %v1293 = vrot.slane %v1292, 1
        %v1294 = vadd.f32 %v1292, %v1293
        %v1295 = vrcp.pop %v1294
        %v1296 = vmul.f32 %v1287, %v1295
        %v1297 = vadd.f32 %v1296, 1e-08
        %v1298 = vsel %vm869, %v1297, 0.0
        %1299 = vadd.xlane.f32.xlu0 %v1298
        %v1300 = vpop.xlane.xlu0 %1299
        %v1301 = vrcp.pop %v1300
        %v1302 = vmul.f32 %v1297, %v1301
        %v1304 = vsel %vm919, %v1302, 0
        %1306 = vmatpush.msra.mxu0 0.0
        %1307 = vmatpush.msra.mxu0 0.0
        %1308 = vmatpush.msra.mxu0 0.0
        %1309 = vmatpush.msra.mxu0 0.0
        %1310 = vmatpush.msra.mxu0 0.0
        %1311 = vmatpush.msra.mxu0 0.0
        %1312 = vmatpush.msra.mxu0 0.0
        %1313 = vmatpush.msra.mxu0 0.0
        %1314 = vmatpush.msra.mxu0 %v910
        %1315 = vmatpush.msra.mxu0 %v908
        %1316 = vmatpush.msra.mxu0 %v906
        %1317 = vmatpush.msra.mxu0 %v904
        %1318 = vmatpush.msra.mxu0 %v902
        %1319 = vmatpush.msra.mxu0 %v900
        %1320 = vmatpush.msra.mxu0 %v898
        %1321 = vmatpush.msra.mxu0 %v896
        %1322 = vmatmul.f32.gmra.mxu0 %v1304
        %v1323 = vpop.f32.mrf.mxu0
        %v1324 = vadd.f32 0.0, %v1323
        %1325 = vdwg.mxu0
        %v1327 = vsel %vm395, %v1324, 0
        %1329 = vmatpush.msra.mxu0 0.0
        %1330 = vmatpush.msra.mxu0 0.0
        %1331 = vmatpush.msra.mxu0 0.0
        %1332 = vmatpush.msra.mxu0 0.0
        %1333 = vmatpush.msra.mxu0 0.0
        %1334 = vmatpush.msra.mxu0 0.0
        %1335 = vmatpush.msra.mxu0 0.0
        %1336 = vmatpush.msra.mxu0 0.0
        %1337 = vmatpush.msra.mxu0 0.0
        %1338 = vmatpush.msra.mxu0 0.0
        %1339 = vmatpush.msra.mxu0 0.0
        %1340 = vmatpush.msra.mxu0 0.0
        %1341 = vmatpush.msra.mxu0 %v946
        %1342 = vmatpush.msra.mxu0 %v945
        %1343 = vmatpush.msra.mxu0 %v944
        %1344 = vmatpush.msra.mxu0 %v943
        %1345 = vmatmul.f32.gmra.mxu0 %v1327
        %v1346 = vpop.f32.mrf.mxu0
        %v1347 = vadd.f32 %v948, %v1346
        %1348 = vdwg.mxu0
        %v1349 = vsel %vm395, %v1200, 0
        %1351 = vmatpush.msra.mxu0 0.0
        %1352 = vmatpush.msra.mxu0 0.0
        %1353 = vmatpush.msra.mxu0 0.0
        %1354 = vmatpush.msra.mxu0 0.0
        %1355 = vmatpush.msra.mxu0 0.0
        %1356 = vmatpush.msra.mxu0 0.0
        %1357 = vmatpush.msra.mxu0 0.0
        %1358 = vmatpush.msra.mxu0 0.0
        %1359 = vmatpush.msra.mxu0 0.0
        %1360 = vmatpush.msra.mxu0 0.0
        %1361 = vmatpush.msra.mxu0 0.0
        %1362 = vmatpush.msra.mxu0 0.0
        %1363 = vmatpush.msra.mxu0 %v1012
        %1364 = vmatpush.msra.mxu0 %v1011
        %1365 = vmatpush.msra.mxu0 %v1010
        %1366 = vmatpush.msra.mxu0 %v1009
        %1367 = vmatmul.f32.gmra.mxu0 %v1349
        %v1368 = vpop.f32.mrf.mxu0
        %v1369 = vadd.f32 %v983, %v1368
        %1370 = vdwg.mxu0
        %v1371 = vadd.f32 %v1347, %v1369
        %v1372 = vxor.u32 %v1371, 2147483648
        %v1373 = vmul.f32 %v1372, 1.442695
        %v1374 = vpow.pop %v1373
        %v1375 = vadd.f32 %v1374, 1.0
        %v1376 = vrcp.pop %v1375
        %v1377 = vmul.f32 %v1375, %v1376
        %v1378 = vsub.f32 1.0, %v1377
        %v1379 = vmul.f32 %v1376, %v1378
        %v1380 = vadd.f32 %v1376, %v1379
        %vm1381 = vweird.f32 %v1375
        %vm1382 = vweird.f32 %v1376
        %vm1383 = vmor %vm1381, %vm1382
        %v1384 = vsel %vm1383, %v1376, %v1380
        %v1385 = vand.u32 2147483647, %v1375
        %vm1386 = vcmp.eq.f32.partialorder %v1385, 8.507059e+37
        %v1387 = vand.u32 %v1375, 2147483648
        %v1388 = vor.u32 1.1754944e-38, %v1387
        %v1389 = vsel %vm1386, %v1388, %v1384
        %v1390 = vmul.f32 1.0, %v1389
        %1392 = vrot.lane.b32.xlu0 %v1369, 64
        %v1393 = vpop.permute.xlu0 %1392
        %v1395 = vmul.f32 %v1390, %v1393
        %1397 = vrot.lane.b32.xlu0 %v1395, 64
        %v1398 = vpop.permute.xlu0 %1397
        %v1400 = vadd.f32 %v1347, %v1398
        %v1401 = vtanh.pop %v1400
        %v1402 = vsub.f32 1.0, %v1390
        %1404 = vrot.lane.b32.xlu0 %v1401, 96
        %v1405 = vpop.permute.xlu0 %1404
        %v1407 = vmul.f32 %v1402, %v1405
        %v1408 = vmul.f32 %v1390, %v1197
        %v1409 = vadd.f32 %v1407, %v1408
        %1411 = vrot.lane.b32.xlu0 %v1409, 96
        %v1412 = vpop.permute.xlu0 %1411
        %v1414 = vsel %vm752, %v1412, 0.0
        %1415 = vadd.xlane.f32.xlu0 %v1414
        %v1416 = vpop.xlane.xlu0 %1415
        %v1417 = vmul.f32 %v1416, %v492
        %v1418 = vsub.f32 %v1409, %v1417
        %v1419 = vmul.f32 %v1418, %v1418
        %1421 = vrot.lane.b32.xlu0 %v1419, 96
        %v1422 = vpop.permute.xlu0 %1421
        %v1424 = vsel %vm752, %v1422, 0.0
        %1425 = vadd.xlane.f32.xlu0 %v1424
        %v1426 = vpop.xlane.xlu0 %1425
        %v1427 = vmul.f32 %v1426, %v492
        %v1428 = vadd.f32 %v1427, 1e-05
        %v1429 = vrsqrt.pop %v1428
        %v1430 = vmul.f32 %v1429, %v1428
        %v1431 = vmul.f32 %v1430, %v1429
        %v1432 = vmul.f32 0.5, %v1431
        %v1433 = vsub.f32 1.5, %v1432
        %v1434 = vmul.f32 %v1429, %v1433
        %vm1435 = vweird.f32 %v1428
        %vm1436 = vweird.f32 %v1429
        %vm1437 = vmor %vm1435, %vm1436
        %v1438 = vsel %vm1437, %v1429, %v1434
        %v1439 = vmul.f32 %v1418, %v1438
        %v1440 = vmul.f32 %v1439, %v1116
        %v1441 = vadd.f32 %v1440, %v1114
        %1443 = vrot.lane.b32.xlu0 %v1441, 96
        %v1444 = vpop.permute.xlu0 %1443
        %v1445 = vsel %vm395, %v1444, 0
        %1447 = vmatpush.msra.mxu0 0.0
        %1448 = vmatpush.msra.mxu0 0.0
        %1449 = vmatpush.msra.mxu0 0.0
        %1450 = vmatpush.msra.mxu0 0.0
        %1451 = vmatpush.msra.mxu0 0.0
        %1452 = vmatpush.msra.mxu0 0.0
        %1453 = vmatpush.msra.mxu0 0.0
        %1454 = vmatpush.msra.mxu0 0.0
        %1455 = vmatpush.msra.mxu0 0.0
        %1456 = vmatpush.msra.mxu0 0.0
        %1457 = vmatpush.msra.mxu0 0.0
        %1458 = vmatpush.msra.mxu0 0.0
        %1459 = vmatpush.msra.mxu0 %v1131
        %1460 = vmatpush.msra.mxu0 %v1129
        %1461 = vmatpush.msra.mxu0 %v1127
        %1462 = vmatpush.msra.mxu0 %v1125
        %1463 = vmatmul.f32.gmra.mxu0 %v1445
        %v1464 = vpop.f32.mrf.mxu0
        %v1465 = vadd.f32 %v1137, %v1464
        %1466 = vdwg.mxu0
        %v1467 = vmax.f32 %v1465, 0.0
        %v1469 = vsel %vm395, %v1467, 0
        %1471 = vmatpush.msra.mxu0 0.0
        %1472 = vmatpush.msra.mxu0 0.0
        %1473 = vmatpush.msra.mxu0 0.0
        %1474 = vmatpush.msra.mxu0 0.0
        %1475 = vmatpush.msra.mxu0 0.0
        %1476 = vmatpush.msra.mxu0 0.0
        %1477 = vmatpush.msra.mxu0 0.0
        %1478 = vmatpush.msra.mxu0 0.0
        %1479 = vmatpush.msra.mxu0 0.0
        %1480 = vmatpush.msra.mxu0 0.0
        %1481 = vmatpush.msra.mxu0 0.0
        %1482 = vmatpush.msra.mxu0 0.0
        %1483 = vmatpush.msra.mxu0 %v1008
        %1484 = vmatpush.msra.mxu0 %v1004
        %1485 = vmatpush.msra.mxu0 %v1000
        %1486 = vmatpush.msra.mxu0 %v996
        %1487 = vmatmul.f32.gmra.mxu0 %v1469
        %v1488 = vpop.f32.mrf.mxu0
        %v1489 = vadd.f32 %v1164, %v1488
        %1490 = vdwg.mxu0
        %1492 = vrot.lane.b32.xlu0 %v1489, 32
        %v1493 = vpop.permute.xlu0 %1492
        %v1495 = vadd.f32 %v1409, %v1493
        %1497 = vrot.lane.b32.xlu0 %v1495, 96
        %v1498 = vpop.permute.xlu0 %1497
        %v1500 = vsel %vm752, %v1498, 0.0
        %1501 = vadd.xlane.f32.xlu0 %v1500
        %v1502 = vpop.xlane.xlu0 %1501
        %v1503 = vmul.f32 %v1502, %v492
        %v1504 = vsub.f32 %v1495, %v1503
        %v1505 = vmul.f32 %v1504, %v1504
        %1507 = vrot.lane.b32.xlu0 %v1505, 96
        %v1508 = vpop.permute.xlu0 %1507
        %v1510 = vsel %vm752, %v1508, 0.0
        %1511 = vadd.xlane.f32.xlu0 %v1510
        %v1512 = vpop.xlane.xlu0 %1511
        %v1513 = vmul.f32 %v1512, %v492
        %v1514 = vadd.f32 %v1513, 1e-05
        %v1515 = vrsqrt.pop %v1514
        %v1516 = vmul.f32 %v1515, %v1514
        %v1517 = vmul.f32 %v1516, %v1515
        %v1518 = vmul.f32 0.5, %v1517
        %v1519 = vsub.f32 1.5, %v1518
        %v1520 = vmul.f32 %v1515, %v1519
        %vm1521 = vweird.f32 %v1514
        %vm1522 = vweird.f32 %v1515
        %vm1523 = vmor %vm1521, %vm1522
        %v1524 = vsel %vm1523, %v1515, %v1520
        %v1525 = vmul.f32 %v1504, %v1524
        %v1526 = vmul.f32 %v1525, %v657
        %v1527 = vadd.f32 %v1526, %v776
        %1529 = vrot.lane.b32.xlu0 %v1527, 96
        %v1530 = vpop.permute.xlu0 %1529
        %v1531 = vsel %vm395, %v1530, 0
        %1533 = vmatpush.msra.mxu0 0.0
        %1534 = vmatpush.msra.mxu0 0.0
        %1535 = vmatpush.msra.mxu0 0.0
        %1536 = vmatpush.msra.mxu0 0.0
        %1537 = vmatpush.msra.mxu0 0.0
        %1538 = vmatpush.msra.mxu0 0.0
        %1539 = vmatpush.msra.mxu0 0.0
        %1540 = vmatpush.msra.mxu0 0.0
        %1541 = vmatpush.msra.mxu0 0.0
        %1542 = vmatpush.msra.mxu0 0.0
        %1543 = vmatpush.msra.mxu0 0.0
        %1544 = vmatpush.msra.mxu0 0.0
        %1545 = vmatpush.msra.mxu0 %v794
        %1546 = vmatpush.msra.mxu0 %v792
        %1547 = vmatpush.msra.mxu0 %v790
        %1548 = vmatpush.msra.mxu0 %v788
        %1549 = vmatmul.f32.gmra.mxu0 %v1531
        %v1550 = vpop.f32.mrf.mxu0
        %v1551 = vadd.f32 %v785, %v1550
        %1552 = vdwg.mxu0
        %v1554 = vsel %vm395, %v1551, 0
        %1556 = vmatpush.xpose.msra.mxu0 0.0
        %1557 = vmatpush.xpose.msra.mxu0 0.0
        %1558 = vmatpush.xpose.msra.mxu0 0.0
        %1559 = vmatpush.xpose.msra.mxu0 0.0
        %1560 = vmatpush.xpose.msra.mxu0 0.0
        %1561 = vmatpush.xpose.msra.mxu0 0.0
        %1562 = vmatpush.xpose.msra.mxu0 0.0
        %1563 = vmatpush.xpose.msra.mxu0 0.0
        %1564 = vmatpush.xpose.msra.mxu0 %v847
        %1565 = vmatpush.xpose.msra.mxu0 %v844
        %1566 = vmatpush.xpose.msra.mxu0 %v841
        %1567 = vmatpush.xpose.msra.mxu0 %v838
        %1568 = vmatpush.xpose.msra.mxu0 %v835
        %1569 = vmatpush.xpose.msra.mxu0 %v832
        %1570 = vmatpush.xpose.msra.mxu0 %v829
        %1571 = vmatpush.xpose.msra.mxu0 %v826
        %1572 = vmatmul.f32.gmra.mxu0 %v1554
        %v1573 = vpop.f32.mrf.mxu0
        %v1574 = vadd.f32 0.0, %v1573
        %1575 = vdwg.mxu0
        %v1576 = vsel %vm869, %v1574, -inf
        %v1577 = vrot.slane %v1576, 4
        %v1578 = vmax.f32 %v1576, %v1577
        %v1579 = vrot.slane %v1578, 2
        %v1580 = vmax.f32 %v1578, %v1579
        %v1581 = vrot.slane %v1580, 1
        %v1582 = vmax.f32 %v1580, %v1581
        %v1583 = vsub.f32 %v1574, %v1582
        %v1584 = vmul.f32 %v1583, 1.442695
        %v1585 = vpow.pop %v1584
        %v1586 = vsel %vm869, %v1585, 0.0
        %v1587 = vrot.slane %v1586, 4
        %v1588 = vadd.f32 %v1586, %v1587
        %v1589 = vrot.slane %v1588, 2
        %v1590 = vadd.f32 %v1588, %v1589
        %v1591 = vrot.slane %v1590, 1
        %v1592 = vadd.f32 %v1590, %v1591
        %v1593 = vrcp.pop %v1592
        %v1594 = vmul.f32 %v1585, %v1593
        %v1595 = vadd.f32 %v1594, 1e-08
        %v1596 = vsel %vm869, %v1595, 0.0
        %1597 = vadd.xlane.f32.xlu0 %v1596
        %v1598 = vpop.xlane.xlu0 %1597
        %v1599 = vrcp.pop %v1598
        %v1600 = vmul.f32 %v1595, %v1599
        %v1602 = vsel %vm919, %v1600, 0
        %1604 = vmatpush.msra.mxu0 0.0
        %1605 = vmatpush.msra.mxu0 0.0
        %1606 = vmatpush.msra.mxu0 0.0
        %1607 = vmatpush.msra.mxu0 0.0
        %1608 = vmatpush.msra.mxu0 0.0
        %1609 = vmatpush.msra.mxu0 0.0
        %1610 = vmatpush.msra.mxu0 0.0
        %1611 = vmatpush.msra.mxu0 0.0
        %1612 = vmatpush.msra.mxu0 %v910
        %1613 = vmatpush.msra.mxu0 %v908
        %1614 = vmatpush.msra.mxu0 %v906
        %1615 = vmatpush.msra.mxu0 %v904
        %1616 = vmatpush.msra.mxu0 %v902
        %1617 = vmatpush.msra.mxu0 %v900
        %1618 = vmatpush.msra.mxu0 %v898
        %1619 = vmatpush.msra.mxu0 %v896
        %1620 = vmatmul.f32.gmra.mxu0 %v1602
        %v1621 = vpop.f32.mrf.mxu0
        %v1622 = vadd.f32 0.0, %v1621
        %1623 = vdwg.mxu0
        %v1625 = vsel %vm395, %v1622, 0
        %1627 = vmatpush.msra.mxu0 0.0
        %1628 = vmatpush.msra.mxu0 0.0
        %1629 = vmatpush.msra.mxu0 0.0
        %1630 = vmatpush.msra.mxu0 0.0
        %1631 = vmatpush.msra.mxu0 0.0
        %1632 = vmatpush.msra.mxu0 0.0
        %1633 = vmatpush.msra.mxu0 0.0
        %1634 = vmatpush.msra.mxu0 0.0
        %1635 = vmatpush.msra.mxu0 0.0
        %1636 = vmatpush.msra.mxu0 0.0
        %1637 = vmatpush.msra.mxu0 0.0
        %1638 = vmatpush.msra.mxu0 0.0
        %1639 = vmatpush.msra.mxu0 %v946
        %1640 = vmatpush.msra.mxu0 %v945
        %1641 = vmatpush.msra.mxu0 %v944
        %1642 = vmatpush.msra.mxu0 %v943
        %1643 = vmatmul.f32.gmra.mxu0 %v1625
        %v1644 = vpop.f32.mrf.mxu0
        %v1645 = vadd.f32 %v948, %v1644
        %1646 = vdwg.mxu0
        %v1647 = vsel %vm395, %v1498, 0
        %1649 = vmatpush.msra.mxu0 0.0
        %1650 = vmatpush.msra.mxu0 0.0
        %1651 = vmatpush.msra.mxu0 0.0
        %1652 = vmatpush.msra.mxu0 0.0
        %1653 = vmatpush.msra.mxu0 0.0
        %1654 = vmatpush.msra.mxu0 0.0
        %1655 = vmatpush.msra.mxu0 0.0
        %1656 = vmatpush.msra.mxu0 0.0
        %1657 = vmatpush.msra.mxu0 0.0
        %1658 = vmatpush.msra.mxu0 0.0
        %1659 = vmatpush.msra.mxu0 0.0
        %1660 = vmatpush.msra.mxu0 0.0
        %1661 = vmatpush.msra.mxu0 %v1012
        %1662 = vmatpush.msra.mxu0 %v1011
        %1663 = vmatpush.msra.mxu0 %v1010
        %1664 = vmatpush.msra.mxu0 %v1009
        %1665 = vmatmul.f32.gmra.mxu0 %v1647
        %v1666 = vpop.f32.mrf.mxu0
        %v1667 = vadd.f32 %v983, %v1666
        %1668 = vdwg.mxu0
        %v1669 = vadd.f32 %v1645, %v1667
        %v1670 = vxor.u32 %v1669, 2147483648
        %v1671 = vmul.f32 %v1670, 1.442695
        %v1672 = vpow.pop %v1671
        %v1673 = vadd.f32 %v1672, 1.0
        %v1674 = vrcp.pop %v1673
        %v1675 = vmul.f32 %v1673, %v1674
        %v1676 = vsub.f32 1.0, %v1675
        %v1677 = vmul.f32 %v1674, %v1676
        %v1678 = vadd.f32 %v1674, %v1677
        %vm1679 = vweird.f32 %v1673
        %vm1680 = vweird.f32 %v1674
        %vm1681 = vmor %vm1679, %vm1680
        %v1682 = vsel %vm1681, %v1674, %v1678
        %v1683 = vand.u32 2147483647, %v1673
        %vm1684 = vcmp.eq.f32.partialorder %v1683, 8.507059e+37
        %v1685 = vand.u32 %v1673, 2147483648
        %v1686 = vor.u32 1.1754944e-38, %v1685
        %v1687 = vsel %vm1684, %v1686, %v1682
        %v1688 = vmul.f32 1.0, %v1687
        %1690 = vrot.lane.b32.xlu0 %v1667, 64
        %v1691 = vpop.permute.xlu0 %1690
        %v1693 = vmul.f32 %v1688, %v1691
        %1695 = vrot.lane.b32.xlu0 %v1693, 64
        %v1696 = vpop.permute.xlu0 %1695
        %v1698 = vadd.f32 %v1645, %v1696
        %v1699 = vtanh.pop %v1698
        %v1700 = vsub.f32 1.0, %v1688
        %1702 = vrot.lane.b32.xlu0 %v1699, 96
        %v1703 = vpop.permute.xlu0 %1702
        %v1705 = vmul.f32 %v1700, %v1703
        %v1706 = vmul.f32 %v1688, %v1495
        %v1707 = vadd.f32 %v1705, %v1706
        %1709 = vrot.lane.b32.xlu0 %v1707, 96
        %v1710 = vpop.permute.xlu0 %1709
        %v1712 = vsel %vm752, %v1710, 0.0
        %1713 = vadd.xlane.f32.xlu0 %v1712
        %v1714 = vpop.xlane.xlu0 %1713
        %v1715 = vmul.f32 %v1714, %v492
        %v1716 = vsub.f32 %v1707, %v1715
        %v1717 = vmul.f32 %v1716, %v1716
        %1719 = vrot.lane.b32.xlu0 %v1717, 96
        %v1720 = vpop.permute.xlu0 %1719
        %v1722 = vsel %vm752, %v1720, 0.0
        %1723 = vadd.xlane.f32.xlu0 %v1722
        %v1724 = vpop.xlane.xlu0 %1723
        %v1725 = vmul.f32 %v1724, %v492
        %v1726 = vadd.f32 %v1725, 1e-05
        %v1727 = vrsqrt.pop %v1726
        %v1728 = vmul.f32 %v1727, %v1726
        %v1729 = vmul.f32 %v1728, %v1727
        %v1730 = vmul.f32 0.5, %v1729
        %v1731 = vsub.f32 1.5, %v1730
        %v1732 = vmul.f32 %v1727, %v1731
        %vm1733 = vweird.f32 %v1726
        %vm1734 = vweird.f32 %v1727
        %vm1735 = vmor %vm1733, %vm1734
        %v1736 = vsel %vm1735, %v1727, %v1732
        %v1737 = vmul.f32 %v1716, %v1736
        %v1738 = vmul.f32 %v1737, %v1116
        %v1739 = vadd.f32 %v1738, %v1114
        %1741 = vrot.lane.b32.xlu0 %v1739, 96
        %v1742 = vpop.permute.xlu0 %1741
        %v1743 = vsel %vm395, %v1742, 0
        %1745 = vmatpush.msra.mxu0 0.0
        %1746 = vmatpush.msra.mxu0 0.0
        %1747 = vmatpush.msra.mxu0 0.0
        %1748 = vmatpush.msra.mxu0 0.0
        %1749 = vmatpush.msra.mxu0 0.0
        %1750 = vmatpush.msra.mxu0 0.0
        %1751 = vmatpush.msra.mxu0 0.0
        %1752 = vmatpush.msra.mxu0 0.0
        %1753 = vmatpush.msra.mxu0 0.0
        %1754 = vmatpush.msra.mxu0 0.0
        %1755 = vmatpush.msra.mxu0 0.0
        %1756 = vmatpush.msra.mxu0 0.0
        %1757 = vmatpush.msra.mxu0 %v1131
        %1758 = vmatpush.msra.mxu0 %v1129
        %1759 = vmatpush.msra.mxu0 %v1127
        %1760 = vmatpush.msra.mxu0 %v1125
        %1761 = vmatmul.f32.gmra.mxu0 %v1743
        %v1762 = vpop.f32.mrf.mxu0
        %v1763 = vadd.f32 %v1137, %v1762
        %1764 = vdwg.mxu0
        %v1765 = vmax.f32 %v1763, 0.0
        %v1767 = vsel %vm395, %v1765, 0
        %1769 = vmatpush.msra.mxu0 0.0
        %1770 = vmatpush.msra.mxu0 0.0
        %1771 = vmatpush.msra.mxu0 0.0
        %1772 = vmatpush.msra.mxu0 0.0
        %1773 = vmatpush.msra.mxu0 0.0
        %1774 = vmatpush.msra.mxu0 0.0
        %1775 = vmatpush.msra.mxu0 0.0
        %1776 = vmatpush.msra.mxu0 0.0
        %1777 = vmatpush.msra.mxu0 0.0
        %1778 = vmatpush.msra.mxu0 0.0
        %1779 = vmatpush.msra.mxu0 0.0
        %1780 = vmatpush.msra.mxu0 0.0
        %1781 = vmatpush.msra.mxu0 %v1008
        %1782 = vmatpush.msra.mxu0 %v1004
        %1783 = vmatpush.msra.mxu0 %v1000
        %1784 = vmatpush.msra.mxu0 %v996
        %1785 = vmatmul.f32.gmra.mxu0 %v1767
        %v1786 = vpop.f32.mrf.mxu0
        %v1787 = vadd.f32 %v1164, %v1786
        %1788 = vdwg.mxu0
        %1790 = vrot.lane.b32.xlu0 %v1787, 32
        %v1791 = vpop.permute.xlu0 %1790
        %v1793 = vadd.f32 %v1707, %v1791
        %1794 = vst.msk [vmem:[%s275] sm:$0xf] %vm869, %v1595
        %v1795 = vld [vmem:[#allocation2 + $0x18] sm:$0xff]
        %v1796 = vld [vmem:[#allocation2 + $0x48] sm:$0xff]
        %v1797 = vld [vmem:[#allocation2 + $0x78] sm:$0xff]
        %v1798 = vld [vmem:[#allocation2 + $0xa8] sm:$0xff]
        %v1799 = vld [vmem:[%s4 + $0x3] sm:$0x1]
        %v1801 = vperm.slane %v1799, 0
        %1803 = vrot.lane.b32.xlu0 %v1793, 96
        %v1804 = vpop.permute.xlu0 %1803
        %1805 = vrot.lane.b32.xlu0 %v1801, 96
        %v1806 = vpop.permute.xlu0 %1805
        %v1808 = vsel %vm395, %v1804, 0
        %1810 = vmatpush.msra.mxu0 0.0
        %1811 = vmatpush.msra.mxu0 0.0
        %1812 = vmatpush.msra.mxu0 0.0
        %1813 = vmatpush.msra.mxu0 0.0
        %1814 = vmatpush.msra.mxu0 0.0
        %1815 = vmatpush.msra.mxu0 0.0
        %1816 = vmatpush.msra.mxu0 0.0
        %1817 = vmatpush.msra.mxu0 0.0
        %1818 = vmatpush.msra.mxu0 0.0
        %1819 = vmatpush.msra.mxu0 0.0
        %1820 = vmatpush.msra.mxu0 0.0
        %1821 = vmatpush.msra.mxu0 0.0
        %1822 = vmatpush.msra.mxu0 %v1798
        %1823 = vmatpush.msra.mxu0 %v1797
        %1824 = vmatpush.msra.mxu0 %v1796
        %1825 = vmatpush.msra.mxu0 %v1795
        %1826 = vmatmul.f32.gmra.mxu0 %v1808
        %v1827 = vpop.f32.mrf.mxu0
        %v1828 = vadd.f32 %v1806, %v1827
        %1829 = vdwg.mxu0
        %v1830 = vmax.f32 %v1828, 0.0
        %1835 = vrot.lane.b32.xlu0 %v1795, 96
        %v1836 = vpop.permute.xlu0 %1835
        %1837 = vrot.lane.b32.xlu0 %v1796, 96
        %v1838 = vpop.permute.xlu0 %1837
        %1839 = vrot.lane.b32.xlu0 %v1797, 96
        %v1840 = vpop.permute.xlu0 %1839
        %1841 = vrot.lane.b32.xlu0 %v1798, 96
        %v1842 = vpop.permute.xlu0 %1841
        %1847 = vrot.lane.b32.xlu0 %v1801, 64
        %v1848 = vpop.permute.xlu0 %1847
        %v1851 = vsel %vm395, %v1830, 0
        %1853 = vmatpush.msra.mxu0 0.0
        %1854 = vmatpush.msra.mxu0 0.0
        %1855 = vmatpush.msra.mxu0 0.0
        %1856 = vmatpush.msra.mxu0 0.0
        %1857 = vmatpush.msra.mxu0 0.0
        %1858 = vmatpush.msra.mxu0 0.0
        %1859 = vmatpush.msra.mxu0 0.0
        %1860 = vmatpush.msra.mxu0 0.0
        %1861 = vmatpush.msra.mxu0 0.0
        %1862 = vmatpush.msra.mxu0 0.0
        %1863 = vmatpush.msra.mxu0 0.0
        %1864 = vmatpush.msra.mxu0 0.0
        %1865 = vmatpush.msra.mxu0 %v1842
        %1866 = vmatpush.msra.mxu0 %v1840
        %1867 = vmatpush.msra.mxu0 %v1838
        %1868 = vmatpush.msra.mxu0 %v1836
        %1869 = vmatmul.f32.gmra.mxu0 %v1851
        %v1870 = vpop.f32.mrf.mxu0
        %v1871 = vadd.f32 %v1848, %v1870
        %1872 = vdwg.mxu0
        %v1873 = vmax.f32 %v1871, 0.0
        %v1874 = vld [vmem:[#allocation2 + $0x18] sm:$0xff]
        %v1875 = vld [vmem:[#allocation2 + $0x20] sm:$0xff]
        %v1876 = vld [vmem:[#allocation2 + $0x28] sm:$0xff]
        %v1877 = vld [vmem:[#allocation2 + $0x48] sm:$0xff]
        %v1878 = vld [vmem:[#allocation2 + $0x50] sm:$0xff]
        %v1879 = vld [vmem:[#allocation2 + $0x58] sm:$0xff]
        %v1880 = vld [vmem:[#allocation2 + $0x78] sm:$0xff]
        %v1881 = vld [vmem:[#allocation2 + $0x80] sm:$0xff]
        %v1882 = vld [vmem:[#allocation2 + $0x88] sm:$0xff]
        %v1883 = vld [vmem:[#allocation2 + $0xa8] sm:$0xff]
        %v1884 = vld [vmem:[#allocation2 + $0xb0] sm:$0xff]
        %v1885 = vld [vmem:[#allocation2 + $0xb8] sm:$0xff]
        %v1886 = vld [vmem:[%s4 + $0x3] sm:$0x7]
        %v1888 = vperm.slane %v1886, 0
        %v1889 = vperm.slane %v1886, 1
        %v1890 = vperm.slane %v1886, 2
        %1903 = vrot.lane.b32.xlu0 %v1874, 64
        %v1904 = vpop.permute.xlu0 %1903
        %1905 = vrot.lane.b32.xlu0 %v1875, 64
        %v1906 = vpop.permute.xlu0 %1905
        %1907 = vrot.lane.b32.xlu0 %v1876, 64
        %v1908 = vpop.permute.xlu0 %1907
        %1909 = vrot.lane.b32.xlu0 %v1877, 64
        %v1910 = vpop.permute.xlu0 %1909
        %1911 = vrot.lane.b32.xlu0 %v1878, 64
        %v1912 = vpop.permute.xlu0 %1911
        %1913 = vrot.lane.b32.xlu0 %v1879, 64
        %v1914 = vpop.permute.xlu0 %1913
        %1915 = vrot.lane.b32.xlu0 %v1880, 64
        %v1916 = vpop.permute.xlu0 %1915
        %1917 = vrot.lane.b32.xlu0 %v1881, 64
        %v1918 = vpop.permute.xlu0 %1917
        %1919 = vrot.lane.b32.xlu0 %v1882, 64
        %v1920 = vpop.permute.xlu0 %1919
        %1921 = vrot.lane.b32.xlu0 %v1883, 64
        %v1922 = vpop.permute.xlu0 %1921
        %1923 = vrot.lane.b32.xlu0 %v1884, 64
        %v1924 = vpop.permute.xlu0 %1923
        %1925 = vrot.lane.b32.xlu0 %v1885, 64
        %v1926 = vpop.permute.xlu0 %1925
        %v1927 = vsel %vm919, %v1904, %v1906
        %v1928 = vsel %vm919, %v1906, %v1908
        %v1929 = vsel %vm919, %v1910, %v1912
        %v1930 = vsel %vm919, %v1912, %v1914
        %v1931 = vsel %vm919, %v1916, %v1918
        %v1932 = vsel %vm919, %v1918, %v1920
        %v1933 = vsel %vm919, %v1922, %v1924
        %v1934 = vsel %vm919, %v1924, %v1926
        %1947 = vrot.lane.b32.xlu0 %v1888, 32
        %v1948 = vpop.permute.xlu0 %1947
        %1949 = vrot.lane.b32.xlu0 %v1889, 32
        %v1950 = vpop.permute.xlu0 %1949
        %1951 = vrot.lane.b32.xlu0 %v1890, 32
        %v1952 = vpop.permute.xlu0 %1951
        %v1953 = vsel %vm395, %v1948, %v1950
        %v1954 = vsel %vm395, %v1950, %v1952
        %v1959 = vsel %vm395, %v1873, 0
        %1961 = vmatpush.msra.mxu0 0.0
        %1962 = vmatpush.msra.mxu0 0.0
        %1963 = vmatpush.msra.mxu0 0.0
        %1964 = vmatpush.msra.mxu0 0.0
        %1965 = vmatpush.msra.mxu0 0.0
        %1966 = vmatpush.msra.mxu0 0.0
        %1967 = vmatpush.msra.mxu0 0.0
        %1968 = vmatpush.msra.mxu0 0.0
        %1969 = vmatpush.msra.mxu0 0.0
        %1970 = vmatpush.msra.mxu0 0.0
        %1971 = vmatpush.msra.mxu0 0.0
        %1972 = vmatpush.msra.mxu0 0.0
        %1973 = vmatpush.msra.mxu0 %v1933
        %1974 = vmatpush.msra.mxu0 %v1931
        %1975 = vmatpush.msra.mxu0 %v1929
        %1976 = vmatpush.msra.mxu0 %v1927
        %1977 = vmatmul.f32.gmra.mxu0 %v1959
        %v1978 = vpop.f32.mrf.mxu0
        %v1979 = vadd.f32 %v1953, %v1978
        %1980 = vdwg.mxu0
        %1981 = vmatpush.msra.mxu0 0.0
        %1982 = vmatpush.msra.mxu0 0.0
        %1983 = vmatpush.msra.mxu0 0.0
        %1984 = vmatpush.msra.mxu0 0.0
        %1985 = vmatpush.msra.mxu0 0.0
        %1986 = vmatpush.msra.mxu0 0.0
        %1987 = vmatpush.msra.mxu0 0.0
        %1988 = vmatpush.msra.mxu0 0.0
        %1989 = vmatpush.msra.mxu0 0.0
        %1990 = vmatpush.msra.mxu0 0.0
        %1991 = vmatpush.msra.mxu0 0.0
        %1992 = vmatpush.msra.mxu0 0.0
        %1993 = vmatpush.msra.mxu0 %v1934
        %1994 = vmatpush.msra.mxu0 %v1932
        %1995 = vmatpush.msra.mxu0 %v1930
        %1996 = vmatpush.msra.mxu0 %v1928
        %1997 = vmatmul.f32.gmra.mxu0 %v1959
        %v1998 = vpop.f32.mrf.mxu0
        %v1999 = vadd.f32 %v1954, %v1998
        %2000 = vdwg.mxu0
        %2001 = vmatpush.msra.mxu0 0.0
        %2002 = vmatpush.msra.mxu0 0.0
        %2003 = vmatpush.msra.mxu0 0.0
        %2004 = vmatpush.msra.mxu0 0.0
        %2005 = vmatpush.msra.mxu0 0.0
        %2006 = vmatpush.msra.mxu0 0.0
        %2007 = vmatpush.msra.mxu0 0.0
        %2008 = vmatpush.msra.mxu0 0.0
        %2009 = vmatpush.msra.mxu0 0.0
        %2010 = vmatpush.msra.mxu0 0.0
        %2011 = vmatpush.msra.mxu0 0.0
        %2012 = vmatpush.msra.mxu0 0.0
        %2013 = vmatpush.msra.mxu0 %v1926
        %2014 = vmatpush.msra.mxu0 %v1920
        %2015 = vmatpush.msra.mxu0 %v1914
        %2016 = vmatpush.msra.mxu0 %v1908
        %2017 = vmatmul.f32.gmra.mxu0 %v1959
        %v2018 = vpop.f32.mrf.mxu0
        %v2019 = vadd.f32 %v1952, %v2018
        %2020 = vdwg.mxu0
        %v2023 = vrot.slane %v1999, 4
        %vm2024 = vcmask 1043456
        %v2025 = vsel %vm2024, %v1979, %v2023
        %2027 = vst [vmem:[%s296] sm:$0xff] %v2025
        %2028 = vst.msk [vmem:[%s296 + $0x8] sm:$0xf] %vm752, %v2019
        %s2029 = sand.u32 %s145, 1
        %s2030 = scalar_lea.sflag [#allocation4], %s2029
        %s2031 = sand.u32 %s145, 1
        %s2032 = smul.addr %s2031, 4
        %s2033 = scalar_lea.vmem [#allocation5], %s2032
        %p2034 = scmp.lt.s32.totalorder %s22, 1
        %s2035 = scalar_select %p2034, %s22, 1
        %s2036 = smul.addr %s2035, 3
        %s2037 = smul.addr %s2036, 4
        %s2038 = scalar_lea.vmem %s6, %s2037
        // Predicated region
        $region45: #{forward.2} parent=39 // pred_check
          %p2039 = pneg %p155
        $region46: #{forward.2} parent=39 // pred_check_branch
          %2041 = sbr.rel (%p2039) target = $region48
        $region47: #{forward.2} parent=39 // pred_region
          %2043 = vsyncadd %s2030, 0
          %s2044 = smul.addr %s22, 4
          %s2045 = scalar_lea.hbm %s5, %s2044
          %s2047 = sshll.u32 %s2033, 4
          %s2048 = int_to_ptr.vmem [resolvable:$true] %s2047
          %s2049 = sshll.u32 %s2045, 4
          %s2050 = int_to_ptr.hbm [resolvable:$true] %s2049
          %2052 = dma.vmem_to_hbm [thread:$0]  %s2048, 64, %s2050, %s2030
        $region48: #{forward.2} parent=39 // pred_fallthru
          _
        // Predicated region
        $region49: #{forward.2} parent=39 // pred_check
          %p2053 = pneg %p181
        $region50: #{forward.2} parent=39 // pred_check_branch
          %2055 = sbr.rel (%p2053) target = $region52
        $region51: #{forward.2} parent=39 // pred_region
          _
        $region52: #{forward.2} parent=39 // pred_fallthru
          _
      $region40: #{forward.2} parent=5 // pred_fallthru
        _
      %p2056 = scmp.le.s32.totalorder 2, %s17
      // Predicated region
      $region53: #{forward.2} parent=5 // pred_check
        %p2057 = pneg %p2056
      $region54: #{forward.2} parent=5 // pred_check_branch
        %2059 = sbr.rel (%p2057) target = $region56
      $region55: #{forward.2} parent=5 // pred_region
        %s2060 = ssub.s32 %s17, 2
        // Predicated region
        $region57: #{forward.2} parent=55 // pred_check
          %p2061 = pneg %p161
        $region58: #{forward.2} parent=55 // pred_check_branch
          %2063 = sbr.rel (%p2061) target = $region60
        $region59: #{forward.2} parent=55 // pred_region
          %s2064 = sand.u32 %s146, 1
          %s2065 = scalar_lea.sflag [#allocation4], %s2064
          %s2066 = sand.u32 %s146, 1
          %s2067 = smul.addr %s2066, 4
          %s2068 = scalar_lea.vmem [#allocation5], %s2067
          %2070 = dma.done %s2065, 64
        $region60: #{forward.2} parent=55 // pred_fallthru
          _
        // Predicated region
        $region61: #{forward.2} parent=55 // pred_check
          %p2071 = pneg %p187
        $region62: #{forward.2} parent=55 // pred_check_branch
          %2073 = sbr.rel (%p2071) target = $region64
        $region63: #{forward.2} parent=55 // pred_region
          %p2074 = scmp.lt.s32.totalorder %s23, 1
          %s2075 = scalar_select %p2074, %s23, 1
          %s2076 = smul.addr %s2075, 3
          %s2077 = smul.addr %s2076, 4
          %s2078 = scalar_lea.vmem %s6, %s2077
        $region64: #{forward.2} parent=55 // pred_fallthru
          _
      $region56: #{forward.2} parent=5 // pred_fallthru
        _
    $region6: #{forward.2} parent=1 // loop_footer
      %s21 = sadd.s32 1, %s17
    $region7: #{forward.2} parent=1 // loop_footer_branch
      %16 = sbr.rel target = $region3
    $region8: #{forward.2} parent=1 // loop_exit
      _
    %2079 = vsyncpa [#allocation3], 1
    %s2080 = scalar_lea.sflag [#allocation3], 1
    %2081 = vsyncpa %s2080, 1
    %2082 = vsyncpa [#allocation4], 1
    %s2083 = scalar_lea.sflag [#allocation4], 1
    %2084 = vsyncpa %s2083, 1

</llo_original>
